<compile_context>
chip_gen: v7x
topology: tpu7x:2x2x1
jax: 0.10.0
libtpu: 0.0.40
codegen_flags: <defaults>
</compile_context>

<pallas_src>
import jax
import jax.numpy as jnp
from jax.experimental import pallas as pl
from jax.experimental.pallas import tpu as pltpu

F_PAD = 128  # lane-padded feature / channel width


# ------------------------------- kernel -------------------------------------
def _dtaad_kernel(x_ref, w_ref, v_ref, o_ref):
    f32 = jnp.float32
    x = x_ref[...]                              # (BT, L, F); channels on lanes
    BT, L, F = x.shape

    # Packed 2-D weights (feature dims zero-padded to F lanes).
    w_l = w_ref[0 * F:4 * F, :]                 # local conv  (k=4, d=1), fused taps
    w_g1 = w_ref[4 * F:7 * F, :]                # global conv1 (k=3, d=1), fused taps
    w_g2 = w_ref[7 * F:10 * F, :]               # global conv2 (k=3, d=2), fused taps
    w_f = w_ref[10 * F:11 * F, :]               # shared fcn weight (in-major)

    v = v_ref[...]                              # (32, F) packed vectors
    b_l, b_g1, b_g2, b_f = v[0:1], v[1:2], v[2:3], v[3:4]
    d1_b, d2_b = v[4:5], v[5:6]
    d1_w = v[8:8 + L][None]                     # (1, L, F) decoder1 time weights
    d2_w = v[8 + L:8 + 2 * L][None]             # (1, L, F) decoder2 time weights

    def causal_conv_relu(inp, w_fused, bias, k, dil):
        """Causal Conv1d (+chomp) + ReLU on a (BT, L, F) slab.

        Shifts come from static slices of a left-zero-padded slab; the k taps
        are stacked along the lane axis so the whole conv is a single MXU dot.
        """
        pad = (k - 1) * dil
        padded = jnp.concatenate([jnp.zeros((BT, pad, F), f32), inp], axis=1)
        stacked = jnp.concatenate(
            [padded[:, kk * dil:kk * dil + L, :] for kk in range(k)], axis=-1)
        y = jnp.dot(stacked.reshape(BT * L, k * F), w_fused,
                    preferred_element_type=f32) + bias
        return jnp.maximum(y, 0.0)              # (BT*L, F)

    def fcn(t):                                 # shared nn.Linear(feats, feats)
        return jnp.dot(t, w_f, preferred_element_type=f32) + b_f

    # ---- l_atts = l_tcn(src).permute(0,2,1); c1 = l_atts + fcn(l_atts) ----
    l_att = causal_conv_relu(x, w_l, b_l, 4, 1)             # (BT*L, F) == (B, L, feats)
    c1 = (l_att + fcn(l_att)).reshape(BT, L, F)

    # ---- x1 = decoder1(c1.permute(0,2,1)) : Linear(n_window, 1) + Sigmoid ----
    x1 = jax.nn.sigmoid(jnp.sum(c1 * d1_w, axis=1) + d1_b)  # (BT, F)

    # ---- callback: c2 = g_tcn(src + x1).permute(0,2,1) ----
    src2 = x + x1[:, None, :]                               # broadcast over time
    h = causal_conv_relu(src2, w_g1, b_g1, 3, 1).reshape(BT, L, F)
    c2 = causal_conv_relu(h, w_g2, b_g2, 3, 2)              # (BT*L, F)

    # ---- x2 = decoder2((c2 + fcn(c2)).permute(0,2,1)) ----
    c2f = (c2 + fcn(c2)).reshape(BT, L, F)
    x2 = jax.nn.sigmoid(jnp.sum(c2f * d2_w, axis=1) + d2_b)  # (BT, F)

    # Lane-dense store of both outputs at once.
    o_ref[...] = jnp.concatenate([x1[:, None, :], x2[:, None, :]], axis=1)


# ----------------------------- weight packing --------------------------------
def _fuse_conv_taps(w, f_pad):
    """PyTorch Conv1d weight (C_out, C_in, K) -> (K * f_pad, f_pad) fused/padded."""
    c_out, c_in, k = w.shape
    wt = jnp.transpose(w, (2, 1, 0)).astype(jnp.float32)     # (K, C_in, C_out)
    wt = jnp.pad(wt, ((0, 0), (0, f_pad - c_in), (0, f_pad - c_out)))
    return wt.reshape(k * f_pad, f_pad)


def _pad_mat(w, f_pad):
    return jnp.pad(w.astype(jnp.float32),
                   ((0, f_pad - w.shape[0]), (0, f_pad - w.shape[1])))


def _pad_row(vec, f_pad):
    vec = vec.astype(jnp.float32).reshape(1, -1)
    return jnp.pad(vec, ((0, 0), (0, f_pad - vec.shape[1])))


# -------------------------------- wrapper ------------------------------------
def dtaad_transformer_forward(src, params, *, block_b=8):
    """src: (B, feats, n_window) in PyTorch Conv1d NCL layout.

    Returns (x1, x2), each (B, 1, feats), matching DTAAD_Transformer.forward.
    """
    B, feats, L = src.shape
    F = F_PAD

    n_tiles = pl.cdiv(B, block_b)
    Bp = n_tiles * block_b

    # Channels -> lanes, zero-padded to 128 lanes; batch padded to a tile multiple.
    x = jnp.transpose(src, (0, 2, 1)).astype(jnp.float32)        # (B, L, feats)
    x = jnp.pad(x, ((0, Bp - B), (0, 0), (0, F - feats)))        # (Bp, L, F)

    wpack = jnp.concatenate([
        _fuse_conv_taps(params['l_conv_w'], F),    # rows [0, 4F)
        _fuse_conv_taps(params['g_conv1_w'], F),   # rows [4F, 7F)
        _fuse_conv_taps(params['g_conv2_w'], F),   # rows [7F, 10F)
        _pad_mat(params['fcn_w'].T, F),            # rows [10F, 11F)
    ], axis=0)

    vrows = [
        _pad_row(params['l_conv_b'], F),
        _pad_row(params['g_conv1_b'], F),
        _pad_row(params['g_conv2_b'], F),
        _pad_row(params['fcn_b'], F),
        jnp.broadcast_to(params['dec1_b'].reshape(1, 1).astype(jnp.float32), (1, F)),
        jnp.broadcast_to(params['dec2_b'].reshape(1, 1).astype(jnp.float32), (1, F)),
        jnp.zeros((2, F), jnp.float32),
        jnp.broadcast_to(params['dec1_w'].reshape(L, 1).astype(jnp.float32), (L, F)),
        jnp.broadcast_to(params['dec2_w'].reshape(L, 1).astype(jnp.float32), (L, F)),
    ]
    vpack = jnp.concatenate(vrows, axis=0)
    vpack = jnp.pad(vpack, ((0, (-vpack.shape[0]) % 8), (0, 0)))

    out = pl.pallas_call(
        _dtaad_kernel,
        grid=(n_tiles,),
        in_specs=[
            pl.BlockSpec((block_b, L, F), lambda b: (b, 0, 0)),
            pl.BlockSpec(wpack.shape, lambda b: (0, 0)),
            pl.BlockSpec(vpack.shape, lambda b: (0, 0)),
        ],
        out_specs=pl.BlockSpec((block_b, 2, F), lambda b: (b, 0, 0)),
        out_shape=jax.ShapeDtypeStruct((Bp, 2, F), jnp.float32),
        compiler_params=pltpu.CompilerParams(dimension_semantics=("parallel",)),
    )(x, wpack, vpack)

    x1 = out[:B, 0, :feats][:, None, :]      # (B, 1, feats)
    x2 = out[:B, 1, :feats][:, None, :]      # (B, 1, feats)
    return x1, x2


# --------------------------- params / reference ------------------------------
def init_params(key, feats, n_window):
    ks = jax.random.split(key, 12)

    def nrm(k, shape, scale=0.05):
        return scale * jax.random.normal(k, shape, jnp.float32)

    return {
        'l_conv_w': nrm(ks[0], (feats, feats, 4), 0.01),
        'l_conv_b': nrm(ks[1], (feats,), 0.01),
        'g_conv1_w': nrm(ks[2], (feats, n_window, 3), 0.01),
        'g_conv1_b': nrm(ks[3], (feats,), 0.01),
        'g_conv2_w': nrm(ks[4], (feats, feats, 3), 0.01),
        'g_conv2_b': nrm(ks[5], (feats,), 0.01),
        'fcn_w': nrm(ks[6], (feats, feats)),
        'fcn_b': nrm(ks[7], (feats,)),
        'dec1_w': nrm(ks[8], (1, n_window)),
        'dec1_b': nrm(ks[9], (1,)),
        'dec2_w': nrm(ks[10], (1, n_window)),
        'dec2_b': nrm(ks[11], (1,)),
    }


def reference_forward(src, p):
    """Pure-JAX mirror of DTAAD_Transformer.forward (eval mode)."""
    def causal_conv(x, w, b, dil):
        K = w.shape[-1]
        out = jnp.zeros((x.shape[0], w.shape[0], x.shape[2]), jnp.float32)
        for k in range(K):
            sh = (K - 1 - k) * dil
            xs = jnp.pad(x, ((0, 0), (0, 0), (sh, 0)))[:, :, :x.shape[2]]
            out = out + jnp.einsum('oc,bcl->bol', w[:, :, k], xs)
        return out + b[None, :, None]

    # l_atts = l_tcn(src).permute(0,2,1)
    l_atts = jax.nn.relu(causal_conv(src, p['l_conv_w'], p['l_conv_b'], 1))
    l_atts = jnp.transpose(l_atts, (0, 2, 1))                       # (B, L, feats)
    c1 = l_atts + l_atts @ p['fcn_w'].T + p['fcn_b']
    x1 = jax.nn.sigmoid(jnp.transpose(c1, (0, 2, 1)) @ p['dec1_w'].T + p['dec1_b'])

    # callback
    src2 = src + x1                                                  # (B, feats, L)
    h = jax.nn.relu(causal_conv(src2, p['g_conv1_w'], p['g_conv1_b'], 1))
    g = jax.nn.relu(causal_conv(h, p['g_conv2_w'], p['g_conv2_b'], 2))
    c2 = jnp.transpose(g, (0, 2, 1))                                 # (B, L, feats)
    c2f = c2 + c2 @ p['fcn_w'].T + p['fcn_b']
    x2 = jax.nn.sigmoid(jnp.transpose(c2f, (0, 2, 1)) @ p['dec2_w'].T + p['dec2_b'])

    return jnp.transpose(x1, (0, 2, 1)), jnp.transpose(x2, (0, 2, 1))  # (B, 1, feats) each


# ---------------------------------- main --------------------------------------
if __name__ == "__main__":
    n_window = 10           # fixed by the module
    feats = 10              # must equal n_window for the module to be shape-consistent
    B = 16                  # two batch tiles of 8 -> 2-way parallel grid

    key = jax.random.PRNGKey(0)
    kx, kp = jax.random.split(key)
    src = jax.random.normal(kx, (B, feats, n_window), jnp.float32)   # (B, C=feats, L=n_window)
    params = init_params(kp, feats, n_window)

    x1, x2 = dtaad_transformer_forward(src, params, block_b=8)
    jax.block_until_ready((x1, x2))

    r1, r2 = reference_forward(src, params)
    assert x1.shape == (B, 1, feats) and x2.shape == (B, 1, feats), (x1.shape, x2.shape)
    ok1 = jnp.allclose(x1, r1, atol=1e-3, rtol=1e-3)
    ok2 = jnp.allclose(x2, r2, atol=1e-3, rtol=1e-3)
    if not (bool(ok1) and bool(ok2)):
        raise AssertionError("Pallas kernel output mismatches JAX reference")
    print("KERNEL_OK")
</pallas_src>

<mosaic_0001>
module attributes {stable_mosaic.version = 11 : i64} {
  func.func @_dtaad_kernel(%arg0: i32, %arg1: memref<8x10x128xf32, #tpu.memory_space<vmem>>, %arg2: memref<1408x128xf32, #tpu.memory_space<vmem>>, %arg3: memref<32x128xf32, #tpu.memory_space<vmem>>, %arg4: memref<8x2x128xf32, #tpu.memory_space<vmem>>) attributes {dimension_semantics = [#tpu.dimension_semantics<parallel>], iteration_bounds = array<i64: 2>, scalar_prefetch = 0 : i64, scratch_operands = 0 : i64, tpu.core_type = #tpu.core_type<tc>, window_params = [{transform_indices = @transform_0, window_bounds = array<i64: 8, 10, 128>}, {pipeline_mode = #tpu.pipeline_mode<synchronous>, transform_indices = @transform_1, window_bounds = array<i64: 1408, 128>}, {pipeline_mode = #tpu.pipeline_mode<synchronous>, transform_indices = @transform_2, window_bounds = array<i64: 32, 128>}, {transform_indices = @transform_3, window_bounds = array<i64: 8, 2, 128>}]} {
    %c0 = arith.constant 0 : index
    %c0_0 = arith.constant 0 : index
    %c0_1 = arith.constant 0 : index
    %0 = vector.load %arg1[%c0, %c0_0, %c0_1] : memref<8x10x128xf32, #tpu.memory_space<vmem>>, vector<8x10x128xf32>
    %c0_2 = arith.constant 0 : index
    %c0_3 = arith.constant 0 : index
    %1 = vector.load %arg2[%c0_2, %c0_3] : memref<1408x128xf32, #tpu.memory_space<vmem>>, vector<512x128xf32>
    %c512 = arith.constant 512 : index
    %c0_4 = arith.constant 0 : index
    %2 = vector.load %arg2[%c512, %c0_4] : memref<1408x128xf32, #tpu.memory_space<vmem>>, vector<384x128xf32>
    %c896 = arith.constant 896 : index
    %c0_5 = arith.constant 0 : index
    %3 = vector.load %arg2[%c896, %c0_5] : memref<1408x128xf32, #tpu.memory_space<vmem>>, vector<384x128xf32>
    %c1280 = arith.constant 1280 : index
    %c0_6 = arith.constant 0 : index
    %4 = vector.load %arg2[%c1280, %c0_6] : memref<1408x128xf32, #tpu.memory_space<vmem>>, vector<128x128xf32>
    %c0_7 = arith.constant 0 : index
    %c0_8 = arith.constant 0 : index
    %5 = vector.load %arg3[%c0_7, %c0_8] : memref<32x128xf32, #tpu.memory_space<vmem>>, vector<32x128xf32>
    %6 = vector.extract_strided_slice %5 {offsets = [0, 0], sizes = [1, 128], strides = [1, 1]} : vector<32x128xf32> to vector<1x128xf32>
    %7 = vector.extract_strided_slice %5 {offsets = [1, 0], sizes = [1, 128], strides = [1, 1]} : vector<32x128xf32> to vector<1x128xf32>
    %8 = vector.extract_strided_slice %5 {offsets = [2, 0], sizes = [1, 128], strides = [1, 1]} : vector<32x128xf32> to vector<1x128xf32>
    %9 = vector.extract_strided_slice %5 {offsets = [3, 0], sizes = [1, 128], strides = [1, 1]} : vector<32x128xf32> to vector<1x128xf32>
    %10 = vector.extract_strided_slice %5 {offsets = [4, 0], sizes = [1, 128], strides = [1, 1]} : vector<32x128xf32> to vector<1x128xf32>
    %11 = vector.extract_strided_slice %5 {offsets = [5, 0], sizes = [1, 128], strides = [1, 1]} : vector<32x128xf32> to vector<1x128xf32>
    %12 = vector.extract_strided_slice %5 {offsets = [8, 0], sizes = [10, 128], strides = [1, 1]} : vector<32x128xf32> to vector<10x128xf32>
    %13 = vector.shape_cast %12 : vector<10x128xf32> to vector<1x10x128xf32>
    %14 = vector.extract_strided_slice %5 {offsets = [18, 0], sizes = [10, 128], strides = [1, 1]} : vector<32x128xf32> to vector<10x128xf32>
    %15 = vector.shape_cast %14 : vector<10x128xf32> to vector<1x10x128xf32>
    %cst = arith.constant 0.000000e+00 : f32
    %16 = vector.broadcast %cst : f32 to vector<8x3x128xf32>
    %17 = tpu.concatenate %16, %0 in 1 : vector<8x3x128xf32>, vector<8x10x128xf32> -> vector<8x13x128xf32>
    %18 = vector.extract_strided_slice %17 {offsets = [0, 0, 0], sizes = [8, 10, 128], strides = [1, 1, 1]} : vector<8x13x128xf32> to vector<8x10x128xf32>
    %19 = vector.extract_strided_slice %17 {offsets = [0, 1, 0], sizes = [8, 10, 128], strides = [1, 1, 1]} : vector<8x13x128xf32> to vector<8x10x128xf32>
    %20 = vector.extract_strided_slice %17 {offsets = [0, 2, 0], sizes = [8, 10, 128], strides = [1, 1, 1]} : vector<8x13x128xf32> to vector<8x10x128xf32>
    %21 = vector.extract_strided_slice %17 {offsets = [0, 3, 0], sizes = [8, 10, 128], strides = [1, 1, 1]} : vector<8x13x128xf32> to vector<8x10x128xf32>
    %22 = tpu.concatenate %18, %19, %20, %21 in 2 : vector<8x10x128xf32>, vector<8x10x128xf32>, vector<8x10x128xf32>, vector<8x10x128xf32> -> vector<8x10x512xf32>
    %23 = vector.shape_cast %22 : vector<8x10x512xf32> to vector<80x512xf32>
    %cst_9 = arith.constant dense<0.000000e+00> : vector<80x128xf32>
    %24 = tpu.matmul %23, %1, %cst_9 {dimension_numbers = #tpu.dot_dimension_numbers<[1], [0], [0], [1], [0, 0, 1, 1], [], []>} : vector<80x512xf32>, vector<512x128xf32>, vector<80x128xf32> -> vector<80x128xf32>
    %25 = vector.broadcast %6 : vector<1x128xf32> to vector<80x128xf32>
    %26 = arith.addf %24, %25 : vector<80x128xf32>
    %cst_10 = arith.constant 0.000000e+00 : f32
    %27 = vector.broadcast %cst_10 : f32 to vector<80x128xf32>
    %28 = arith.maximumf %26, %27 : vector<80x128xf32>
    %cst_11 = arith.constant dense<0.000000e+00> : vector<80x128xf32>
    %29 = tpu.matmul %28, %4, %cst_11 {dimension_numbers = #tpu.dot_dimension_numbers<[1], [0], [0], [1], [0, 0, 1, 1], [], []>} : vector<80x128xf32>, vector<128x128xf32>, vector<80x128xf32> -> vector<80x128xf32>
    %30 = vector.broadcast %9 : vector<1x128xf32> to vector<80x128xf32>
    %31 = arith.addf %29, %30 : vector<80x128xf32>
    %32 = arith.addf %28, %31 : vector<80x128xf32>
    %33 = vector.shape_cast %32 : vector<80x128xf32> to vector<8x10x128xf32>
    %34 = vector.broadcast %13 : vector<1x10x128xf32> to vector<8x10x128xf32>
    %35 = arith.mulf %33, %34 : vector<8x10x128xf32>
    %cst_12 = arith.constant dense<0.000000e+00> : vector<8x128xf32>
    %36 = vector.multi_reduction <add>, %35, %cst_12 [1] : vector<8x10x128xf32> to vector<8x128xf32>
    %37 = vector.broadcast %10 : vector<1x128xf32> to vector<8x128xf32>
    %38 = arith.addf %36, %37 : vector<8x128xf32>
    %39 = arith.negf %38 : vector<8x128xf32>
    %40 = math.exp %39 : vector<8x128xf32>
    %cst_13 = arith.constant 1.000000e+00 : f32
    %41 = vector.broadcast %cst_13 : f32 to vector<8x128xf32>
    %42 = arith.addf %41, %40 : vector<8x128xf32>
    %43 = arith.divf %41, %42 : vector<8x128xf32>
    %44 = vector.shape_cast %43 : vector<8x128xf32> to vector<8x1x128xf32>
    %45 = vector.broadcast %44 : vector<8x1x128xf32> to vector<8x10x128xf32>
    %46 = arith.addf %0, %45 : vector<8x10x128xf32>
    %cst_14 = arith.constant 0.000000e+00 : f32
    %47 = vector.broadcast %cst_14 : f32 to vector<8x2x128xf32>
    %48 = tpu.concatenate %47, %46 in 1 : vector<8x2x128xf32>, vector<8x10x128xf32> -> vector<8x12x128xf32>
    %49 = vector.extract_strided_slice %48 {offsets = [0, 0, 0], sizes = [8, 10, 128], strides = [1, 1, 1]} : vector<8x12x128xf32> to vector<8x10x128xf32>
    %50 = vector.extract_strided_slice %48 {offsets = [0, 1, 0], sizes = [8, 10, 128], strides = [1, 1, 1]} : vector<8x12x128xf32> to vector<8x10x128xf32>
    %51 = vector.extract_strided_slice %48 {offsets = [0, 2, 0], sizes = [8, 10, 128], strides = [1, 1, 1]} : vector<8x12x128xf32> to vector<8x10x128xf32>
    %52 = tpu.concatenate %49, %50, %51 in 2 : vector<8x10x128xf32>, vector<8x10x128xf32>, vector<8x10x128xf32> -> vector<8x10x384xf32>
    %53 = vector.shape_cast %52 : vector<8x10x384xf32> to vector<80x384xf32>
    %cst_15 = arith.constant dense<0.000000e+00> : vector<80x128xf32>
    %54 = tpu.matmul %53, %2, %cst_15 {dimension_numbers = #tpu.dot_dimension_numbers<[1], [0], [0], [1], [0, 0, 1, 1], [], []>} : vector<80x384xf32>, vector<384x128xf32>, vector<80x128xf32> -> vector<80x128xf32>
    %55 = vector.broadcast %7 : vector<1x128xf32> to vector<80x128xf32>
    %56 = arith.addf %54, %55 : vector<80x128xf32>
    %cst_16 = arith.constant 0.000000e+00 : f32
    %57 = vector.broadcast %cst_16 : f32 to vector<80x128xf32>
    %58 = arith.maximumf %56, %57 : vector<80x128xf32>
    %59 = vector.shape_cast %58 : vector<80x128xf32> to vector<8x10x128xf32>
    %cst_17 = arith.constant 0.000000e+00 : f32
    %60 = vector.broadcast %cst_17 : f32 to vector<8x4x128xf32>
    %61 = tpu.concatenate %60, %59 in 1 : vector<8x4x128xf32>, vector<8x10x128xf32> -> vector<8x14x128xf32>
    %62 = vector.extract_strided_slice %61 {offsets = [0, 0, 0], sizes = [8, 10, 128], strides = [1, 1, 1]} : vector<8x14x128xf32> to vector<8x10x128xf32>
    %63 = vector.extract_strided_slice %61 {offsets = [0, 2, 0], sizes = [8, 10, 128], strides = [1, 1, 1]} : vector<8x14x128xf32> to vector<8x10x128xf32>
    %64 = vector.extract_strided_slice %61 {offsets = [0, 4, 0], sizes = [8, 10, 128], strides = [1, 1, 1]} : vector<8x14x128xf32> to vector<8x10x128xf32>
    %65 = tpu.concatenate %62, %63, %64 in 2 : vector<8x10x128xf32>, vector<8x10x128xf32>, vector<8x10x128xf32> -> vector<8x10x384xf32>
    %66 = vector.shape_cast %65 : vector<8x10x384xf32> to vector<80x384xf32>
    %cst_18 = arith.constant dense<0.000000e+00> : vector<80x128xf32>
    %67 = tpu.matmul %66, %3, %cst_18 {dimension_numbers = #tpu.dot_dimension_numbers<[1], [0], [0], [1], [0, 0, 1, 1], [], []>} : vector<80x384xf32>, vector<384x128xf32>, vector<80x128xf32> -> vector<80x128xf32>
    %68 = vector.broadcast %8 : vector<1x128xf32> to vector<80x128xf32>
    %69 = arith.addf %67, %68 : vector<80x128xf32>
    %cst_19 = arith.constant 0.000000e+00 : f32
    %70 = vector.broadcast %cst_19 : f32 to vector<80x128xf32>
    %71 = arith.maximumf %69, %70 : vector<80x128xf32>
    %cst_20 = arith.constant dense<0.000000e+00> : vector<80x128xf32>
    %72 = tpu.matmul %71, %4, %cst_20 {dimension_numbers = #tpu.dot_dimension_numbers<[1], [0], [0], [1], [0, 0, 1, 1], [], []>} : vector<80x128xf32>, vector<128x128xf32>, vector<80x128xf32> -> vector<80x128xf32>
    %73 = vector.broadcast %9 : vector<1x128xf32> to vector<80x128xf32>
    %74 = arith.addf %72, %73 : vector<80x128xf32>
    %75 = arith.addf %71, %74 : vector<80x128xf32>
    %76 = vector.shape_cast %75 : vector<80x128xf32> to vector<8x10x128xf32>
    %77 = vector.broadcast %15 : vector<1x10x128xf32> to vector<8x10x128xf32>
    %78 = arith.mulf %76, %77 : vector<8x10x128xf32>
    %cst_21 = arith.constant dense<0.000000e+00> : vector<8x128xf32>
    %79 = vector.multi_reduction <add>, %78, %cst_21 [1] : vector<8x10x128xf32> to vector<8x128xf32>
    %80 = vector.broadcast %11 : vector<1x128xf32> to vector<8x128xf32>
    %81 = arith.addf %79, %80 : vector<8x128xf32>
    %82 = arith.negf %81 : vector<8x128xf32>
    %83 = math.exp %82 : vector<8x128xf32>
    %cst_22 = arith.constant 1.000000e+00 : f32
    %84 = vector.broadcast %cst_22 : f32 to vector<8x128xf32>
    %85 = arith.addf %84, %83 : vector<8x128xf32>
    %86 = arith.divf %84, %85 : vector<8x128xf32>
    %87 = vector.shape_cast %43 : vector<8x128xf32> to vector<8x1x128xf32>
    %88 = vector.shape_cast %86 : vector<8x128xf32> to vector<8x1x128xf32>
    %89 = tpu.concatenate %87, %88 in 1 : vector<8x1x128xf32>, vector<8x1x128xf32> -> vector<8x2x128xf32>
    %c0_23 = arith.constant 0 : index
    %c0_24 = arith.constant 0 : index
    %c0_25 = arith.constant 0 : index
    %90 = vector.load %arg4[%c0_23, %c0_24, %c0_25] : memref<8x2x128xf32, #tpu.memory_space<vmem>>, vector<8x2x128xf32>
    tpu.vector_store %arg4[%c0_23, %c0_24, %c0_25], %89 {strides = array<i32>} : memref<8x2x128xf32, #tpu.memory_space<vmem>>, vector<8x2x128xf32>,
    return
  }
  func.func @transform_0(%arg0: i32) -> (i32, i32, i32) {
    %c0_i32 = arith.constant 0 : i32
    %c0_i32_0 = arith.constant 0 : i32
    %c0_i32_1 = arith.constant 0 : i32
    return %arg0, %c0_i32, %c0_i32_0 : i32, i32, i32
  }
  func.func @transform_1(%arg0: i32) -> (i32, i32) {
    %c0_i32 = arith.constant 0 : i32
    %c0_i32_0 = arith.constant 0 : i32
    %c0_i32_1 = arith.constant 0 : i32
    return %c0_i32, %c0_i32_0 : i32, i32
  }
  func.func @transform_2(%arg0: i32) -> (i32, i32) {
    %c0_i32 = arith.constant 0 : i32
    %c0_i32_0 = arith.constant 0 : i32
    %c0_i32_1 = arith.constant 0 : i32
    return %c0_i32, %c0_i32_0 : i32, i32
  }
  func.func @transform_3(%arg0: i32) -> (i32, i32, i32) {
    %c0_i32 = arith.constant 0 : i32
    %c0_i32_0 = arith.constant 0 : i32
    %c0_i32_1 = arith.constant 0 : i32
    return %arg0, %c0_i32, %c0_i32_0 : i32, i32, i32
  }
}

</mosaic_0001>

<llo_original>
// kernel: tpu_custom_call.1
$region0: #{tpu_custom_call.1}
  #allocation0 [shape = 'u32[]', space=smem, size = 0x4, offset = 0x4, fixed_abs, tag = 'smem constant byte address 0x4 - core index']
  #allocation1 [shape = 'u32[144,128]{1,0:T(1,128)}', space=vmem, size = 0x12000, scoped, tag = 'internal scratch']
  %s0 = inlined_call_operand.vmem [shape: f32[16,10,128], index: 0, kind: input, shape index: {}]
  %s1 = inlined_call_operand.hbm [shape: f32[1408,128], index: 1, kind: input, shape index: {}]
  %s2 = inlined_call_operand.vmem [shape: f32[32,128], index: 2, kind: input, shape index: {}]
  %s3 = inlined_call_operand.hbm [shape: f32[16,2,128], index: 3, kind: output, shape index: {}]
  %s4 = sld [smem:[#allocation0]]
  $region49: #{tpu_custom_call.1} parent=0
    _
  %s6 = ssub.s32 1, %s4
  %s7 = scalar_select 0, %s6, %s4
  $region1: #{tpu_custom_call.1} parent=0
    #allocation2 [shape = 'u8[720896]{0}', space=vmem, size = 0xb0000, scoped, tag = 'input window, operand 1, single buffered']
    #allocation3 [shape = 's32[2]{0}', space=sflag, size = 0x8, scoped, tag = 'scoped memory for tpu_custom_call.1']
    #allocation4 [shape = 's32[2]{0}', space=sflag, size = 0x8, scoped, tag = 'scoped memory for tpu_custom_call.1']
    #allocation5 [shape = 'u8[16384]{0}', space=vmem, size = 0x4000, scoped, tag = 'output window, operand 0']
    %8 = vsyncpa [#allocation3], 0
    %9 = vsyncpa [#allocation4], 0
    %s10 = scalar_lea.sflag [#allocation4], 1
    %11 = vsyncpa %s10, 0
    loop: start=0, step=1, limit=4
    $region2: #{tpu_custom_call.1} parent=1 // loop_pre_header
      _
    $region3: #{tpu_custom_call.1} parent=1 // loop_header
      %s13 = sphi 0, %s17
      %p14 = scmp.ge.s32.totalorder %s13, 4
      %s23 = sphi 0, %s25
      %s26 = sphi 0, %s23
      %s27 = sphi 0, %s26
      %s43 = sphi 0, %s27
      %s47 = sphi 0, %s47
      %s49 = sphi 0, %s47
      %s50 = sphi 0, %s49
      %s64 = sphi 0, %s50
      %s68 = sphi 0, %s68
      %s70 = sphi 0, %s68
      %s71 = sphi 0, %s70
      %s85 = sphi 0, %s71
      %s91 = sphi 0, %s93
      %s94 = sphi 0, %s91
      %s95 = sphi 0, %s94
      %s111 = sphi 0, %s95
    $region4: #{tpu_custom_call.1} parent=1 // loop_header_branch
      %16 = sbr.rel (%p14) target = $region8
    $region5: #{tpu_custom_call.1} parent=1 // loop_body
      %s18 = ssub.s32 %s13, 1
      %s19 = ssub.s32 %s13, 2
      %s20 = sadd.s32 %s13, 1
      %s21 = ssub.s32 %s13, %s20
      %p22 = scmp.eq.s32.totalorder %s21, 0
      %s24 = sadd.s32 %s23, 1
      %s25 = scalar_select %p22, %s23, %s24
      %p28 = pneg %p22
      %p29 = scmp.eq.s32.totalorder %s13, 1
      %p30 = por %p28, %p29
      %p31 = scmp.ne.s32.totalorder %s23, %s26
      %p32 = scmp.eq.s32.totalorder %s13, 0
      %p33 = por %p31, %p32
      %p34 = scmp.ne.s32.totalorder %s23, %s26
      %p35 = scmp.eq.s32.totalorder %s18, 1
      %p36 = por %p34, %p35
      %p37 = scmp.ne.s32.totalorder %s26, %s27
      %p38 = scmp.eq.s32.totalorder %s18, 0
      %p39 = por %p37, %p38
      %p40 = scmp.ne.s32.totalorder %s26, %s27
      %p41 = scmp.eq.s32.totalorder %s19, 1
      %p42 = por %p40, %p41
      %p44 = scmp.ne.s32.totalorder %s27, %s43
      %p45 = scmp.eq.s32.totalorder %s19, 0
      %p46 = por %p44, %p45
      %s48 = sadd.s32 %s47, 1
      %p51 = scmp.eq.s32.totalorder %s13, 1
      %p52 = scmp.ne.s32.totalorder %s47, %s49
      %p53 = scmp.eq.s32.totalorder %s13, 0
      %p54 = por %p52, %p53
      %p55 = scmp.ne.s32.totalorder %s47, %s49
      %p56 = scmp.eq.s32.totalorder %s18, 1
      %p57 = por %p55, %p56
      %p58 = scmp.ne.s32.totalorder %s49, %s50
      %p59 = scmp.eq.s32.totalorder %s18, 0
      %p60 = por %p58, %p59
      %p61 = scmp.ne.s32.totalorder %s49, %s50
      %p62 = scmp.eq.s32.totalorder %s19, 1
      %p63 = por %p61, %p62
      %p65 = scmp.ne.s32.totalorder %s50, %s64
      %p66 = scmp.eq.s32.totalorder %s19, 0
      %p67 = por %p65, %p66
      %s69 = sadd.s32 %s68, 1
      %p72 = scmp.eq.s32.totalorder %s13, 1
      %p73 = scmp.ne.s32.totalorder %s68, %s70
      %p74 = scmp.eq.s32.totalorder %s13, 0
      %p75 = por %p73, %p74
      %p76 = scmp.ne.s32.totalorder %s68, %s70
      %p77 = scmp.eq.s32.totalorder %s18, 1
      %p78 = por %p76, %p77
      %p79 = scmp.ne.s32.totalorder %s70, %s71
      %p80 = scmp.eq.s32.totalorder %s18, 0
      %p81 = por %p79, %p80
      %p82 = scmp.ne.s32.totalorder %s70, %s71
      %p83 = scmp.eq.s32.totalorder %s19, 1
      %p84 = por %p82, %p83
      %p86 = scmp.ne.s32.totalorder %s71, %s85
      %p87 = scmp.eq.s32.totalorder %s19, 0
      %p88 = por %p86, %p87
      %s89 = ssub.s32 %s13, %s20
      %p90 = scmp.eq.s32.totalorder %s89, 0
      %s92 = sadd.s32 %s91, 1
      %s93 = scalar_select %p90, %s91, %s92
      %p96 = pneg %p90
      %p97 = scmp.eq.s32.totalorder %s13, 1
      %p98 = por %p96, %p97
      %p99 = scmp.ne.s32.totalorder %s91, %s94
      %p100 = scmp.eq.s32.totalorder %s13, 0
      %p101 = por %p99, %p100
      %p102 = scmp.ne.s32.totalorder %s91, %s94
      %p103 = scmp.eq.s32.totalorder %s18, 1
      %p104 = por %p102, %p103
      %p105 = scmp.ne.s32.totalorder %s94, %s95
      %p106 = scmp.eq.s32.totalorder %s18, 0
      %p107 = por %p105, %p106
      %p108 = scmp.ne.s32.totalorder %s94, %s95
      %p109 = scmp.eq.s32.totalorder %s19, 1
      %p110 = por %p108, %p109
      %p112 = scmp.ne.s32.totalorder %s95, %s111
      %p113 = scmp.eq.s32.totalorder %s19, 0
      %p114 = por %p112, %p113
      %p115 = scmp.le.s32.totalorder 1, %s13
      %p116 = scmp.lt.s32.totalorder %s13, 3
      %p117 = pnand %p115, %p116
      %p118 = pneg %p117
      // Predicated region
      $region9: #{tpu_custom_call.1} parent=5 // pred_check
        _
      $region10: #{tpu_custom_call.1} parent=5 // pred_check_branch
        %120 = sbr.rel (%p117) target = $region12
      $region11: #{tpu_custom_call.1} parent=5 // pred_region
        %s121 = ssub.s32 %s13, 1
        // Predicated region
        $region13: #{tpu_custom_call.1} parent=11 // pred_check
          %p122 = pneg %p60
        $region14: #{tpu_custom_call.1} parent=11 // pred_check_branch
          %124 = sbr.rel (%p122) target = $region16
        $region15: #{tpu_custom_call.1} parent=11 // pred_region
          %s126 = ssub.s32 22528, 22528
          %127 = vsyncadd [#allocation3], %s126
          %s128 = sshll.u32 [#allocation2], 4
          %s129 = int_to_ptr.vmem [resolvable:$true] %s128
          %134 = dma.hbm_to_vmem [thread:$0]  %s1, 22528, %s129, [#allocation3], 128, 128, 8
        $region16: #{tpu_custom_call.1} parent=11 // pred_fallthru
          _
        // Predicated region
        $region17: #{tpu_custom_call.1} parent=11 // pred_check
          %p135 = pneg %p81
        $region18: #{tpu_custom_call.1} parent=11 // pred_check_branch
          %137 = sbr.rel (%p135) target = $region20
        $region19: #{tpu_custom_call.1} parent=11 // pred_region
          _
        $region20: #{tpu_custom_call.1} parent=11 // pred_fallthru
          _
      $region12: #{tpu_custom_call.1} parent=5 // pred_fallthru
        _
      %p138 = scmp.lt.s32.totalorder %s13, 2
      // Predicated region
      $region21: #{tpu_custom_call.1} parent=5 // pred_check
        %p139 = pneg %p138
      $region22: #{tpu_custom_call.1} parent=5 // pred_check_branch
        %141 = sbr.rel (%p139) target = $region24
      $region23: #{tpu_custom_call.1} parent=5 // pred_region
        // Predicated region
        $region25: #{tpu_custom_call.1} parent=23 // pred_check
          %p142 = pneg %p33
        $region26: #{tpu_custom_call.1} parent=23 // pred_check_branch
          %144 = sbr.rel (%p142) target = $region28
        $region27: #{tpu_custom_call.1} parent=23 // pred_region
          %s145 = smul.u32 8, %s13
          %p146 = scmp.lt.s32.totalorder %s145, 15
          %s147 = scalar_select %p146, %s145, 15
          %s148 = smul.addr %s147, 2
          %s149 = smul.addr %s148, 8
          %s150 = scalar_lea.vmem %s0, %s149
          %s151 = smul.u32 8, %s13
        $region28: #{tpu_custom_call.1} parent=23 // pred_fallthru
          _
      $region24: #{tpu_custom_call.1} parent=5 // pred_fallthru
        _
      %p152 = scmp.le.s32.totalorder 1, %s13
      %p153 = scmp.lt.s32.totalorder %s13, 3
      %p154 = pnand %p152, %p153
      %p155 = pneg %p154
      // Predicated region
      $region29: #{tpu_custom_call.1} parent=5 // pred_check
        _
      $region30: #{tpu_custom_call.1} parent=5 // pred_check_branch
        %157 = sbr.rel (%p154) target = $region32
      $region31: #{tpu_custom_call.1} parent=5 // pred_region
        %s158 = ssub.s32 %s13, 1
        // Predicated region
        $region33: #{tpu_custom_call.1} parent=31 // pred_check
          %p159 = pneg %p60
        $region34: #{tpu_custom_call.1} parent=31 // pred_check_branch
          %161 = sbr.rel (%p159) target = $region36
        $region35: #{tpu_custom_call.1} parent=31 // pred_region
          %162 = dma.done [#allocation3], 22528
        $region36: #{tpu_custom_call.1} parent=31 // pred_fallthru
          _
        %s163 = smul.u32 8, %s18
        %p164 = scmp.lt.s32.totalorder %s163, 15
        %s165 = scalar_select %p164, %s163, 15
        %s166 = smul.addr %s165, 2
        %s167 = smul.addr %s166, 8
        %s168 = scalar_lea.vmem %s0, %s167
        %p169 = pneg %p39
        %p170 = pneg %p36
        %p171 = pneg %p60
        %p172 = pneg %p57
        %p173 = pneg %p81
        %p174 = pneg %p78
        %p175 = pneg %p107
        %p176 = pneg %p104
        %s177 = sand.u32 %s94, 1
        %s178 = scalar_lea.sflag [#allocation4], %s177
        %s179 = sand.u32 %s94, 1
        %s180 = smul.addr %s179, 16
        %s181 = scalar_lea.vmem [#allocation5], %s180
        %s182 = smul.u32 8, %s18
        %p183 = scmp.lt.s32.totalorder %s182, 15
        %s184 = scalar_select %p183, %s182, 15
        %s185 = smul.addr %s184, 2
        %s186 = smul.addr %s185, 8
        %s187 = scalar_lea.vmem %s0, %s186
        %s188 = smul.u32 8, %s18
        %s189 = smul.u32 8, %s18
        %v190 = vld [vmem:[%s187] sm:$0xff]
        %v191 = vld [vmem:[%s187 + $0x8] sm:$0x3]
        %v192 = vld [vmem:[%s187 + $0x10] sm:$0xff]
        %v193 = vld [vmem:[%s187 + $0x18] sm:$0x3]
        %v194 = vld [vmem:[%s187 + $0x20] sm:$0xff]
        %v195 = vld [vmem:[%s187 + $0x28] sm:$0x3]
        %v196 = vld [vmem:[%s187 + $0x30] sm:$0xff]
        %v197 = vld [vmem:[%s187 + $0x38] sm:$0x3]
        %v198 = vld [vmem:[%s187 + $0x40] sm:$0xff]
        %v199 = vld [vmem:[%s187 + $0x48] sm:$0x3]
        %v200 = vld [vmem:[%s187 + $0x50] sm:$0xff]
        %v201 = vld [vmem:[%s187 + $0x58] sm:$0x3]
        %v202 = vld [vmem:[%s187 + $0x60] sm:$0xff]
        %v203 = vld [vmem:[%s187 + $0x68] sm:$0x3]
        %v204 = vld [vmem:[%s187 + $0x70] sm:$0xff]
        %v205 = vld [vmem:[%s187 + $0x78] sm:$0x3]
        %v206 = vld [vmem:[#allocation2] sm:$0xff]
        %v207 = vld [vmem:[#allocation2 + $0x8] sm:$0xff]
        %v208 = vld [vmem:[#allocation2 + $0x10] sm:$0xff]
        %v209 = vld [vmem:[#allocation2 + $0x18] sm:$0xff]
        %v210 = vld [vmem:[#allocation2 + $0x20] sm:$0xff]
        %v211 = vld [vmem:[#allocation2 + $0x28] sm:$0xff]
        %v212 = vld [vmem:[#allocation2 + $0x30] sm:$0xff]
        %v213 = vld [vmem:[#allocation2 + $0x38] sm:$0xff]
        %v214 = vld [vmem:[#allocation2 + $0x40] sm:$0xff]
        %v215 = vld [vmem:[#allocation2 + $0x48] sm:$0xff]
        %v216 = vld [vmem:[#allocation2 + $0x50] sm:$0xff]
        %v217 = vld [vmem:[#allocation2 + $0x58] sm:$0xff]
        %v218 = vld [vmem:[#allocation2 + $0x60] sm:$0xff]
        %v219 = vld [vmem:[#allocation2 + $0x68] sm:$0xff]
        %v220 = vld [vmem:[#allocation2 + $0x70] sm:$0xff]
        %v221 = vld [vmem:[#allocation2 + $0x78] sm:$0xff]
        %v222 = vld [vmem:[#allocation2 + $0x80] sm:$0xff]
        %v223 = vld [vmem:[#allocation2 + $0x88] sm:$0xff]
        %v224 = vld [vmem:[#allocation2 + $0x90] sm:$0xff]
        %v225 = vld [vmem:[#allocation2 + $0x98] sm:$0xff]
        %v226 = vld [vmem:[#allocation2 + $0xa0] sm:$0xff]
        %v227 = vld [vmem:[#allocation2 + $0xa8] sm:$0xff]
        %v228 = vld [vmem:[#allocation2 + $0xb0] sm:$0xff]
        %v229 = vld [vmem:[#allocation2 + $0xb8] sm:$0xff]
        %v230 = vld [vmem:[#allocation2 + $0xc0] sm:$0xff]
        %v231 = vld [vmem:[#allocation2 + $0xc8] sm:$0xff]
        %v232 = vld [vmem:[#allocation2 + $0xd0] sm:$0xff]
        %v233 = vld [vmem:[#allocation2 + $0xd8] sm:$0xff]
        %v234 = vld [vmem:[#allocation2 + $0xe0] sm:$0xff]
        %v235 = vld [vmem:[#allocation2 + $0xe8] sm:$0xff]
        %v236 = vld [vmem:[#allocation2 + $0xf0] sm:$0xff]
        %v237 = vld [vmem:[#allocation2 + $0xf8] sm:$0xff]
        %v238 = vld [vmem:[#allocation2 + $0x100] sm:$0xff]
        %v239 = vld [vmem:[#allocation2 + $0x108] sm:$0xff]
        %v240 = vld [vmem:[#allocation2 + $0x110] sm:$0xff]
        %v241 = vld [vmem:[#allocation2 + $0x118] sm:$0xff]
        %v242 = vld [vmem:[#allocation2 + $0x120] sm:$0xff]
        %v243 = vld [vmem:[#allocation2 + $0x128] sm:$0xff]
        %v244 = vld [vmem:[#allocation2 + $0x130] sm:$0xff]
        %v245 = vld [vmem:[#allocation2 + $0x138] sm:$0xff]
        %v246 = vld [vmem:[#allocation2 + $0x140] sm:$0xff]
        %v247 = vld [vmem:[#allocation2 + $0x148] sm:$0xff]
        %v248 = vld [vmem:[#allocation2 + $0x150] sm:$0xff]
        %v249 = vld [vmem:[#allocation2 + $0x158] sm:$0xff]
        %v250 = vld [vmem:[#allocation2 + $0x160] sm:$0xff]
        %v251 = vld [vmem:[#allocation2 + $0x168] sm:$0xff]
        %v252 = vld [vmem:[#allocation2 + $0x170] sm:$0xff]
        %v253 = vld [vmem:[#allocation2 + $0x178] sm:$0xff]
        %v254 = vld [vmem:[#allocation2 + $0x180] sm:$0xff]
        %v255 = vld [vmem:[#allocation2 + $0x188] sm:$0xff]
        %v256 = vld [vmem:[#allocation2 + $0x190] sm:$0xff]
        %v257 = vld [vmem:[#allocation2 + $0x198] sm:$0xff]
        %v258 = vld [vmem:[#allocation2 + $0x1a0] sm:$0xff]
        %v259 = vld [vmem:[#allocation2 + $0x1a8] sm:$0xff]
        %v260 = vld [vmem:[#allocation2 + $0x1b0] sm:$0xff]
        %v261 = vld [vmem:[#allocation2 + $0x1b8] sm:$0xff]
        %v262 = vld [vmem:[#allocation2 + $0x1c0] sm:$0xff]
        %v263 = vld [vmem:[#allocation2 + $0x1c8] sm:$0xff]
        %v264 = vld [vmem:[#allocation2 + $0x1d0] sm:$0xff]
        %v265 = vld [vmem:[#allocation2 + $0x1d8] sm:$0xff]
        %v266 = vld [vmem:[#allocation2 + $0x1e0] sm:$0xff]
        %v267 = vld [vmem:[#allocation2 + $0x1e8] sm:$0xff]
        %v268 = vld [vmem:[#allocation2 + $0x1f0] sm:$0xff]
        %v269 = vld [vmem:[#allocation2 + $0x1f8] sm:$0xff]
        %v270 = vld [vmem:[#allocation2 + $0x200] sm:$0xff]
        %v271 = vld [vmem:[#allocation2 + $0x208] sm:$0xff]
        %v272 = vld [vmem:[#allocation2 + $0x210] sm:$0xff]
        %v273 = vld [vmem:[#allocation2 + $0x218] sm:$0xff]
        %v274 = vld [vmem:[#allocation2 + $0x220] sm:$0xff]
        %v275 = vld [vmem:[#allocation2 + $0x228] sm:$0xff]
        %v276 = vld [vmem:[#allocation2 + $0x230] sm:$0xff]
        %v277 = vld [vmem:[#allocation2 + $0x238] sm:$0xff]
        %v278 = vld [vmem:[#allocation2 + $0x240] sm:$0xff]
        %v279 = vld [vmem:[#allocation2 + $0x248] sm:$0xff]
        %v280 = vld [vmem:[#allocation2 + $0x250] sm:$0xff]
        %v281 = vld [vmem:[#allocation2 + $0x258] sm:$0xff]
        %v282 = vld [vmem:[#allocation2 + $0x260] sm:$0xff]
        %v283 = vld [vmem:[#allocation2 + $0x268] sm:$0xff]
        %v284 = vld [vmem:[#allocation2 + $0x270] sm:$0xff]
        %v285 = vld [vmem:[#allocation2 + $0x278] sm:$0xff]
        %v286 = vld [vmem:[#allocation2 + $0x280] sm:$0xff]
        %v287 = vld [vmem:[#allocation2 + $0x288] sm:$0xff]
        %v288 = vld [vmem:[#allocation2 + $0x290] sm:$0xff]
        %v289 = vld [vmem:[#allocation2 + $0x298] sm:$0xff]
        %v290 = vld [vmem:[#allocation2 + $0x2a0] sm:$0xff]
        %v291 = vld [vmem:[#allocation2 + $0x2a8] sm:$0xff]
        %v292 = vld [vmem:[#allocation2 + $0x2b0] sm:$0xff]
        %v293 = vld [vmem:[#allocation2 + $0x2b8] sm:$0xff]
        %v294 = vld [vmem:[#allocation2 + $0x2c0] sm:$0xff]
        %v295 = vld [vmem:[#allocation2 + $0x2c8] sm:$0xff]
        %v296 = vld [vmem:[#allocation2 + $0x2d0] sm:$0xff]
        %v297 = vld [vmem:[#allocation2 + $0x2d8] sm:$0xff]
        %v298 = vld [vmem:[#allocation2 + $0x2e0] sm:$0xff]
        %v299 = vld [vmem:[#allocation2 + $0x2e8] sm:$0xff]
        %v300 = vld [vmem:[#allocation2 + $0x2f0] sm:$0xff]
        %v301 = vld [vmem:[#allocation2 + $0x2f8] sm:$0xff]
        %v302 = vld [vmem:[#allocation2 + $0x300] sm:$0xff]
        %v303 = vld [vmem:[#allocation2 + $0x308] sm:$0xff]
        %v304 = vld [vmem:[#allocation2 + $0x310] sm:$0xff]
        %v305 = vld [vmem:[#allocation2 + $0x318] sm:$0xff]
        %v306 = vld [vmem:[#allocation2 + $0x320] sm:$0xff]
        %v307 = vld [vmem:[#allocation2 + $0x328] sm:$0xff]
        %v308 = vld [vmem:[#allocation2 + $0x330] sm:$0xff]
        %v309 = vld [vmem:[#allocation2 + $0x338] sm:$0xff]
        %v310 = vld [vmem:[#allocation2 + $0x340] sm:$0xff]
        %v311 = vld [vmem:[#allocation2 + $0x348] sm:$0xff]
        %v312 = vld [vmem:[#allocation2 + $0x350] sm:$0xff]
        %v313 = vld [vmem:[#allocation2 + $0x358] sm:$0xff]
        %v314 = vld [vmem:[#allocation2 + $0x360] sm:$0xff]
        %v315 = vld [vmem:[#allocation2 + $0x368] sm:$0xff]
        %v316 = vld [vmem:[#allocation2 + $0x370] sm:$0xff]
        %v317 = vld [vmem:[#allocation2 + $0x378] sm:$0xff]
        %v318 = vld [vmem:[#allocation2 + $0x380] sm:$0xff]
        %v319 = vld [vmem:[#allocation2 + $0x388] sm:$0xff]
        %v320 = vld [vmem:[#allocation2 + $0x390] sm:$0xff]
        %v321 = vld [vmem:[#allocation2 + $0x398] sm:$0xff]
        %v322 = vld [vmem:[#allocation2 + $0x3a0] sm:$0xff]
        %v323 = vld [vmem:[#allocation2 + $0x3a8] sm:$0xff]
        %v324 = vld [vmem:[#allocation2 + $0x3b0] sm:$0xff]
        %v325 = vld [vmem:[#allocation2 + $0x3b8] sm:$0xff]
        %v326 = vld [vmem:[#allocation2 + $0x3c0] sm:$0xff]
        %v327 = vld [vmem:[#allocation2 + $0x3c8] sm:$0xff]
        %v328 = vld [vmem:[#allocation2 + $0x3d0] sm:$0xff]
        %v329 = vld [vmem:[#allocation2 + $0x3d8] sm:$0xff]
        %v330 = vld [vmem:[#allocation2 + $0x3e0] sm:$0xff]
        %v331 = vld [vmem:[#allocation2 + $0x3e8] sm:$0xff]
        %v332 = vld [vmem:[#allocation2 + $0x3f0] sm:$0xff]
        %v333 = vld [vmem:[#allocation2 + $0x3f8] sm:$0xff]
        %v334 = vld [vmem:[#allocation2 + $0x400] sm:$0xff]
        %v335 = vld [vmem:[#allocation2 + $0x408] sm:$0xff]
        %v336 = vld [vmem:[#allocation2 + $0x410] sm:$0xff]
        %v337 = vld [vmem:[#allocation2 + $0x418] sm:$0xff]
        %v338 = vld [vmem:[#allocation2 + $0x420] sm:$0xff]
        %v339 = vld [vmem:[#allocation2 + $0x428] sm:$0xff]
        %v340 = vld [vmem:[#allocation2 + $0x430] sm:$0xff]
        %v341 = vld [vmem:[#allocation2 + $0x438] sm:$0xff]
        %v342 = vld [vmem:[#allocation2 + $0x440] sm:$0xff]
        %v343 = vld [vmem:[#allocation2 + $0x448] sm:$0xff]
        %v344 = vld [vmem:[#allocation2 + $0x450] sm:$0xff]
        %v345 = vld [vmem:[#allocation2 + $0x458] sm:$0xff]
        %v346 = vld [vmem:[#allocation2 + $0x460] sm:$0xff]
        %v347 = vld [vmem:[#allocation2 + $0x468] sm:$0xff]
        %v348 = vld [vmem:[#allocation2 + $0x470] sm:$0xff]
        %v349 = vld [vmem:[#allocation2 + $0x478] sm:$0xff]
        %v350 = vld [vmem:[#allocation2 + $0x480] sm:$0xff]
        %v351 = vld [vmem:[#allocation2 + $0x488] sm:$0xff]
        %v352 = vld [vmem:[#allocation2 + $0x490] sm:$0xff]
        %v353 = vld [vmem:[#allocation2 + $0x498] sm:$0xff]
        %v354 = vld [vmem:[#allocation2 + $0x4a0] sm:$0xff]
        %v355 = vld [vmem:[#allocation2 + $0x4a8] sm:$0xff]
        %v356 = vld [vmem:[#allocation2 + $0x4b0] sm:$0xff]
        %v357 = vld [vmem:[#allocation2 + $0x4b8] sm:$0xff]
        %v358 = vld [vmem:[#allocation2 + $0x4c0] sm:$0xff]
        %v359 = vld [vmem:[#allocation2 + $0x4c8] sm:$0xff]
        %v360 = vld [vmem:[#allocation2 + $0x4d0] sm:$0xff]
        %v361 = vld [vmem:[#allocation2 + $0x4d8] sm:$0xff]
        %v362 = vld [vmem:[#allocation2 + $0x4e0] sm:$0xff]
        %v363 = vld [vmem:[#allocation2 + $0x4e8] sm:$0xff]
        %v364 = vld [vmem:[#allocation2 + $0x4f0] sm:$0xff]
        %v365 = vld [vmem:[#allocation2 + $0x4f8] sm:$0xff]
        %v366 = vld [vmem:[#allocation2 + $0x500] sm:$0xff]
        %v367 = vld [vmem:[#allocation2 + $0x508] sm:$0xff]
        %v368 = vld [vmem:[#allocation2 + $0x510] sm:$0xff]
        %v369 = vld [vmem:[#allocation2 + $0x518] sm:$0xff]
        %v370 = vld [vmem:[#allocation2 + $0x520] sm:$0xff]
        %v371 = vld [vmem:[#allocation2 + $0x528] sm:$0xff]
        %v372 = vld [vmem:[#allocation2 + $0x530] sm:$0xff]
        %v373 = vld [vmem:[#allocation2 + $0x538] sm:$0xff]
        %v374 = vld [vmem:[#allocation2 + $0x540] sm:$0xff]
        %v375 = vld [vmem:[#allocation2 + $0x548] sm:$0xff]
        %v376 = vld [vmem:[#allocation2 + $0x550] sm:$0xff]
        %v377 = vld [vmem:[#allocation2 + $0x558] sm:$0xff]
        %v378 = vld [vmem:[#allocation2 + $0x560] sm:$0xff]
        %v379 = vld [vmem:[#allocation2 + $0x568] sm:$0xff]
        %v380 = vld [vmem:[#allocation2 + $0x570] sm:$0xff]
        %v381 = vld [vmem:[#allocation2 + $0x578] sm:$0xff]
        %v382 = vld [vmem:[%s2] sm:$0xff]
        %v383 = vld [vmem:[%s2 + $0x8] sm:$0xff]
        %v384 = vld [vmem:[%s2 + $0x10] sm:$0xff]
        %v385 = vld [vmem:[%s2 + $0x18] sm:$0xff]
        %vm402 = vcmask 1042432
        %v403 = vrot.slane %v190, 5
        %v404 = vrot.slane %v191, 5
        %v405 = vsel %vm402, %v403, %v404
        %v406 = vrot.slane %v192, 5
        %v407 = vrot.slane %v193, 5
        %v408 = vsel %vm402, %v406, %v407
        %v409 = vrot.slane %v194, 5
        %v410 = vrot.slane %v195, 5
        %v411 = vsel %vm402, %v409, %v410
        %v412 = vrot.slane %v196, 5
        %v413 = vrot.slane %v197, 5
        %v414 = vsel %vm402, %v412, %v413
        %v415 = vrot.slane %v198, 5
        %v416 = vrot.slane %v199, 5
        %v417 = vsel %vm402, %v415, %v416
        %v418 = vrot.slane %v200, 5
        %v419 = vrot.slane %v201, 5
        %v420 = vsel %vm402, %v418, %v419
        %v421 = vrot.slane %v202, 5
        %v422 = vrot.slane %v203, 5
        %v423 = vsel %vm402, %v421, %v422
        %v424 = vrot.slane %v204, 5
        %v425 = vrot.slane %v205, 5
        %v426 = vsel %vm402, %v424, %v425
        %v435 = vsel %vm402, 0.0, %v403
        %v436 = vsel %vm402, 0.0, %v406
        %v437 = vsel %vm402, 0.0, %v409
        %v438 = vsel %vm402, 0.0, %v412
        %v439 = vsel %vm402, 0.0, %v415
        %v440 = vsel %vm402, 0.0, %v418
        %v441 = vsel %vm402, 0.0, %v421
        %v442 = vsel %vm402, 0.0, %v424
        %vm451 = vcmask 1046528
        %v452 = vrot.slane %v435, 1
        %v453 = vrot.slane %v405, 1
        %v454 = vsel %vm451, %v452, %v453
        %v455 = vrot.slane %v436, 1
        %v456 = vrot.slane %v408, 1
        %v457 = vsel %vm451, %v455, %v456
        %v458 = vrot.slane %v437, 1
        %v459 = vrot.slane %v411, 1
        %v460 = vsel %vm451, %v458, %v459
        %v461 = vrot.slane %v438, 1
        %v462 = vrot.slane %v414, 1
        %v463 = vsel %vm451, %v461, %v462
        %v464 = vrot.slane %v439, 1
        %v465 = vrot.slane %v417, 1
        %v466 = vsel %vm451, %v464, %v465
        %v467 = vrot.slane %v440, 1
        %v468 = vrot.slane %v420, 1
        %v469 = vsel %vm451, %v467, %v468
        %v470 = vrot.slane %v441, 1
        %v471 = vrot.slane %v423, 1
        %v472 = vsel %vm451, %v470, %v471
        %v473 = vrot.slane %v442, 1
        %v474 = vrot.slane %v426, 1
        %v475 = vsel %vm451, %v473, %v474
        %vm476 = vcmask 1045504
        %v477 = vrot.slane %v435, 2
        %v478 = vrot.slane %v405, 2
        %v479 = vsel %vm476, %v477, %v478
        %v480 = vrot.slane %v436, 2
        %v481 = vrot.slane %v408, 2
        %v482 = vsel %vm476, %v480, %v481
        %v483 = vrot.slane %v437, 2
        %v484 = vrot.slane %v411, 2
        %v485 = vsel %vm476, %v483, %v484
        %v486 = vrot.slane %v438, 2
        %v487 = vrot.slane %v414, 2
        %v488 = vsel %vm476, %v486, %v487
        %v489 = vrot.slane %v439, 2
        %v490 = vrot.slane %v417, 2
        %v491 = vsel %vm476, %v489, %v490
        %v492 = vrot.slane %v440, 2
        %v493 = vrot.slane %v420, 2
        %v494 = vsel %vm476, %v492, %v493
        %v495 = vrot.slane %v441, 2
        %v496 = vrot.slane %v423, 2
        %v497 = vsel %vm476, %v495, %v496
        %v498 = vrot.slane %v442, 2
        %v499 = vrot.slane %v426, 2
        %v500 = vsel %vm476, %v498, %v499
        %vm501 = vcmask 1044480
        %v502 = vrot.slane %v435, 3
        %v503 = vrot.slane %v405, 3
        %v504 = vsel %vm501, %v502, %v503
        %v505 = vrot.slane %v436, 3
        %v506 = vrot.slane %v408, 3
        %v507 = vsel %vm501, %v505, %v506
        %v508 = vrot.slane %v437, 3
        %v509 = vrot.slane %v411, 3
        %v510 = vsel %vm501, %v508, %v509
        %v511 = vrot.slane %v438, 3
        %v512 = vrot.slane %v414, 3
        %v513 = vsel %vm501, %v511, %v512
        %v514 = vrot.slane %v439, 3
        %v515 = vrot.slane %v417, 3
        %v516 = vsel %vm501, %v514, %v515
        %v517 = vrot.slane %v440, 3
        %v518 = vrot.slane %v420, 3
        %v519 = vsel %vm501, %v517, %v518
        %v520 = vrot.slane %v441, 3
        %v521 = vrot.slane %v423, 3
        %v522 = vsel %vm501, %v520, %v521
        %v523 = vrot.slane %v442, 3
        %v524 = vrot.slane %v426, 3
        %v525 = vsel %vm501, %v523, %v524
        %v526 = vcombine.low %v435, %v454
        %v527 = vcombine.high %v435, %v454
        %v528 = vcombine.low %v479, %v504
        %v529 = vcombine.high %v479, %v504
        %v531 = vunpack.c.l.s4 1983009808
        %v532 = vunpack.c.0.s8 %v531
        %v533 = vlaneseq
        %v534 = vshrl.u32 %v533, 7
        %v535 = vsub.s32 %v532, %v534
        %v536 = vrot.slane %v526, %v535
        %v538 = vunpack.c.l.s4 1983009808
        %v539 = vunpack.c.0.s8 %v538
        %v540 = vlaneseq
        %v541 = vshrl.u32 %v540, 7
        %v542 = vsub.s32 %v539, %v541
        %v543 = vrot.slane %v527, %v542
        %v545 = vunpack.c.l.s4 1983009808
        %v546 = vunpack.c.0.s8 %v545
        %v547 = vlaneseq
        %v548 = vshrl.u32 %v547, 7
        %v549 = vsub.s32 %v546, %v548
        %v550 = vrot.slane %v528, %v549
        %v552 = vunpack.c.l.s4 1983009808
        %v553 = vunpack.c.0.s8 %v552
        %v554 = vlaneseq
        %v555 = vshrl.u32 %v554, 7
        %v556 = vsub.s32 %v553, %v555
        %v557 = vrot.slane %v529, %v556
        %v558 = vcombine.low %v536, %v550
        %v559 = vcombine.high %v536, %v550
        %v560 = vcombine.low %v543, %v557
        %v561 = vcombine.high %v543, %v557
        %v562 = vcombine.low %v405, %v453
        %v563 = vcombine.low %v478, %v503
        %v565 = vunpack.c.l.s4 1983009808
        %v566 = vunpack.c.0.s8 %v565
        %v567 = vlaneseq
        %v568 = vshrl.u32 %v567, 7
        %v569 = vsub.s32 %v566, %v568
        %v570 = vrot.slane %v562, %v569
        %v572 = vunpack.c.l.s4 1983009808
        %v573 = vunpack.c.0.s8 %v572
        %v574 = vlaneseq
        %v575 = vshrl.u32 %v574, 7
        %v576 = vsub.s32 %v573, %v575
        %v577 = vrot.slane %v563, %v576
        %v578 = vcombine.low %v570, %v577
        %v579 = vcombine.low %v436, %v457
        %v580 = vcombine.high %v436, %v457
        %v581 = vcombine.low %v482, %v507
        %v582 = vcombine.high %v482, %v507
        %v584 = vunpack.c.l.s4 1983009808
        %v585 = vunpack.c.0.s8 %v584
        %v586 = vlaneseq
        %v587 = vshrl.u32 %v586, 7
        %v588 = vsub.s32 %v585, %v587
        %v589 = vrot.slane %v579, %v588
        %v591 = vunpack.c.l.s4 1983009808
        %v592 = vunpack.c.0.s8 %v591
        %v593 = vlaneseq
        %v594 = vshrl.u32 %v593, 7
        %v595 = vsub.s32 %v592, %v594
        %v596 = vrot.slane %v580, %v595
        %v598 = vunpack.c.l.s4 1983009808
        %v599 = vunpack.c.0.s8 %v598
        %v600 = vlaneseq
        %v601 = vshrl.u32 %v600, 7
        %v602 = vsub.s32 %v599, %v601
        %v603 = vrot.slane %v581, %v602
        %v605 = vunpack.c.l.s4 1983009808
        %v606 = vunpack.c.0.s8 %v605
        %v607 = vlaneseq
        %v608 = vshrl.u32 %v607, 7
        %v609 = vsub.s32 %v606, %v608
        %v610 = vrot.slane %v582, %v609
        %v611 = vcombine.low %v589, %v603
        %v612 = vcombine.high %v589, %v603
        %v613 = vcombine.low %v596, %v610
        %v614 = vcombine.high %v596, %v610
        %v615 = vcombine.low %v408, %v456
        %v616 = vcombine.low %v481, %v506
        %v618 = vunpack.c.l.s4 1983009808
        %v619 = vunpack.c.0.s8 %v618
        %v620 = vlaneseq
        %v621 = vshrl.u32 %v620, 7
        %v622 = vsub.s32 %v619, %v621
        %v623 = vrot.slane %v615, %v622
        %v625 = vunpack.c.l.s4 1983009808
        %v626 = vunpack.c.0.s8 %v625
        %v627 = vlaneseq
        %v628 = vshrl.u32 %v627, 7
        %v629 = vsub.s32 %v626, %v628
        %v630 = vrot.slane %v616, %v629
        %v631 = vcombine.low %v623, %v630
        %v632 = vcombine.low %v437, %v460
        %v633 = vcombine.high %v437, %v460
        %v634 = vcombine.low %v485, %v510
        %v635 = vcombine.high %v485, %v510
        %v637 = vunpack.c.l.s4 1983009808
        %v638 = vunpack.c.0.s8 %v637
        %v639 = vlaneseq
        %v640 = vshrl.u32 %v639, 7
        %v641 = vsub.s32 %v638, %v640
        %v642 = vrot.slane %v632, %v641
        %v644 = vunpack.c.l.s4 1983009808
        %v645 = vunpack.c.0.s8 %v644
        %v646 = vlaneseq
        %v647 = vshrl.u32 %v646, 7
        %v648 = vsub.s32 %v645, %v647
        %v649 = vrot.slane %v633, %v648
        %v651 = vunpack.c.l.s4 1983009808
        %v652 = vunpack.c.0.s8 %v651
        %v653 = vlaneseq
        %v654 = vshrl.u32 %v653, 7
        %v655 = vsub.s32 %v652, %v654
        %v656 = vrot.slane %v634, %v655
        %v658 = vunpack.c.l.s4 1983009808
        %v659 = vunpack.c.0.s8 %v658
        %v660 = vlaneseq
        %v661 = vshrl.u32 %v660, 7
        %v662 = vsub.s32 %v659, %v661
        %v663 = vrot.slane %v635, %v662
        %v664 = vcombine.low %v642, %v656
        %v665 = vcombine.high %v642, %v656
        %v666 = vcombine.low %v649, %v663
        %v667 = vcombine.high %v649, %v663
        %v668 = vcombine.low %v411, %v459
        %v669 = vcombine.low %v484, %v509
        %v671 = vunpack.c.l.s4 1983009808
        %v672 = vunpack.c.0.s8 %v671
        %v673 = vlaneseq
        %v674 = vshrl.u32 %v673, 7
        %v675 = vsub.s32 %v672, %v674
        %v676 = vrot.slane %v668, %v675
        %v678 = vunpack.c.l.s4 1983009808
        %v679 = vunpack.c.0.s8 %v678
        %v680 = vlaneseq
        %v681 = vshrl.u32 %v680, 7
        %v682 = vsub.s32 %v679, %v681
        %v683 = vrot.slane %v669, %v682
        %v684 = vcombine.low %v676, %v683
        %v685 = vcombine.low %v438, %v463
        %v686 = vcombine.high %v438, %v463
        %v687 = vcombine.low %v488, %v513
        %v688 = vcombine.high %v488, %v513
        %v690 = vunpack.c.l.s4 1983009808
        %v691 = vunpack.c.0.s8 %v690
        %v692 = vlaneseq
        %v693 = vshrl.u32 %v692, 7
        %v694 = vsub.s32 %v691, %v693
        %v695 = vrot.slane %v685, %v694
        %v697 = vunpack.c.l.s4 1983009808
        %v698 = vunpack.c.0.s8 %v697
        %v699 = vlaneseq
        %v700 = vshrl.u32 %v699, 7
        %v701 = vsub.s32 %v698, %v700
        %v702 = vrot.slane %v686, %v701
        %v704 = vunpack.c.l.s4 1983009808
        %v705 = vunpack.c.0.s8 %v704
        %v706 = vlaneseq
        %v707 = vshrl.u32 %v706, 7
        %v708 = vsub.s32 %v705, %v707
        %v709 = vrot.slane %v687, %v708
        %v711 = vunpack.c.l.s4 1983009808
        %v712 = vunpack.c.0.s8 %v711
        %v713 = vlaneseq
        %v714 = vshrl.u32 %v713, 7
        %v715 = vsub.s32 %v712, %v714
        %v716 = vrot.slane %v688, %v715
        %v717 = vcombine.low %v695, %v709
        %v718 = vcombine.high %v695, %v709
        %v719 = vcombine.low %v702, %v716
        %v720 = vcombine.high %v702, %v716
        %v721 = vcombine.low %v414, %v462
        %v722 = vcombine.low %v487, %v512
        %v724 = vunpack.c.l.s4 1983009808
        %v725 = vunpack.c.0.s8 %v724
        %v726 = vlaneseq
        %v727 = vshrl.u32 %v726, 7
        %v728 = vsub.s32 %v725, %v727
        %v729 = vrot.slane %v721, %v728
        %v731 = vunpack.c.l.s4 1983009808
        %v732 = vunpack.c.0.s8 %v731
        %v733 = vlaneseq
        %v734 = vshrl.u32 %v733, 7
        %v735 = vsub.s32 %v732, %v734
        %v736 = vrot.slane %v722, %v735
        %v737 = vcombine.low %v729, %v736
        %v738 = vcombine.low %v439, %v466
        %v739 = vcombine.high %v439, %v466
        %v740 = vcombine.low %v491, %v516
        %v741 = vcombine.high %v491, %v516
        %v743 = vunpack.c.l.s4 1983009808
        %v744 = vunpack.c.0.s8 %v743
        %v745 = vlaneseq
        %v746 = vshrl.u32 %v745, 7
        %v747 = vsub.s32 %v744, %v746
        %v748 = vrot.slane %v738, %v747
        %v750 = vunpack.c.l.s4 1983009808
        %v751 = vunpack.c.0.s8 %v750
        %v752 = vlaneseq
        %v753 = vshrl.u32 %v752, 7
        %v754 = vsub.s32 %v751, %v753
        %v755 = vrot.slane %v739, %v754
        %v757 = vunpack.c.l.s4 1983009808
        %v758 = vunpack.c.0.s8 %v757
        %v759 = vlaneseq
        %v760 = vshrl.u32 %v759, 7
        %v761 = vsub.s32 %v758, %v760
        %v762 = vrot.slane %v740, %v761
        %v764 = vunpack.c.l.s4 1983009808
        %v765 = vunpack.c.0.s8 %v764
        %v766 = vlaneseq
        %v767 = vshrl.u32 %v766, 7
        %v768 = vsub.s32 %v765, %v767
        %v769 = vrot.slane %v741, %v768
        %v770 = vcombine.low %v748, %v762
        %v771 = vcombine.high %v748, %v762
        %v772 = vcombine.low %v755, %v769
        %v773 = vcombine.high %v755, %v769
        %v774 = vcombine.low %v417, %v465
        %v775 = vcombine.low %v490, %v515
        %v777 = vunpack.c.l.s4 1983009808
        %v778 = vunpack.c.0.s8 %v777
        %v779 = vlaneseq
        %v780 = vshrl.u32 %v779, 7
        %v781 = vsub.s32 %v778, %v780
        %v782 = vrot.slane %v774, %v781
        %v784 = vunpack.c.l.s4 1983009808
        %v785 = vunpack.c.0.s8 %v784
        %v786 = vlaneseq
        %v787 = vshrl.u32 %v786, 7
        %v788 = vsub.s32 %v785, %v787
        %v789 = vrot.slane %v775, %v788
        %v790 = vcombine.low %v782, %v789
        %v791 = vcombine.low %v440, %v469
        %v792 = vcombine.high %v440, %v469
        %v793 = vcombine.low %v494, %v519
        %v794 = vcombine.high %v494, %v519
        %v796 = vunpack.c.l.s4 1983009808
        %v797 = vunpack.c.0.s8 %v796
        %v798 = vlaneseq
        %v799 = vshrl.u32 %v798, 7
        %v800 = vsub.s32 %v797, %v799
        %v801 = vrot.slane %v791, %v800
        %v803 = vunpack.c.l.s4 1983009808
        %v804 = vunpack.c.0.s8 %v803
        %v805 = vlaneseq
        %v806 = vshrl.u32 %v805, 7
        %v807 = vsub.s32 %v804, %v806
        %v808 = vrot.slane %v792, %v807
        %v810 = vunpack.c.l.s4 1983009808
        %v811 = vunpack.c.0.s8 %v810
        %v812 = vlaneseq
        %v813 = vshrl.u32 %v812, 7
        %v814 = vsub.s32 %v811, %v813
        %v815 = vrot.slane %v793, %v814
        %v817 = vunpack.c.l.s4 1983009808
        %v818 = vunpack.c.0.s8 %v817
        %v819 = vlaneseq
        %v820 = vshrl.u32 %v819, 7
        %v821 = vsub.s32 %v818, %v820
        %v822 = vrot.slane %v794, %v821
        %v823 = vcombine.low %v801, %v815
        %v824 = vcombine.high %v801, %v815
        %v825 = vcombine.low %v808, %v822
        %v826 = vcombine.high %v808, %v822
        %v827 = vcombine.low %v420, %v468
        %v828 = vcombine.low %v493, %v518
        %v830 = vunpack.c.l.s4 1983009808
        %v831 = vunpack.c.0.s8 %v830
        %v832 = vlaneseq
        %v833 = vshrl.u32 %v832, 7
        %v834 = vsub.s32 %v831, %v833
        %v835 = vrot.slane %v827, %v834
        %v837 = vunpack.c.l.s4 1983009808
        %v838 = vunpack.c.0.s8 %v837
        %v839 = vlaneseq
        %v840 = vshrl.u32 %v839, 7
        %v841 = vsub.s32 %v838, %v840
        %v842 = vrot.slane %v828, %v841
        %v843 = vcombine.low %v835, %v842
        %v844 = vcombine.low %v441, %v472
        %v845 = vcombine.high %v441, %v472
        %v846 = vcombine.low %v497, %v522
        %v847 = vcombine.high %v497, %v522
        %v849 = vunpack.c.l.s4 1983009808
        %v850 = vunpack.c.0.s8 %v849
        %v851 = vlaneseq
        %v852 = vshrl.u32 %v851, 7
        %v853 = vsub.s32 %v850, %v852
        %v854 = vrot.slane %v844, %v853
        %v856 = vunpack.c.l.s4 1983009808
        %v857 = vunpack.c.0.s8 %v856
        %v858 = vlaneseq
        %v859 = vshrl.u32 %v858, 7
        %v860 = vsub.s32 %v857, %v859
        %v861 = vrot.slane %v845, %v860
        %v863 = vunpack.c.l.s4 1983009808
        %v864 = vunpack.c.0.s8 %v863
        %v865 = vlaneseq
        %v866 = vshrl.u32 %v865, 7
        %v867 = vsub.s32 %v864, %v866
        %v868 = vrot.slane %v846, %v867
        %v870 = vunpack.c.l.s4 1983009808
        %v871 = vunpack.c.0.s8 %v870
        %v872 = vlaneseq
        %v873 = vshrl.u32 %v872, 7
        %v874 = vsub.s32 %v871, %v873
        %v875 = vrot.slane %v847, %v874
        %v876 = vcombine.low %v854, %v868
        %v877 = vcombine.high %v854, %v868
        %v878 = vcombine.low %v861, %v875
        %v879 = vcombine.high %v861, %v875
        %v880 = vcombine.low %v423, %v471
        %v881 = vcombine.low %v496, %v521
        %v883 = vunpack.c.l.s4 1983009808
        %v884 = vunpack.c.0.s8 %v883
        %v885 = vlaneseq
        %v886 = vshrl.u32 %v885, 7
        %v887 = vsub.s32 %v884, %v886
        %v888 = vrot.slane %v880, %v887
        %v890 = vunpack.c.l.s4 1983009808
        %v891 = vunpack.c.0.s8 %v890
        %v892 = vlaneseq
        %v893 = vshrl.u32 %v892, 7
        %v894 = vsub.s32 %v891, %v893
        %v895 = vrot.slane %v881, %v894
        %v896 = vcombine.low %v888, %v895
        %v897 = vcombine.low %v442, %v475
        %v898 = vcombine.high %v442, %v475
        %v899 = vcombine.low %v500, %v525
        %v900 = vcombine.high %v500, %v525
        %v902 = vunpack.c.l.s4 1983009808
        %v903 = vunpack.c.0.s8 %v902
        %v904 = vlaneseq
        %v905 = vshrl.u32 %v904, 7
        %v906 = vsub.s32 %v903, %v905
        %v907 = vrot.slane %v897, %v906
        %v909 = vunpack.c.l.s4 1983009808
        %v910 = vunpack.c.0.s8 %v909
        %v911 = vlaneseq
        %v912 = vshrl.u32 %v911, 7
        %v913 = vsub.s32 %v910, %v912
        %v914 = vrot.slane %v898, %v913
        %v916 = vunpack.c.l.s4 1983009808
        %v917 = vunpack.c.0.s8 %v916
        %v918 = vlaneseq
        %v919 = vshrl.u32 %v918, 7
        %v920 = vsub.s32 %v917, %v919
        %v921 = vrot.slane %v899, %v920
        %v923 = vunpack.c.l.s4 1983009808
        %v924 = vunpack.c.0.s8 %v923
        %v925 = vlaneseq
        %v926 = vshrl.u32 %v925, 7
        %v927 = vsub.s32 %v924, %v926
        %v928 = vrot.slane %v900, %v927
        %v929 = vcombine.low %v907, %v921
        %v930 = vcombine.high %v907, %v921
        %v931 = vcombine.low %v914, %v928
        %v932 = vcombine.high %v914, %v928
        %v933 = vcombine.low %v426, %v474
        %v934 = vcombine.low %v499, %v524
        %v936 = vunpack.c.l.s4 1983009808
        %v937 = vunpack.c.0.s8 %v936
        %v938 = vlaneseq
        %v939 = vshrl.u32 %v938, 7
        %v940 = vsub.s32 %v937, %v939
        %v941 = vrot.slane %v933, %v940
        %v943 = vunpack.c.l.s4 1983009808
        %v944 = vunpack.c.0.s8 %v943
        %v945 = vlaneseq
        %v946 = vshrl.u32 %v945, 7
        %v947 = vsub.s32 %v944, %v946
        %v948 = vrot.slane %v934, %v947
        %v949 = vcombine.low %v941, %v948
        %v950 = vlaneseq
        %v951 = vshrl.u32 %v950, 7
        %v952 = vsub.s32 0, %v951
        %v953 = vrot.slane %v382, %v952
        %v954 = vcombine.low %v558, %v559
        %v955 = vcombine.high %v558, %v559
        %v956 = vcombine.low %v560, %v561
        %v957 = vcombine.high %v560, %v561
        %v959 = vunpack.c.l.s4 1983009808
        %v960 = vunpack.c.0.s8 %v959
        %v961 = vlaneseq
        %v962 = vshrl.u32 %v961, 7
        %v963 = vsub.s32 %v960, %v962
        %v964 = vrot.slane %v954, %v963
        %v966 = vunpack.c.l.s4 1983009808
        %v967 = vunpack.c.0.s8 %v966
        %v968 = vlaneseq
        %v969 = vshrl.u32 %v968, 7
        %v970 = vsub.s32 %v967, %v969
        %v971 = vrot.slane %v955, %v970
        %v973 = vunpack.c.l.s4 1983009808
        %v974 = vunpack.c.0.s8 %v973
        %v975 = vlaneseq
        %v976 = vshrl.u32 %v975, 7
        %v977 = vsub.s32 %v974, %v976
        %v978 = vrot.slane %v956, %v977
        %v980 = vunpack.c.l.s4 1983009808
        %v981 = vunpack.c.0.s8 %v980
        %v982 = vlaneseq
        %v983 = vshrl.u32 %v982, 7
        %v984 = vsub.s32 %v981, %v983
        %v985 = vrot.slane %v957, %v984
        %v986 = vcombine.low %v964, %v978
        %v987 = vcombine.high %v964, %v978
        %v988 = vcombine.low %v971, %v985
        %v989 = vcombine.high %v971, %v985
        %v990 = vcombine.low %v578, %v611
        %v991 = vcombine.high %v578, %v611
        %v992 = vcombine.low %v612, %v613
        %v993 = vcombine.high %v612, %v613
        %v995 = vunpack.c.l.s4 1983009808
        %v996 = vunpack.c.0.s8 %v995
        %v997 = vlaneseq
        %v998 = vshrl.u32 %v997, 7
        %v999 = vsub.s32 %v996, %v998
        %v1000 = vrot.slane %v990, %v999
        %v1002 = vunpack.c.l.s4 1983009808
        %v1003 = vunpack.c.0.s8 %v1002
        %v1004 = vlaneseq
        %v1005 = vshrl.u32 %v1004, 7
        %v1006 = vsub.s32 %v1003, %v1005
        %v1007 = vrot.slane %v991, %v1006
        %v1009 = vunpack.c.l.s4 1983009808
        %v1010 = vunpack.c.0.s8 %v1009
        %v1011 = vlaneseq
        %v1012 = vshrl.u32 %v1011, 7
        %v1013 = vsub.s32 %v1010, %v1012
        %v1014 = vrot.slane %v992, %v1013
        %v1016 = vunpack.c.l.s4 1983009808
        %v1017 = vunpack.c.0.s8 %v1016
        %v1018 = vlaneseq
        %v1019 = vshrl.u32 %v1018, 7
        %v1020 = vsub.s32 %v1017, %v1019
        %v1021 = vrot.slane %v993, %v1020
        %v1022 = vcombine.low %v1000, %v1014
        %v1023 = vcombine.high %v1000, %v1014
        %v1024 = vcombine.low %v1007, %v1021
        %v1025 = vcombine.high %v1007, %v1021
        %v1026 = vcombine.low %v614, %v631
        %v1027 = vcombine.high %v614, %v631
        %v1028 = vcombine.low %v664, %v665
        %v1029 = vcombine.high %v664, %v665
        %v1031 = vunpack.c.l.s4 1983009808
        %v1032 = vunpack.c.0.s8 %v1031
        %v1033 = vlaneseq
        %v1034 = vshrl.u32 %v1033, 7
        %v1035 = vsub.s32 %v1032, %v1034
        %v1036 = vrot.slane %v1026, %v1035
        %v1038 = vunpack.c.l.s4 1983009808
        %v1039 = vunpack.c.0.s8 %v1038
        %v1040 = vlaneseq
        %v1041 = vshrl.u32 %v1040, 7
        %v1042 = vsub.s32 %v1039, %v1041
        %v1043 = vrot.slane %v1027, %v1042
        %v1045 = vunpack.c.l.s4 1983009808
        %v1046 = vunpack.c.0.s8 %v1045
        %v1047 = vlaneseq
        %v1048 = vshrl.u32 %v1047, 7
        %v1049 = vsub.s32 %v1046, %v1048
        %v1050 = vrot.slane %v1028, %v1049
        %v1052 = vunpack.c.l.s4 1983009808
        %v1053 = vunpack.c.0.s8 %v1052
        %v1054 = vlaneseq
        %v1055 = vshrl.u32 %v1054, 7
        %v1056 = vsub.s32 %v1053, %v1055
        %v1057 = vrot.slane %v1029, %v1056
        %v1058 = vcombine.low %v1036, %v1050
        %v1059 = vcombine.high %v1036, %v1050
        %v1060 = vcombine.low %v1043, %v1057
        %v1061 = vcombine.high %v1043, %v1057
        %v1062 = vcombine.low %v666, %v667
        %v1063 = vcombine.high %v666, %v667
        %v1064 = vcombine.low %v684, %v717
        %v1065 = vcombine.high %v684, %v717
        %v1067 = vunpack.c.l.s4 1983009808
        %v1068 = vunpack.c.0.s8 %v1067
        %v1069 = vlaneseq
        %v1070 = vshrl.u32 %v1069, 7
        %v1071 = vsub.s32 %v1068, %v1070
        %v1072 = vrot.slane %v1062, %v1071
        %v1074 = vunpack.c.l.s4 1983009808
        %v1075 = vunpack.c.0.s8 %v1074
        %v1076 = vlaneseq
        %v1077 = vshrl.u32 %v1076, 7
        %v1078 = vsub.s32 %v1075, %v1077
        %v1079 = vrot.slane %v1063, %v1078
        %v1081 = vunpack.c.l.s4 1983009808
        %v1082 = vunpack.c.0.s8 %v1081
        %v1083 = vlaneseq
        %v1084 = vshrl.u32 %v1083, 7
        %v1085 = vsub.s32 %v1082, %v1084
        %v1086 = vrot.slane %v1064, %v1085
        %v1088 = vunpack.c.l.s4 1983009808
        %v1089 = vunpack.c.0.s8 %v1088
        %v1090 = vlaneseq
        %v1091 = vshrl.u32 %v1090, 7
        %v1092 = vsub.s32 %v1089, %v1091
        %v1093 = vrot.slane %v1065, %v1092
        %v1094 = vcombine.low %v1072, %v1086
        %v1095 = vcombine.high %v1072, %v1086
        %v1096 = vcombine.low %v1079, %v1093
        %v1097 = vcombine.high %v1079, %v1093
        %v1098 = vcombine.low %v718, %v719
        %v1099 = vcombine.high %v718, %v719
        %v1100 = vcombine.low %v720, %v737
        %v1101 = vcombine.high %v720, %v737
        %v1103 = vunpack.c.l.s4 1983009808
        %v1104 = vunpack.c.0.s8 %v1103
        %v1105 = vlaneseq
        %v1106 = vshrl.u32 %v1105, 7
        %v1107 = vsub.s32 %v1104, %v1106
        %v1108 = vrot.slane %v1098, %v1107
        %v1110 = vunpack.c.l.s4 1983009808
        %v1111 = vunpack.c.0.s8 %v1110
        %v1112 = vlaneseq
        %v1113 = vshrl.u32 %v1112, 7
        %v1114 = vsub.s32 %v1111, %v1113
        %v1115 = vrot.slane %v1099, %v1114
        %v1117 = vunpack.c.l.s4 1983009808
        %v1118 = vunpack.c.0.s8 %v1117
        %v1119 = vlaneseq
        %v1120 = vshrl.u32 %v1119, 7
        %v1121 = vsub.s32 %v1118, %v1120
        %v1122 = vrot.slane %v1100, %v1121
        %v1124 = vunpack.c.l.s4 1983009808
        %v1125 = vunpack.c.0.s8 %v1124
        %v1126 = vlaneseq
        %v1127 = vshrl.u32 %v1126, 7
        %v1128 = vsub.s32 %v1125, %v1127
        %v1129 = vrot.slane %v1101, %v1128
        %v1130 = vcombine.low %v1108, %v1122
        %v1131 = vcombine.high %v1108, %v1122
        %v1132 = vcombine.low %v1115, %v1129
        %v1133 = vcombine.high %v1115, %v1129
        %v1134 = vcombine.low %v770, %v771
        %v1135 = vcombine.high %v770, %v771
        %v1136 = vcombine.low %v772, %v773
        %v1137 = vcombine.high %v772, %v773
        %v1139 = vunpack.c.l.s4 1983009808
        %v1140 = vunpack.c.0.s8 %v1139
        %v1141 = vlaneseq
        %v1142 = vshrl.u32 %v1141, 7
        %v1143 = vsub.s32 %v1140, %v1142
        %v1144 = vrot.slane %v1134, %v1143
        %v1146 = vunpack.c.l.s4 1983009808
        %v1147 = vunpack.c.0.s8 %v1146
        %v1148 = vlaneseq
        %v1149 = vshrl.u32 %v1148, 7
        %v1150 = vsub.s32 %v1147, %v1149
        %v1151 = vrot.slane %v1135, %v1150
        %v1153 = vunpack.c.l.s4 1983009808
        %v1154 = vunpack.c.0.s8 %v1153
        %v1155 = vlaneseq
        %v1156 = vshrl.u32 %v1155, 7
        %v1157 = vsub.s32 %v1154, %v1156
        %v1158 = vrot.slane %v1136, %v1157
        %v1160 = vunpack.c.l.s4 1983009808
        %v1161 = vunpack.c.0.s8 %v1160
        %v1162 = vlaneseq
        %v1163 = vshrl.u32 %v1162, 7
        %v1164 = vsub.s32 %v1161, %v1163
        %v1165 = vrot.slane %v1137, %v1164
        %v1166 = vcombine.low %v1144, %v1158
        %v1167 = vcombine.high %v1144, %v1158
        %v1168 = vcombine.low %v1151, %v1165
        %v1169 = vcombine.high %v1151, %v1165
        %v1170 = vcombine.low %v790, %v823
        %v1171 = vcombine.high %v790, %v823
        %v1172 = vcombine.low %v824, %v825
        %v1173 = vcombine.high %v824, %v825
        %v1175 = vunpack.c.l.s4 1983009808
        %v1176 = vunpack.c.0.s8 %v1175
        %v1177 = vlaneseq
        %v1178 = vshrl.u32 %v1177, 7
        %v1179 = vsub.s32 %v1176, %v1178
        %v1180 = vrot.slane %v1170, %v1179
        %v1182 = vunpack.c.l.s4 1983009808
        %v1183 = vunpack.c.0.s8 %v1182
        %v1184 = vlaneseq
        %v1185 = vshrl.u32 %v1184, 7
        %v1186 = vsub.s32 %v1183, %v1185
        %v1187 = vrot.slane %v1171, %v1186
        %v1189 = vunpack.c.l.s4 1983009808
        %v1190 = vunpack.c.0.s8 %v1189
        %v1191 = vlaneseq
        %v1192 = vshrl.u32 %v1191, 7
        %v1193 = vsub.s32 %v1190, %v1192
        %v1194 = vrot.slane %v1172, %v1193
        %v1196 = vunpack.c.l.s4 1983009808
        %v1197 = vunpack.c.0.s8 %v1196
        %v1198 = vlaneseq
        %v1199 = vshrl.u32 %v1198, 7
        %v1200 = vsub.s32 %v1197, %v1199
        %v1201 = vrot.slane %v1173, %v1200
        %v1202 = vcombine.low %v1180, %v1194
        %v1203 = vcombine.high %v1180, %v1194
        %v1204 = vcombine.low %v1187, %v1201
        %v1205 = vcombine.high %v1187, %v1201
        %v1206 = vcombine.low %v826, %v843
        %v1207 = vcombine.high %v826, %v843
        %v1208 = vcombine.low %v876, %v877
        %v1209 = vcombine.high %v876, %v877
        %v1211 = vunpack.c.l.s4 1983009808
        %v1212 = vunpack.c.0.s8 %v1211
        %v1213 = vlaneseq
        %v1214 = vshrl.u32 %v1213, 7
        %v1215 = vsub.s32 %v1212, %v1214
        %v1216 = vrot.slane %v1206, %v1215
        %v1218 = vunpack.c.l.s4 1983009808
        %v1219 = vunpack.c.0.s8 %v1218
        %v1220 = vlaneseq
        %v1221 = vshrl.u32 %v1220, 7
        %v1222 = vsub.s32 %v1219, %v1221
        %v1223 = vrot.slane %v1207, %v1222
        %v1225 = vunpack.c.l.s4 1983009808
        %v1226 = vunpack.c.0.s8 %v1225
        %v1227 = vlaneseq
        %v1228 = vshrl.u32 %v1227, 7
        %v1229 = vsub.s32 %v1226, %v1228
        %v1230 = vrot.slane %v1208, %v1229
        %v1232 = vunpack.c.l.s4 1983009808
        %v1233 = vunpack.c.0.s8 %v1232
        %v1234 = vlaneseq
        %v1235 = vshrl.u32 %v1234, 7
        %v1236 = vsub.s32 %v1233, %v1235
        %v1237 = vrot.slane %v1209, %v1236
        %v1238 = vcombine.low %v1216, %v1230
        %v1239 = vcombine.high %v1216, %v1230
        %v1240 = vcombine.low %v1223, %v1237
        %v1241 = vcombine.high %v1223, %v1237
        %v1242 = vcombine.low %v878, %v879
        %v1243 = vcombine.high %v878, %v879
        %v1244 = vcombine.low %v896, %v929
        %v1245 = vcombine.high %v896, %v929
        %v1247 = vunpack.c.l.s4 1983009808
        %v1248 = vunpack.c.0.s8 %v1247
        %v1249 = vlaneseq
        %v1250 = vshrl.u32 %v1249, 7
        %v1251 = vsub.s32 %v1248, %v1250
        %v1252 = vrot.slane %v1242, %v1251
        %v1254 = vunpack.c.l.s4 1983009808
        %v1255 = vunpack.c.0.s8 %v1254
        %v1256 = vlaneseq
        %v1257 = vshrl.u32 %v1256, 7
        %v1258 = vsub.s32 %v1255, %v1257
        %v1259 = vrot.slane %v1243, %v1258
        %v1261 = vunpack.c.l.s4 1983009808
        %v1262 = vunpack.c.0.s8 %v1261
        %v1263 = vlaneseq
        %v1264 = vshrl.u32 %v1263, 7
        %v1265 = vsub.s32 %v1262, %v1264
        %v1266 = vrot.slane %v1244, %v1265
        %v1268 = vunpack.c.l.s4 1983009808
        %v1269 = vunpack.c.0.s8 %v1268
        %v1270 = vlaneseq
        %v1271 = vshrl.u32 %v1270, 7
        %v1272 = vsub.s32 %v1269, %v1271
        %v1273 = vrot.slane %v1245, %v1272
        %v1274 = vcombine.low %v1252, %v1266
        %v1275 = vcombine.high %v1252, %v1266
        %v1276 = vcombine.low %v1259, %v1273
        %v1277 = vcombine.high %v1259, %v1273
        %v1278 = vcombine.low %v930, %v931
        %v1279 = vcombine.high %v930, %v931
        %v1280 = vcombine.low %v932, %v949
        %v1281 = vcombine.high %v932, %v949
        %v1283 = vunpack.c.l.s4 1983009808
        %v1284 = vunpack.c.0.s8 %v1283
        %v1285 = vlaneseq
        %v1286 = vshrl.u32 %v1285, 7
        %v1287 = vsub.s32 %v1284, %v1286
        %v1288 = vrot.slane %v1278, %v1287
        %v1290 = vunpack.c.l.s4 1983009808
        %v1291 = vunpack.c.0.s8 %v1290
        %v1292 = vlaneseq
        %v1293 = vshrl.u32 %v1292, 7
        %v1294 = vsub.s32 %v1291, %v1293
        %v1295 = vrot.slane %v1279, %v1294
        %v1297 = vunpack.c.l.s4 1983009808
        %v1298 = vunpack.c.0.s8 %v1297
        %v1299 = vlaneseq
        %v1300 = vshrl.u32 %v1299, 7
        %v1301 = vsub.s32 %v1298, %v1300
        %v1302 = vrot.slane %v1280, %v1301
        %v1304 = vunpack.c.l.s4 1983009808
        %v1305 = vunpack.c.0.s8 %v1304
        %v1306 = vlaneseq
        %v1307 = vshrl.u32 %v1306, 7
        %v1308 = vsub.s32 %v1305, %v1307
        %v1309 = vrot.slane %v1281, %v1308
        %v1310 = vcombine.low %v1288, %v1302
        %v1311 = vcombine.high %v1288, %v1302
        %v1312 = vcombine.low %v1295, %v1309
        %v1313 = vcombine.high %v1295, %v1309
        %1354 = vmatprep.subr.mxu0 0.0
        %1355 = vmatpush1.msra.mxu0 %v206
        %1356 = vmatprep.subr.mxu0 0.0
        %1357 = vmatpush1.msra.mxu0 %v207
        %1358 = vmatprep.subr.mxu0 0.0
        %1359 = vmatpush1.msra.mxu0 %v208
        %1360 = vmatprep.subr.mxu0 0.0
        %1361 = vmatpush1.msra.mxu0 %v209
        %1362 = vmatprep.subr.mxu0 0.0
        %1363 = vmatpush1.msra.mxu0 %v210
        %1364 = vmatprep.subr.mxu0 0.0
        %1365 = vmatpush1.msra.mxu0 %v211
        %1366 = vmatprep.subr.mxu0 0.0
        %1367 = vmatpush1.msra.mxu0 %v212
        %1368 = vmatprep.subr.mxu0 0.0
        %1369 = vmatpush1.msra.mxu0 %v213
        %1370 = vmatprep.subr.mxu0 0.0
        %1371 = vmatpush1.msra.mxu0 %v214
        %1372 = vmatprep.subr.mxu0 0.0
        %1373 = vmatpush1.msra.mxu0 %v215
        %1374 = vmatprep.subr.mxu0 0.0
        %1375 = vmatpush1.msra.mxu0 %v216
        %1376 = vmatprep.subr.mxu0 0.0
        %1377 = vmatpush1.msra.mxu0 %v217
        %1378 = vmatprep.subr.mxu0 0.0
        %1379 = vmatpush1.msra.mxu0 %v218
        %1380 = vmatprep.subr.mxu0 0.0
        %1381 = vmatpush1.msra.mxu0 %v219
        %1382 = vmatprep.subr.mxu0 0.0
        %1383 = vmatpush1.msra.mxu0 %v220
        %1384 = vmatprep.subr.mxu0 0.0
        %1385 = vmatpush1.msra.mxu0 %v221
        %1386 = vmatprep.subr.mxu0 0.0
        %1387 = vmatpush1.msra.mxu0 %v222
        %1388 = vmatprep.subr.mxu0 0.0
        %1389 = vmatpush1.msra.mxu0 %v223
        %1390 = vmatprep.subr.mxu0 0.0
        %1391 = vmatpush1.msra.mxu0 %v224
        %1392 = vmatprep.subr.mxu0 0.0
        %1393 = vmatpush1.msra.mxu0 %v225
        %1394 = vmatprep.subr.mxu0 0.0
        %1395 = vmatpush1.msra.mxu0 %v226
        %1396 = vmatprep.subr.mxu0 0.0
        %1397 = vmatpush1.msra.mxu0 %v227
        %1398 = vmatprep.subr.mxu0 0.0
        %1399 = vmatpush1.msra.mxu0 %v228
        %1400 = vmatprep.subr.mxu0 0.0
        %1401 = vmatpush1.msra.mxu0 %v229
        %1402 = vmatprep.subr.mxu0 0.0
        %1403 = vmatpush1.msra.mxu0 %v230
        %1404 = vmatprep.subr.mxu0 0.0
        %1405 = vmatpush1.msra.mxu0 %v231
        %1406 = vmatprep.subr.mxu0 0.0
        %1407 = vmatpush1.msra.mxu0 %v232
        %1408 = vmatprep.subr.mxu0 0.0
        %1409 = vmatpush1.msra.mxu0 %v233
        %1410 = vmatprep.subr.mxu0 0.0
        %1411 = vmatpush1.msra.mxu0 %v234
        %1412 = vmatprep.subr.mxu0 0.0
        %1413 = vmatpush1.msra.mxu0 %v235
        %1414 = vmatprep.subr.mxu0 0.0
        %1415 = vmatpush1.msra.mxu0 %v236
        %1416 = vmatprep.subr.mxu0 0.0
        %1417 = vmatpush1.msra.mxu0 %v237
        %1418 = vmatprep.mubr.f32.mxu0 %v987
        %1419 = vmatmul.mubr.f32.gmra.mrb[0].mxu0 %v986
        %v1420 = vpop.f32.mrb[0].mxu0
        %v1421 = vadd.f32 %v953, %v1420
        %v1422 = vpop.f32.mrb[0].mxu0
        %1423 = vmatprep.mubr.f32.mxu0 %v1023
        %1424 = vmatmul.mubr.f32.gmra.mrb[0].mxu0 %v1022
        %v1425 = vpop.f32.mrb[0].mxu0
        %v1426 = vadd.f32 %v953, %v1425
        %v1427 = vpop.f32.mrb[0].mxu0
        %1428 = vmatprep.mubr.f32.mxu0 %v1059
        %1429 = vmatmul.mubr.f32.gmra.mrb[0].mxu0 %v1058
        %v1430 = vpop.f32.mrb[0].mxu0
        %v1431 = vadd.f32 %v953, %v1430
        %v1432 = vpop.f32.mrb[0].mxu0
        %1433 = vmatprep.mubr.f32.mxu0 %v1095
        %1434 = vmatmul.mubr.f32.gmra.mrb[0].mxu0 %v1094
        %v1435 = vpop.f32.mrb[0].mxu0
        %v1436 = vadd.f32 %v953, %v1435
        %v1437 = vpop.f32.mrb[0].mxu0
        %1438 = vmatprep.mubr.f32.mxu0 %v1131
        %1439 = vmatmul.mubr.f32.gmra.mrb[0].mxu0 %v1130
        %v1440 = vpop.f32.mrb[0].mxu0
        %v1441 = vadd.f32 %v953, %v1440
        %v1442 = vpop.f32.mrb[0].mxu0
        %1443 = vmatprep.mubr.f32.mxu0 %v1167
        %1444 = vmatmul.mubr.f32.gmra.mrb[0].mxu0 %v1166
        %v1445 = vpop.f32.mrb[0].mxu0
        %v1446 = vadd.f32 %v953, %v1445
        %v1447 = vpop.f32.mrb[0].mxu0
        %1448 = vmatprep.mubr.f32.mxu0 %v1203
        %1449 = vmatmul.mubr.f32.gmra.mrb[0].mxu0 %v1202
        %v1450 = vpop.f32.mrb[0].mxu0
        %v1451 = vadd.f32 %v953, %v1450
        %v1452 = vpop.f32.mrb[0].mxu0
        %1453 = vmatprep.mubr.f32.mxu0 %v1239
        %1454 = vmatmul.mubr.f32.gmra.mrb[0].mxu0 %v1238
        %v1455 = vpop.f32.mrb[0].mxu0
        %v1456 = vadd.f32 %v953, %v1455
        %v1457 = vpop.f32.mrb[0].mxu0
        %1458 = vmatprep.mubr.f32.mxu0 %v1275
        %1459 = vmatmul.mubr.f32.gmra.mrb[0].mxu0 %v1274
        %v1460 = vpop.f32.mrb[0].mxu0
        %v1461 = vadd.f32 %v953, %v1460
        %v1462 = vpop.f32.mrb[0].mxu0
        %1463 = vmatprep.mubr.f32.mxu0 %v1311
        %1464 = vmatmul.mubr.f32.gmra.mrb[0].mxu0 %v1310
        %v1465 = vpop.f32.mrb[0].mxu0
        %v1466 = vadd.f32 %v953, %v1465
        %v1467 = vpop.f32.mrb[0].mxu0
        %1468 = vdwg.mxu0
        %1469 = vmatprep.subr.mxu0 0.0
        %1470 = vmatpush1.msra.mxu0 %v238
        %1471 = vmatprep.subr.mxu0 0.0
        %1472 = vmatpush1.msra.mxu0 %v239
        %1473 = vmatprep.subr.mxu0 0.0
        %1474 = vmatpush1.msra.mxu0 %v240
        %1475 = vmatprep.subr.mxu0 0.0
        %1476 = vmatpush1.msra.mxu0 %v241
        %1477 = vmatprep.subr.mxu0 0.0
        %1478 = vmatpush1.msra.mxu0 %v242
        %1479 = vmatprep.subr.mxu0 0.0
        %1480 = vmatpush1.msra.mxu0 %v243
        %1481 = vmatprep.subr.mxu0 0.0
        %1482 = vmatpush1.msra.mxu0 %v244
        %1483 = vmatprep.subr.mxu0 0.0
        %1484 = vmatpush1.msra.mxu0 %v245
        %1485 = vmatprep.subr.mxu0 0.0
        %1486 = vmatpush1.msra.mxu0 %v246
        %1487 = vmatprep.subr.mxu0 0.0
        %1488 = vmatpush1.msra.mxu0 %v247
        %1489 = vmatprep.subr.mxu0 0.0
        %1490 = vmatpush1.msra.mxu0 %v248
        %1491 = vmatprep.subr.mxu0 0.0
        %1492 = vmatpush1.msra.mxu0 %v249
        %1493 = vmatprep.subr.mxu0 0.0
        %1494 = vmatpush1.msra.mxu0 %v250
        %1495 = vmatprep.subr.mxu0 0.0
        %1496 = vmatpush1.msra.mxu0 %v251
        %1497 = vmatprep.subr.mxu0 0.0
        %1498 = vmatpush1.msra.mxu0 %v252
        %1499 = vmatprep.subr.mxu0 0.0
        %1500 = vmatpush1.msra.mxu0 %v253
        %1501 = vmatprep.subr.mxu0 0.0
        %1502 = vmatpush1.msra.mxu0 %v254
        %1503 = vmatprep.subr.mxu0 0.0
        %1504 = vmatpush1.msra.mxu0 %v255
        %1505 = vmatprep.subr.mxu0 0.0
        %1506 = vmatpush1.msra.mxu0 %v256
        %1507 = vmatprep.subr.mxu0 0.0
        %1508 = vmatpush1.msra.mxu0 %v257
        %1509 = vmatprep.subr.mxu0 0.0
        %1510 = vmatpush1.msra.mxu0 %v258
        %1511 = vmatprep.subr.mxu0 0.0
        %1512 = vmatpush1.msra.mxu0 %v259
        %1513 = vmatprep.subr.mxu0 0.0
        %1514 = vmatpush1.msra.mxu0 %v260
        %1515 = vmatprep.subr.mxu0 0.0
        %1516 = vmatpush1.msra.mxu0 %v261
        %1517 = vmatprep.subr.mxu0 0.0
        %1518 = vmatpush1.msra.mxu0 %v262
        %1519 = vmatprep.subr.mxu0 0.0
        %1520 = vmatpush1.msra.mxu0 %v263
        %1521 = vmatprep.subr.mxu0 0.0
        %1522 = vmatpush1.msra.mxu0 %v264
        %1523 = vmatprep.subr.mxu0 0.0
        %1524 = vmatpush1.msra.mxu0 %v265
        %1525 = vmatprep.subr.mxu0 0.0
        %1526 = vmatpush1.msra.mxu0 %v266
        %1527 = vmatprep.subr.mxu0 0.0
        %1528 = vmatpush1.msra.mxu0 %v267
        %1529 = vmatprep.subr.mxu0 0.0
        %1530 = vmatpush1.msra.mxu0 %v268
        %1531 = vmatprep.subr.mxu0 0.0
        %1532 = vmatpush1.msra.mxu0 %v269
        %1533 = vmatprep.mubr.f32.mxu0 %v989
        %1534 = vmatmul.mubr.f32.gmra.mrb[0].mxu0 %v988
        %v1535 = vpop.f32.mrb[0].mxu0
        %v1536 = vadd.f32 %v1421, %v1535
        %v1537 = vpop.f32.mrb[0].mxu0
        %1538 = vmatprep.mubr.f32.mxu0 %v1025
        %1539 = vmatmul.mubr.f32.gmra.mrb[0].mxu0 %v1024
        %v1540 = vpop.f32.mrb[0].mxu0
        %v1541 = vadd.f32 %v1426, %v1540
        %v1542 = vpop.f32.mrb[0].mxu0
        %1543 = vmatprep.mubr.f32.mxu0 %v1061
        %1544 = vmatmul.mubr.f32.gmra.mrb[0].mxu0 %v1060
        %v1545 = vpop.f32.mrb[0].mxu0
        %v1546 = vadd.f32 %v1431, %v1545
        %v1547 = vpop.f32.mrb[0].mxu0
        %1548 = vmatprep.mubr.f32.mxu0 %v1097
        %1549 = vmatmul.mubr.f32.gmra.mrb[0].mxu0 %v1096
        %v1550 = vpop.f32.mrb[0].mxu0
        %v1551 = vadd.f32 %v1436, %v1550
        %v1552 = vpop.f32.mrb[0].mxu0
        %1553 = vmatprep.mubr.f32.mxu0 %v1133
        %1554 = vmatmul.mubr.f32.gmra.mrb[0].mxu0 %v1132
        %v1555 = vpop.f32.mrb[0].mxu0
        %v1556 = vadd.f32 %v1441, %v1555
        %v1557 = vpop.f32.mrb[0].mxu0
        %1558 = vmatprep.mubr.f32.mxu0 %v1169
        %1559 = vmatmul.mubr.f32.gmra.mrb[0].mxu0 %v1168
        %v1560 = vpop.f32.mrb[0].mxu0
        %v1561 = vadd.f32 %v1446, %v1560
        %v1562 = vpop.f32.mrb[0].mxu0
        %1563 = vmatprep.mubr.f32.mxu0 %v1205
        %1564 = vmatmul.mubr.f32.gmra.mrb[0].mxu0 %v1204
        %v1565 = vpop.f32.mrb[0].mxu0
        %v1566 = vadd.f32 %v1451, %v1565
        %v1567 = vpop.f32.mrb[0].mxu0
        %1568 = vmatprep.mubr.f32.mxu0 %v1241
        %1569 = vmatmul.mubr.f32.gmra.mrb[0].mxu0 %v1240
        %v1570 = vpop.f32.mrb[0].mxu0
        %v1571 = vadd.f32 %v1456, %v1570
        %v1572 = vpop.f32.mrb[0].mxu0
        %1573 = vmatprep.mubr.f32.mxu0 %v1277
        %1574 = vmatmul.mubr.f32.gmra.mrb[0].mxu0 %v1276
        %v1575 = vpop.f32.mrb[0].mxu0
        %v1576 = vadd.f32 %v1461, %v1575
        %v1577 = vpop.f32.mrb[0].mxu0
        %1578 = vmatprep.mubr.f32.mxu0 %v1313
        %1579 = vmatmul.mubr.f32.gmra.mrb[0].mxu0 %v1312
        %v1580 = vpop.f32.mrb[0].mxu0
        %v1581 = vadd.f32 %v1466, %v1580
        %v1582 = vpop.f32.mrb[0].mxu0
        %1583 = vdwg.mxu0
        %v1584 = vmax.f32 %v1536, 0.0
        %v1585 = vmax.f32 %v1541, 0.0
        %v1586 = vmax.f32 %v1546, 0.0
        %v1587 = vmax.f32 %v1551, 0.0
        %v1588 = vmax.f32 %v1556, 0.0
        %v1589 = vmax.f32 %v1561, 0.0
        %v1590 = vmax.f32 %v1566, 0.0
        %v1591 = vmax.f32 %v1571, 0.0
        %v1592 = vmax.f32 %v1576, 0.0
        %v1593 = vmax.f32 %v1581, 0.0
        %v1594 = vlaneseq
        %v1595 = vshrl.u32 %v1594, 7
        %v1596 = vsub.s32 3, %v1595
        %v1597 = vrot.slane %v382, %v1596
        %1598 = vmatprep.subr.mxu0 0.0
        %1599 = vmatpush1.msra.mxu0 %v366
        %1600 = vmatprep.subr.mxu0 0.0
        %1601 = vmatpush1.msra.mxu0 %v367
        %1602 = vmatprep.subr.mxu0 0.0
        %1603 = vmatpush1.msra.mxu0 %v368
        %1604 = vmatprep.subr.mxu0 0.0
        %1605 = vmatpush1.msra.mxu0 %v369
        %1606 = vmatprep.subr.mxu0 0.0
        %1607 = vmatpush1.msra.mxu0 %v370
        %1608 = vmatprep.subr.mxu0 0.0
        %1609 = vmatpush1.msra.mxu0 %v371
        %1610 = vmatprep.subr.mxu0 0.0
        %1611 = vmatpush1.msra.mxu0 %v372
        %1612 = vmatprep.subr.mxu0 0.0
        %1613 = vmatpush1.msra.mxu0 %v373
        %1614 = vmatprep.subr.mxu0 0.0
        %1615 = vmatpush1.msra.mxu0 %v374
        %1616 = vmatprep.subr.mxu0 0.0
        %1617 = vmatpush1.msra.mxu0 %v375
        %1618 = vmatprep.subr.mxu0 0.0
        %1619 = vmatpush1.msra.mxu0 %v376
        %1620 = vmatprep.subr.mxu0 0.0
        %1621 = vmatpush1.msra.mxu0 %v377
        %1622 = vmatprep.subr.mxu0 0.0
        %1623 = vmatpush1.msra.mxu0 %v378
        %1624 = vmatprep.subr.mxu0 0.0
        %1625 = vmatpush1.msra.mxu0 %v379
        %1626 = vmatprep.subr.mxu0 0.0
        %1627 = vmatpush1.msra.mxu0 %v380
        %1628 = vmatprep.subr.mxu0 0.0
        %1629 = vmatpush1.msra.mxu0 %v381
        %1630 = vmatprep.subr.mxu0 0.0
        %1631 = vmatpush1.msra.mxu0 0.0
        %1632 = vmatprep.subr.mxu0 0.0
        %1633 = vmatpush1.msra.mxu0 0.0
        %1634 = vmatprep.subr.mxu0 0.0
        %1635 = vmatpush1.msra.mxu0 0.0
        %1636 = vmatprep.subr.mxu0 0.0
        %1637 = vmatpush1.msra.mxu0 0.0
        %1638 = vmatprep.subr.mxu0 0.0
        %1639 = vmatpush1.msra.mxu0 0.0
        %1640 = vmatprep.subr.mxu0 0.0
        %1641 = vmatpush1.msra.mxu0 0.0
        %1642 = vmatprep.subr.mxu0 0.0
        %1643 = vmatpush1.msra.mxu0 0.0
        %1644 = vmatprep.subr.mxu0 0.0
        %1645 = vmatpush1.msra.mxu0 0.0
        %1646 = vmatprep.subr.mxu0 0.0
        %1647 = vmatpush1.msra.mxu0 0.0
        %1648 = vmatprep.subr.mxu0 0.0
        %1649 = vmatpush1.msra.mxu0 0.0
        %1650 = vmatprep.subr.mxu0 0.0
        %1651 = vmatpush1.msra.mxu0 0.0
        %1652 = vmatprep.subr.mxu0 0.0
        %1653 = vmatpush1.msra.mxu0 0.0
        %1654 = vmatprep.subr.mxu0 0.0
        %1655 = vmatpush1.msra.mxu0 0.0
        %1656 = vmatprep.subr.mxu0 0.0
        %1657 = vmatpush1.msra.mxu0 0.0
        %1658 = vmatprep.subr.mxu0 0.0
        %1659 = vmatpush1.msra.mxu0 0.0
        %1660 = vmatprep.subr.mxu0 0.0
        %1661 = vmatpush1.msra.mxu0 0.0
        %1662 = vmatprep.mubr.f32.mxu0 0.0
        %1663 = vmatmul.mubr.f32.gmra.mrb[0].mxu0 %v1584
        %v1664 = vpop.f32.mrb[0].mxu0
        %v1665 = vadd.f32 %v1597, %v1664
        %v1666 = vpop.f32.mrb[0].mxu0
        %1667 = vmatprep.mubr.f32.mxu0 0.0
        %1668 = vmatmul.mubr.f32.gmra.mrb[0].mxu0 %v1585
        %v1669 = vpop.f32.mrb[0].mxu0
        %v1670 = vadd.f32 %v1597, %v1669
        %v1671 = vpop.f32.mrb[0].mxu0
        %1672 = vmatprep.mubr.f32.mxu0 0.0
        %1673 = vmatmul.mubr.f32.gmra.mrb[0].mxu0 %v1586
        %v1674 = vpop.f32.mrb[0].mxu0
        %v1675 = vadd.f32 %v1597, %v1674
        %v1676 = vpop.f32.mrb[0].mxu0
        %1677 = vmatprep.mubr.f32.mxu0 0.0
        %1678 = vmatmul.mubr.f32.gmra.mrb[0].mxu0 %v1587
        %v1679 = vpop.f32.mrb[0].mxu0
        %v1680 = vadd.f32 %v1597, %v1679
        %v1681 = vpop.f32.mrb[0].mxu0
        %1682 = vmatprep.mubr.f32.mxu0 0.0
        %1683 = vmatmul.mubr.f32.gmra.mrb[0].mxu0 %v1588
        %v1684 = vpop.f32.mrb[0].mxu0
        %v1685 = vadd.f32 %v1597, %v1684
        %v1686 = vpop.f32.mrb[0].mxu0
        %1687 = vmatprep.mubr.f32.mxu0 0.0
        %1688 = vmatmul.mubr.f32.gmra.mrb[0].mxu0 %v1589
        %v1689 = vpop.f32.mrb[0].mxu0
        %v1690 = vadd.f32 %v1597, %v1689
        %v1691 = vpop.f32.mrb[0].mxu0
        %1692 = vmatprep.mubr.f32.mxu0 0.0
        %1693 = vmatmul.mubr.f32.gmra.mrb[0].mxu0 %v1590
        %v1694 = vpop.f32.mrb[0].mxu0
        %v1695 = vadd.f32 %v1597, %v1694
        %v1696 = vpop.f32.mrb[0].mxu0
        %1697 = vmatprep.mubr.f32.mxu0 0.0
        %1698 = vmatmul.mubr.f32.gmra.mrb[0].mxu0 %v1591
        %v1699 = vpop.f32.mrb[0].mxu0
        %v1700 = vadd.f32 %v1597, %v1699
        %v1701 = vpop.f32.mrb[0].mxu0
        %1702 = vmatprep.mubr.f32.mxu0 0.0
        %1703 = vmatmul.mubr.f32.gmra.mrb[0].mxu0 %v1592
        %v1704 = vpop.f32.mrb[0].mxu0
        %v1705 = vadd.f32 %v1597, %v1704
        %v1706 = vpop.f32.mrb[0].mxu0
        %1707 = vmatprep.mubr.f32.mxu0 0.0
        %1708 = vmatmul.mubr.f32.gmra.mrb[0].mxu0 %v1593
        %v1709 = vpop.f32.mrb[0].mxu0
        %v1710 = vadd.f32 %v1597, %v1709
        %v1711 = vpop.f32.mrb[0].mxu0
        %1712 = vdwg.mxu0
        %v1713 = vadd.f32 %v1584, %v1665
        %v1714 = vadd.f32 %v1585, %v1670
        %v1715 = vadd.f32 %v1586, %v1675
        %v1716 = vadd.f32 %v1587, %v1680
        %v1717 = vadd.f32 %v1588, %v1685
        %v1718 = vadd.f32 %v1589, %v1690
        %v1719 = vadd.f32 %v1590, %v1695
        %v1720 = vadd.f32 %v1591, %v1700
        %v1721 = vadd.f32 %v1592, %v1705
        %v1722 = vadd.f32 %v1593, %v1710
        %v1733 = vcombine.high %v1713, %v1713
        %v1735 = vunpack.c.l.s4 1983009808
        %v1736 = vunpack.c.0.s8 %v1735
        %v1737 = vlaneseq
        %v1738 = vshrl.u32 %v1737, 7
        %v1739 = vsub.s32 %v1736, %v1738
        %v1740 = vrot.slane %v1713, %v1739
        %v1742 = vunpack.c.l.s4 1983009808
        %v1743 = vunpack.c.0.s8 %v1742
        %v1744 = vlaneseq
        %v1745 = vshrl.u32 %v1744, 7
        %v1746 = vsub.s32 %v1743, %v1745
        %v1747 = vrot.slane %v1733, %v1746
        %v1748 = vcombine.high %v1740, %v1740
        %v1749 = vcombine.high %v1747, %v1747
        %v1750 = vcombine.high %v1714, %v1714
        %v1752 = vunpack.c.l.s4 1983009808
        %v1753 = vunpack.c.0.s8 %v1752
        %v1754 = vlaneseq
        %v1755 = vshrl.u32 %v1754, 7
        %v1756 = vsub.s32 %v1753, %v1755
        %v1757 = vrot.slane %v1714, %v1756
        %v1759 = vunpack.c.l.s4 1983009808
        %v1760 = vunpack.c.0.s8 %v1759
        %v1761 = vlaneseq
        %v1762 = vshrl.u32 %v1761, 7
        %v1763 = vsub.s32 %v1760, %v1762
        %v1764 = vrot.slane %v1750, %v1763
        %v1765 = vcombine.high %v1757, %v1757
        %v1766 = vcombine.high %v1764, %v1764
        %v1767 = vcombine.high %v1715, %v1715
        %v1769 = vunpack.c.l.s4 1983009808
        %v1770 = vunpack.c.0.s8 %v1769
        %v1771 = vlaneseq
        %v1772 = vshrl.u32 %v1771, 7
        %v1773 = vsub.s32 %v1770, %v1772
        %v1774 = vrot.slane %v1715, %v1773
        %v1776 = vunpack.c.l.s4 1983009808
        %v1777 = vunpack.c.0.s8 %v1776
        %v1778 = vlaneseq
        %v1779 = vshrl.u32 %v1778, 7
        %v1780 = vsub.s32 %v1777, %v1779
        %v1781 = vrot.slane %v1767, %v1780
        %v1782 = vcombine.high %v1774, %v1774
        %v1783 = vcombine.high %v1781, %v1781
        %v1784 = vcombine.high %v1716, %v1716
        %v1786 = vunpack.c.l.s4 1983009808
        %v1787 = vunpack.c.0.s8 %v1786
        %v1788 = vlaneseq
        %v1789 = vshrl.u32 %v1788, 7
        %v1790 = vsub.s32 %v1787, %v1789
        %v1791 = vrot.slane %v1716, %v1790
        %v1793 = vunpack.c.l.s4 1983009808
        %v1794 = vunpack.c.0.s8 %v1793
        %v1795 = vlaneseq
        %v1796 = vshrl.u32 %v1795, 7
        %v1797 = vsub.s32 %v1794, %v1796
        %v1798 = vrot.slane %v1784, %v1797
        %v1799 = vcombine.high %v1791, %v1791
        %v1800 = vcombine.high %v1798, %v1798
        %v1801 = vcombine.high %v1717, %v1717
        %v1803 = vunpack.c.l.s4 1983009808
        %v1804 = vunpack.c.0.s8 %v1803
        %v1805 = vlaneseq
        %v1806 = vshrl.u32 %v1805, 7
        %v1807 = vsub.s32 %v1804, %v1806
        %v1808 = vrot.slane %v1717, %v1807
        %v1810 = vunpack.c.l.s4 1983009808
        %v1811 = vunpack.c.0.s8 %v1810
        %v1812 = vlaneseq
        %v1813 = vshrl.u32 %v1812, 7
        %v1814 = vsub.s32 %v1811, %v1813
        %v1815 = vrot.slane %v1801, %v1814
        %v1816 = vcombine.high %v1808, %v1808
        %v1817 = vcombine.high %v1815, %v1815
        %v1818 = vcombine.high %v1718, %v1718
        %v1820 = vunpack.c.l.s4 1983009808
        %v1821 = vunpack.c.0.s8 %v1820
        %v1822 = vlaneseq
        %v1823 = vshrl.u32 %v1822, 7
        %v1824 = vsub.s32 %v1821, %v1823
        %v1825 = vrot.slane %v1718, %v1824
        %v1827 = vunpack.c.l.s4 1983009808
        %v1828 = vunpack.c.0.s8 %v1827
        %v1829 = vlaneseq
        %v1830 = vshrl.u32 %v1829, 7
        %v1831 = vsub.s32 %v1828, %v1830
        %v1832 = vrot.slane %v1818, %v1831
        %v1833 = vcombine.high %v1825, %v1825
        %v1834 = vcombine.high %v1832, %v1832
        %v1835 = vcombine.high %v1719, %v1719
        %v1837 = vunpack.c.l.s4 1983009808
        %v1838 = vunpack.c.0.s8 %v1837
        %v1839 = vlaneseq
        %v1840 = vshrl.u32 %v1839, 7
        %v1841 = vsub.s32 %v1838, %v1840
        %v1842 = vrot.slane %v1719, %v1841
        %v1844 = vunpack.c.l.s4 1983009808
        %v1845 = vunpack.c.0.s8 %v1844
        %v1846 = vlaneseq
        %v1847 = vshrl.u32 %v1846, 7
        %v1848 = vsub.s32 %v1845, %v1847
        %v1849 = vrot.slane %v1835, %v1848
        %v1850 = vcombine.high %v1842, %v1842
        %v1851 = vcombine.high %v1849, %v1849
        %v1852 = vcombine.high %v1720, %v1720
        %v1854 = vunpack.c.l.s4 1983009808
        %v1855 = vunpack.c.0.s8 %v1854
        %v1856 = vlaneseq
        %v1857 = vshrl.u32 %v1856, 7
        %v1858 = vsub.s32 %v1855, %v1857
        %v1859 = vrot.slane %v1720, %v1858
        %v1861 = vunpack.c.l.s4 1983009808
        %v1862 = vunpack.c.0.s8 %v1861
        %v1863 = vlaneseq
        %v1864 = vshrl.u32 %v1863, 7
        %v1865 = vsub.s32 %v1862, %v1864
        %v1866 = vrot.slane %v1852, %v1865
        %v1867 = vcombine.high %v1859, %v1859
        %v1868 = vcombine.high %v1866, %v1866
        %v1869 = vcombine.high %v1721, %v1721
        %v1871 = vunpack.c.l.s4 1983009808
        %v1872 = vunpack.c.0.s8 %v1871
        %v1873 = vlaneseq
        %v1874 = vshrl.u32 %v1873, 7
        %v1875 = vsub.s32 %v1872, %v1874
        %v1876 = vrot.slane %v1721, %v1875
        %v1878 = vunpack.c.l.s4 1983009808
        %v1879 = vunpack.c.0.s8 %v1878
        %v1880 = vlaneseq
        %v1881 = vshrl.u32 %v1880, 7
        %v1882 = vsub.s32 %v1879, %v1881
        %v1883 = vrot.slane %v1869, %v1882
        %v1884 = vcombine.high %v1876, %v1876
        %v1885 = vcombine.high %v1883, %v1883
        %v1886 = vcombine.high %v1722, %v1722
        %v1888 = vunpack.c.l.s4 1983009808
        %v1889 = vunpack.c.0.s8 %v1888
        %v1890 = vlaneseq
        %v1891 = vshrl.u32 %v1890, 7
        %v1892 = vsub.s32 %v1889, %v1891
        %v1893 = vrot.slane %v1722, %v1892
        %v1895 = vunpack.c.l.s4 1983009808
        %v1896 = vunpack.c.0.s8 %v1895
        %v1897 = vlaneseq
        %v1898 = vshrl.u32 %v1897, 7
        %v1899 = vsub.s32 %v1896, %v1898
        %v1900 = vrot.slane %v1886, %v1899
        %v1901 = vcombine.high %v1893, %v1893
        %v1902 = vcombine.high %v1900, %v1900
        %v1945 = vcombine.high %v383, %v383
        %v1947 = vunpack.c.l.s4 1983009808
        %v1948 = vunpack.c.0.s8 %v1947
        %v1949 = vlaneseq
        %v1950 = vshrl.u32 %v1949, 7
        %v1951 = vsub.s32 %v1948, %v1950
        %v1952 = vrot.slane %v383, %v1951
        %v1954 = vunpack.c.l.s4 1983009808
        %v1955 = vunpack.c.0.s8 %v1954
        %v1956 = vlaneseq
        %v1957 = vshrl.u32 %v1956, 7
        %v1958 = vsub.s32 %v1955, %v1957
        %v1959 = vrot.slane %v1945, %v1958
        %v1960 = vcombine.high %v1952, %v1952
        %v1961 = vcombine.high %v1959, %v1959
        %v1963 = vunpack.c.l.s4 1983009808
        %v1964 = vunpack.c.0.s8 %v1963
        %v1965 = vlaneseq
        %v1966 = vshrl.u32 %v1965, 7
        %v1967 = vsub.s32 %v1964, %v1966
        %v1968 = vrot.slane %v384, %v1967
        %v1974 = vmul.f32 %v1740, %v1952
        %v1975 = vmul.f32 %v1748, %v1960
        %v1976 = vmul.f32 %v1747, %v1959
        %v1977 = vmul.f32 %v1749, %v1961
        %v1978 = vmul.f32 %v1757, %v1968
        %v1979 = vmul.f32 %v1765, %v1952
        %v1980 = vmul.f32 %v1764, %v1960
        %v1981 = vmul.f32 %v1766, %v1959
        %v1982 = vmul.f32 %v1774, %v1961
        %v1983 = vmul.f32 %v1782, %v1968
        %v1984 = vmul.f32 %v1781, %v1952
        %v1985 = vmul.f32 %v1783, %v1960
        %v1986 = vmul.f32 %v1791, %v1959
        %v1987 = vmul.f32 %v1799, %v1961
        %v1988 = vmul.f32 %v1798, %v1968
        %v1989 = vmul.f32 %v1800, %v1952
        %v1990 = vmul.f32 %v1808, %v1960
        %v1991 = vmul.f32 %v1816, %v1959
        %v1992 = vmul.f32 %v1815, %v1961
        %v1993 = vmul.f32 %v1817, %v1968
        %v1994 = vmul.f32 %v1825, %v1952
        %v1995 = vmul.f32 %v1833, %v1960
        %v1996 = vmul.f32 %v1832, %v1959
        %v1997 = vmul.f32 %v1834, %v1961
        %v1998 = vmul.f32 %v1842, %v1968
        %v1999 = vmul.f32 %v1850, %v1952
        %v2000 = vmul.f32 %v1849, %v1960
        %v2001 = vmul.f32 %v1851, %v1959
        %v2002 = vmul.f32 %v1859, %v1961
        %v2003 = vmul.f32 %v1867, %v1968
        %v2004 = vmul.f32 %v1866, %v1952
        %v2005 = vmul.f32 %v1868, %v1960
        %v2006 = vmul.f32 %v1876, %v1959
        %v2007 = vmul.f32 %v1884, %v1961
        %v2008 = vmul.f32 %v1883, %v1968
        %v2009 = vmul.f32 %v1885, %v1952
        %v2010 = vmul.f32 %v1893, %v1960
        %v2011 = vmul.f32 %v1901, %v1959
        %v2012 = vmul.f32 %v1900, %v1961
        %v2013 = vmul.f32 %v1902, %v1968
        %v2054 = vcombine.low %v1974, %v1975
        %v2055 = vcombine.low %v1976, %v1977
        %v2057 = vunpack.c.l.s4 1983009808
        %v2058 = vunpack.c.0.s8 %v2057
        %v2059 = vlaneseq
        %v2060 = vshrl.u32 %v2059, 7
        %v2061 = vsub.s32 %v2058, %v2060
        %v2062 = vrot.slane %v2054, %v2061
        %v2064 = vunpack.c.l.s4 1983009808
        %v2065 = vunpack.c.0.s8 %v2064
        %v2066 = vlaneseq
        %v2067 = vshrl.u32 %v2066, 7
        %v2068 = vsub.s32 %v2065, %v2067
        %v2069 = vrot.slane %v2055, %v2068
        %v2070 = vcombine.low %v2062, %v2069
        %v2072 = vunpack.c.l.s4 1983009808
        %v2073 = vunpack.c.0.s8 %v2072
        %v2074 = vlaneseq
        %v2075 = vshrl.u32 %v2074, 7
        %v2076 = vsub.s32 %v2073, %v2075
        %v2077 = vrot.slane %v1978, %v2076
        %v2078 = vcombine.low %v1979, %v1980
        %v2079 = vcombine.low %v1981, %v1982
        %v2081 = vunpack.c.l.s4 1983009808
        %v2082 = vunpack.c.0.s8 %v2081
        %v2083 = vlaneseq
        %v2084 = vshrl.u32 %v2083, 7
        %v2085 = vsub.s32 %v2082, %v2084
        %v2086 = vrot.slane %v2078, %v2085
        %v2088 = vunpack.c.l.s4 1983009808
        %v2089 = vunpack.c.0.s8 %v2088
        %v2090 = vlaneseq
        %v2091 = vshrl.u32 %v2090, 7
        %v2092 = vsub.s32 %v2089, %v2091
        %v2093 = vrot.slane %v2079, %v2092
        %v2094 = vcombine.low %v2086, %v2093
        %v2096 = vunpack.c.l.s4 1983009808
        %v2097 = vunpack.c.0.s8 %v2096
        %v2098 = vlaneseq
        %v2099 = vshrl.u32 %v2098, 7
        %v2100 = vsub.s32 %v2097, %v2099
        %v2101 = vrot.slane %v1983, %v2100
        %v2102 = vcombine.low %v1984, %v1985
        %v2103 = vcombine.low %v1986, %v1987
        %v2105 = vunpack.c.l.s4 1983009808
        %v2106 = vunpack.c.0.s8 %v2105
        %v2107 = vlaneseq
        %v2108 = vshrl.u32 %v2107, 7
        %v2109 = vsub.s32 %v2106, %v2108
        %v2110 = vrot.slane %v2102, %v2109
        %v2112 = vunpack.c.l.s4 1983009808
        %v2113 = vunpack.c.0.s8 %v2112
        %v2114 = vlaneseq
        %v2115 = vshrl.u32 %v2114, 7
        %v2116 = vsub.s32 %v2113, %v2115
        %v2117 = vrot.slane %v2103, %v2116
        %v2118 = vcombine.low %v2110, %v2117
        %v2120 = vunpack.c.l.s4 1983009808
        %v2121 = vunpack.c.0.s8 %v2120
        %v2122 = vlaneseq
        %v2123 = vshrl.u32 %v2122, 7
        %v2124 = vsub.s32 %v2121, %v2123
        %v2125 = vrot.slane %v1988, %v2124
        %v2126 = vcombine.low %v1989, %v1990
        %v2127 = vcombine.low %v1991, %v1992
        %v2129 = vunpack.c.l.s4 1983009808
        %v2130 = vunpack.c.0.s8 %v2129
        %v2131 = vlaneseq
        %v2132 = vshrl.u32 %v2131, 7
        %v2133 = vsub.s32 %v2130, %v2132
        %v2134 = vrot.slane %v2126, %v2133
        %v2136 = vunpack.c.l.s4 1983009808
        %v2137 = vunpack.c.0.s8 %v2136
        %v2138 = vlaneseq
        %v2139 = vshrl.u32 %v2138, 7
        %v2140 = vsub.s32 %v2137, %v2139
        %v2141 = vrot.slane %v2127, %v2140
        %v2142 = vcombine.low %v2134, %v2141
        %v2144 = vunpack.c.l.s4 1983009808
        %v2145 = vunpack.c.0.s8 %v2144
        %v2146 = vlaneseq
        %v2147 = vshrl.u32 %v2146, 7
        %v2148 = vsub.s32 %v2145, %v2147
        %v2149 = vrot.slane %v1993, %v2148
        %v2150 = vcombine.low %v1994, %v1995
        %v2151 = vcombine.low %v1996, %v1997
        %v2153 = vunpack.c.l.s4 1983009808
        %v2154 = vunpack.c.0.s8 %v2153
        %v2155 = vlaneseq
        %v2156 = vshrl.u32 %v2155, 7
        %v2157 = vsub.s32 %v2154, %v2156
        %v2158 = vrot.slane %v2150, %v2157
        %v2160 = vunpack.c.l.s4 1983009808
        %v2161 = vunpack.c.0.s8 %v2160
        %v2162 = vlaneseq
        %v2163 = vshrl.u32 %v2162, 7
        %v2164 = vsub.s32 %v2161, %v2163
        %v2165 = vrot.slane %v2151, %v2164
        %v2166 = vcombine.low %v2158, %v2165
        %v2168 = vunpack.c.l.s4 1983009808
        %v2169 = vunpack.c.0.s8 %v2168
        %v2170 = vlaneseq
        %v2171 = vshrl.u32 %v2170, 7
        %v2172 = vsub.s32 %v2169, %v2171
        %v2173 = vrot.slane %v1998, %v2172
        %v2174 = vcombine.low %v1999, %v2000
        %v2175 = vcombine.low %v2001, %v2002
        %v2177 = vunpack.c.l.s4 1983009808
        %v2178 = vunpack.c.0.s8 %v2177
        %v2179 = vlaneseq
        %v2180 = vshrl.u32 %v2179, 7
        %v2181 = vsub.s32 %v2178, %v2180
        %v2182 = vrot.slane %v2174, %v2181
        %v2184 = vunpack.c.l.s4 1983009808
        %v2185 = vunpack.c.0.s8 %v2184
        %v2186 = vlaneseq
        %v2187 = vshrl.u32 %v2186, 7
        %v2188 = vsub.s32 %v2185, %v2187
        %v2189 = vrot.slane %v2175, %v2188
        %v2190 = vcombine.low %v2182, %v2189
        %v2192 = vunpack.c.l.s4 1983009808
        %v2193 = vunpack.c.0.s8 %v2192
        %v2194 = vlaneseq
        %v2195 = vshrl.u32 %v2194, 7
        %v2196 = vsub.s32 %v2193, %v2195
        %v2197 = vrot.slane %v2003, %v2196
        %v2198 = vcombine.low %v2004, %v2005
        %v2199 = vcombine.low %v2006, %v2007
        %v2201 = vunpack.c.l.s4 1983009808
        %v2202 = vunpack.c.0.s8 %v2201
        %v2203 = vlaneseq
        %v2204 = vshrl.u32 %v2203, 7
        %v2205 = vsub.s32 %v2202, %v2204
        %v2206 = vrot.slane %v2198, %v2205
        %v2208 = vunpack.c.l.s4 1983009808
        %v2209 = vunpack.c.0.s8 %v2208
        %v2210 = vlaneseq
        %v2211 = vshrl.u32 %v2210, 7
        %v2212 = vsub.s32 %v2209, %v2211
        %v2213 = vrot.slane %v2199, %v2212
        %v2214 = vcombine.low %v2206, %v2213
        %v2216 = vunpack.c.l.s4 1983009808
        %v2217 = vunpack.c.0.s8 %v2216
        %v2218 = vlaneseq
        %v2219 = vshrl.u32 %v2218, 7
        %v2220 = vsub.s32 %v2217, %v2219
        %v2221 = vrot.slane %v2008, %v2220
        %v2222 = vcombine.low %v2009, %v2010
        %v2223 = vcombine.low %v2011, %v2012
        %v2225 = vunpack.c.l.s4 1983009808
        %v2226 = vunpack.c.0.s8 %v2225
        %v2227 = vlaneseq
        %v2228 = vshrl.u32 %v2227, 7
        %v2229 = vsub.s32 %v2226, %v2228
        %v2230 = vrot.slane %v2222, %v2229
        %v2232 = vunpack.c.l.s4 1983009808
        %v2233 = vunpack.c.0.s8 %v2232
        %v2234 = vlaneseq
        %v2235 = vshrl.u32 %v2234, 7
        %v2236 = vsub.s32 %v2233, %v2235
        %v2237 = vrot.slane %v2223, %v2236
        %v2238 = vcombine.low %v2230, %v2237
        %v2240 = vunpack.c.l.s4 1983009808
        %v2241 = vunpack.c.0.s8 %v2240
        %v2242 = vlaneseq
        %v2243 = vshrl.u32 %v2242, 7
        %v2244 = vsub.s32 %v2241, %v2243
        %v2245 = vrot.slane %v2013, %v2244
        %vm2262 = vcmask 1041408
        %v2263 = vsel %vm2262, %v2077, 0.0
        %v2264 = vadd.f32 %v2070, %v2263
        %v2265 = vrot.slane %v2264, 4
        %v2266 = vadd.f32 %v2264, %v2265
        %v2267 = vrot.slane %v2266, 2
        %v2268 = vadd.f32 %v2266, %v2267
        %v2269 = vrot.slane %v2268, 1
        %v2270 = vadd.f32 %v2268, %v2269
        %v2271 = vsel %vm2262, %v2101, 0.0
        %v2272 = vadd.f32 %v2094, %v2271
        %v2273 = vrot.slane %v2272, 4
        %v2274 = vadd.f32 %v2272, %v2273
        %v2275 = vrot.slane %v2274, 2
        %v2276 = vadd.f32 %v2274, %v2275
        %v2277 = vrot.slane %v2276, 1
        %v2278 = vadd.f32 %v2276, %v2277
        %v2279 = vsel %vm2262, %v2125, 0.0
        %v2280 = vadd.f32 %v2118, %v2279
        %v2281 = vrot.slane %v2280, 4
        %v2282 = vadd.f32 %v2280, %v2281
        %v2283 = vrot.slane %v2282, 2
        %v2284 = vadd.f32 %v2282, %v2283
        %v2285 = vrot.slane %v2284, 1
        %v2286 = vadd.f32 %v2284, %v2285
        %v2287 = vsel %vm2262, %v2149, 0.0
        %v2288 = vadd.f32 %v2142, %v2287
        %v2289 = vrot.slane %v2288, 4
        %v2290 = vadd.f32 %v2288, %v2289
        %v2291 = vrot.slane %v2290, 2
        %v2292 = vadd.f32 %v2290, %v2291
        %v2293 = vrot.slane %v2292, 1
        %v2294 = vadd.f32 %v2292, %v2293
        %v2295 = vsel %vm2262, %v2173, 0.0
        %v2296 = vadd.f32 %v2166, %v2295
        %v2297 = vrot.slane %v2296, 4
        %v2298 = vadd.f32 %v2296, %v2297
        %v2299 = vrot.slane %v2298, 2
        %v2300 = vadd.f32 %v2298, %v2299
        %v2301 = vrot.slane %v2300, 1
        %v2302 = vadd.f32 %v2300, %v2301
        %v2303 = vsel %vm2262, %v2197, 0.0
        %v2304 = vadd.f32 %v2190, %v2303
        %v2305 = vrot.slane %v2304, 4
        %v2306 = vadd.f32 %v2304, %v2305
        %v2307 = vrot.slane %v2306, 2
        %v2308 = vadd.f32 %v2306, %v2307
        %v2309 = vrot.slane %v2308, 1
        %v2310 = vadd.f32 %v2308, %v2309
        %v2311 = vsel %vm2262, %v2221, 0.0
        %v2312 = vadd.f32 %v2214, %v2311
        %v2313 = vrot.slane %v2312, 4
        %v2314 = vadd.f32 %v2312, %v2313
        %v2315 = vrot.slane %v2314, 2
        %v2316 = vadd.f32 %v2314, %v2315
        %v2317 = vrot.slane %v2316, 1
        %v2318 = vadd.f32 %v2316, %v2317
        %v2319 = vsel %vm2262, %v2245, 0.0
        %v2320 = vadd.f32 %v2238, %v2319
        %v2321 = vrot.slane %v2320, 4
        %v2322 = vadd.f32 %v2320, %v2321
        %v2323 = vrot.slane %v2322, 2
        %v2324 = vadd.f32 %v2322, %v2323
        %v2325 = vrot.slane %v2324, 1
        %v2326 = vadd.f32 %v2324, %v2325
        %v2327 = vlaneseq
        %v2328 = vshrl.u32 %v2327, 7
        %v2329 = vsub.s32 4, %v2328
        %v2330 = vrot.slane %v382, %v2329
        %v2331 = vadd.f32 %v2270, %v2330
        %v2332 = vadd.f32 %v2278, %v2330
        %v2333 = vadd.f32 %v2286, %v2330
        %v2334 = vadd.f32 %v2294, %v2330
        %v2335 = vadd.f32 %v2302, %v2330
        %v2336 = vadd.f32 %v2310, %v2330
        %v2337 = vadd.f32 %v2318, %v2330
        %v2338 = vadd.f32 %v2326, %v2330
        %v2339 = vxor.u32 %v2331, 2147483648
        %v2340 = vxor.u32 %v2332, 2147483648
        %v2341 = vxor.u32 %v2333, 2147483648
        %v2342 = vxor.u32 %v2334, 2147483648
        %v2343 = vxor.u32 %v2335, 2147483648
        %v2344 = vxor.u32 %v2336, 2147483648
        %v2345 = vxor.u32 %v2337, 2147483648
        %v2346 = vxor.u32 %v2338, 2147483648
        %v2347 = vmul.f32 %v2339, 1.442695
        %v2348 = vpow.pop %v2347
        %v2349 = vmul.f32 %v2340, 1.442695
        %v2350 = vpow.pop %v2349
        %v2351 = vmul.f32 %v2341, 1.442695
        %v2352 = vpow.pop %v2351
        %v2353 = vmul.f32 %v2342, 1.442695
        %v2354 = vpow.pop %v2353
        %v2355 = vmul.f32 %v2343, 1.442695
        %v2356 = vpow.pop %v2355
        %v2357 = vmul.f32 %v2344, 1.442695
        %v2358 = vpow.pop %v2357
        %v2359 = vmul.f32 %v2345, 1.442695
        %v2360 = vpow.pop %v2359
        %v2361 = vmul.f32 %v2346, 1.442695
        %v2362 = vpow.pop %v2361
        %v2363 = vadd.f32 %v2348, 1.0
        %v2364 = vadd.f32 %v2350, 1.0
        %v2365 = vadd.f32 %v2352, 1.0
        %v2366 = vadd.f32 %v2354, 1.0
        %v2367 = vadd.f32 %v2356, 1.0
        %v2368 = vadd.f32 %v2358, 1.0
        %v2369 = vadd.f32 %v2360, 1.0
        %v2370 = vadd.f32 %v2362, 1.0
        %v2371 = vrcp.pop %v2363
        %v2372 = vmul.f32 1.0, %v2371
        %v2373 = vrcp.pop %v2364
        %v2374 = vmul.f32 1.0, %v2373
        %v2375 = vrcp.pop %v2365
        %v2376 = vmul.f32 1.0, %v2375
        %v2377 = vrcp.pop %v2366
        %v2378 = vmul.f32 1.0, %v2377
        %v2379 = vrcp.pop %v2367
        %v2380 = vmul.f32 1.0, %v2379
        %v2381 = vrcp.pop %v2368
        %v2382 = vmul.f32 1.0, %v2381
        %v2383 = vrcp.pop %v2369
        %v2384 = vmul.f32 1.0, %v2383
        %v2385 = vrcp.pop %v2370
        %v2386 = vmul.f32 1.0, %v2385
        %v2387 = vlaneseq
        %v2388 = vshrl.u32 %v2387, 7
        %v2389 = vsub.s32 0, %v2388
        %v2390 = vrot.slane %v2372, %v2389
        %v2391 = vlaneseq
        %v2392 = vshrl.u32 %v2391, 7
        %v2393 = vsub.s32 0, %v2392
        %v2394 = vrot.slane %v2374, %v2393
        %v2395 = vlaneseq
        %v2396 = vshrl.u32 %v2395, 7
        %v2397 = vsub.s32 0, %v2396
        %v2398 = vrot.slane %v2376, %v2397
        %v2399 = vlaneseq
        %v2400 = vshrl.u32 %v2399, 7
        %v2401 = vsub.s32 0, %v2400
        %v2402 = vrot.slane %v2378, %v2401
        %v2403 = vlaneseq
        %v2404 = vshrl.u32 %v2403, 7
        %v2405 = vsub.s32 0, %v2404
        %v2406 = vrot.slane %v2380, %v2405
        %v2407 = vlaneseq
        %v2408 = vshrl.u32 %v2407, 7
        %v2409 = vsub.s32 0, %v2408
        %v2410 = vrot.slane %v2382, %v2409
        %v2411 = vlaneseq
        %v2412 = vshrl.u32 %v2411, 7
        %v2413 = vsub.s32 0, %v2412
        %v2414 = vrot.slane %v2384, %v2413
        %v2415 = vlaneseq
        %v2416 = vshrl.u32 %v2415, 7
        %v2417 = vsub.s32 0, %v2416
        %v2418 = vrot.slane %v2386, %v2417
        %v2419 = vadd.f32 %v190, %v2390
        %v2420 = vadd.f32 %v191, %v2390
        %v2421 = vadd.f32 %v192, %v2394
        %v2422 = vadd.f32 %v193, %v2394
        %v2423 = vadd.f32 %v194, %v2398
        %v2424 = vadd.f32 %v195, %v2398
        %v2425 = vadd.f32 %v196, %v2402
        %v2426 = vadd.f32 %v197, %v2402
        %v2427 = vadd.f32 %v198, %v2406
        %v2428 = vadd.f32 %v199, %v2406
        %v2429 = vadd.f32 %v200, %v2410
        %v2430 = vadd.f32 %v201, %v2410
        %v2431 = vadd.f32 %v202, %v2414
        %v2432 = vadd.f32 %v203, %v2414
        %v2433 = vadd.f32 %v204, %v2418
        %v2434 = vadd.f32 %v205, %v2418
        %v2451 = vrot.slane %v2419, 6
        %v2452 = vrot.slane %v2420, 6
        %v2453 = vsel %vm2262, %v2451, %v2452
        %v2454 = vrot.slane %v2421, 6
        %v2455 = vrot.slane %v2422, 6
        %v2456 = vsel %vm2262, %v2454, %v2455
        %v2457 = vrot.slane %v2423, 6
        %v2458 = vrot.slane %v2424, 6
        %v2459 = vsel %vm2262, %v2457, %v2458
        %v2460 = vrot.slane %v2425, 6
        %v2461 = vrot.slane %v2426, 6
        %v2462 = vsel %vm2262, %v2460, %v2461
        %v2463 = vrot.slane %v2427, 6
        %v2464 = vrot.slane %v2428, 6
        %v2465 = vsel %vm2262, %v2463, %v2464
        %v2466 = vrot.slane %v2429, 6
        %v2467 = vrot.slane %v2430, 6
        %v2468 = vsel %vm2262, %v2466, %v2467
        %v2469 = vrot.slane %v2431, 6
        %v2470 = vrot.slane %v2432, 6
        %v2471 = vsel %vm2262, %v2469, %v2470
        %v2472 = vrot.slane %v2433, 6
        %v2473 = vrot.slane %v2434, 6
        %v2474 = vsel %vm2262, %v2472, %v2473
        %v2483 = vsel %vm2262, 0.0, %v2451
        %v2484 = vsel %vm2262, 0.0, %v2454
        %v2485 = vsel %vm2262, 0.0, %v2457
        %v2486 = vsel %vm2262, 0.0, %v2460
        %v2487 = vsel %vm2262, 0.0, %v2463
        %v2488 = vsel %vm2262, 0.0, %v2466
        %v2489 = vsel %vm2262, 0.0, %v2469
        %v2490 = vsel %vm2262, 0.0, %v2472
        %v2499 = vrot.slane %v2483, 1
        %v2500 = vrot.slane %v2453, 1
        %v2501 = vsel %vm451, %v2499, %v2500
        %v2502 = vrot.slane %v2484, 1
        %v2503 = vrot.slane %v2456, 1
        %v2504 = vsel %vm451, %v2502, %v2503
        %v2505 = vrot.slane %v2485, 1
        %v2506 = vrot.slane %v2459, 1
        %v2507 = vsel %vm451, %v2505, %v2506
        %v2508 = vrot.slane %v2486, 1
        %v2509 = vrot.slane %v2462, 1
        %v2510 = vsel %vm451, %v2508, %v2509
        %v2511 = vrot.slane %v2487, 1
        %v2512 = vrot.slane %v2465, 1
        %v2513 = vsel %vm451, %v2511, %v2512
        %v2514 = vrot.slane %v2488, 1
        %v2515 = vrot.slane %v2468, 1
        %v2516 = vsel %vm451, %v2514, %v2515
        %v2517 = vrot.slane %v2489, 1
        %v2518 = vrot.slane %v2471, 1
        %v2519 = vsel %vm451, %v2517, %v2518
        %v2520 = vrot.slane %v2490, 1
        %v2521 = vrot.slane %v2474, 1
        %v2522 = vsel %vm451, %v2520, %v2521
        %v2523 = vrot.slane %v2483, 2
        %v2524 = vrot.slane %v2453, 2
        %v2525 = vsel %vm476, %v2523, %v2524
        %v2526 = vrot.slane %v2484, 2
        %v2527 = vrot.slane %v2456, 2
        %v2528 = vsel %vm476, %v2526, %v2527
        %v2529 = vrot.slane %v2485, 2
        %v2530 = vrot.slane %v2459, 2
        %v2531 = vsel %vm476, %v2529, %v2530
        %v2532 = vrot.slane %v2486, 2
        %v2533 = vrot.slane %v2462, 2
        %v2534 = vsel %vm476, %v2532, %v2533
        %v2535 = vrot.slane %v2487, 2
        %v2536 = vrot.slane %v2465, 2
        %v2537 = vsel %vm476, %v2535, %v2536
        %v2538 = vrot.slane %v2488, 2
        %v2539 = vrot.slane %v2468, 2
        %v2540 = vsel %vm476, %v2538, %v2539
        %v2541 = vrot.slane %v2489, 2
        %v2542 = vrot.slane %v2471, 2
        %v2543 = vsel %vm476, %v2541, %v2542
        %v2544 = vrot.slane %v2490, 2
        %v2545 = vrot.slane %v2474, 2
        %v2546 = vsel %vm476, %v2544, %v2545
        %v2547 = vcombine.low %v2483, %v2501
        %v2548 = vcombine.high %v2483, %v2501
        %v2549 = vcombine.high %v2525, %v2525
        %v2551 = vunpack.c.l.s4 1983009808
        %v2552 = vunpack.c.0.s8 %v2551
        %v2553 = vlaneseq
        %v2554 = vshrl.u32 %v2553, 7
        %v2555 = vsub.s32 %v2552, %v2554
        %v2556 = vrot.slane %v2547, %v2555
        %v2558 = vunpack.c.l.s4 1983009808
        %v2559 = vunpack.c.0.s8 %v2558
        %v2560 = vlaneseq
        %v2561 = vshrl.u32 %v2560, 7
        %v2562 = vsub.s32 %v2559, %v2561
        %v2563 = vrot.slane %v2548, %v2562
        %v2565 = vunpack.c.l.s4 1983009808
        %v2566 = vunpack.c.0.s8 %v2565
        %v2567 = vlaneseq
        %v2568 = vshrl.u32 %v2567, 7
        %v2569 = vsub.s32 %v2566, %v2568
        %v2570 = vrot.slane %v2525, %v2569
        %v2572 = vunpack.c.l.s4 1983009808
        %v2573 = vunpack.c.0.s8 %v2572
        %v2574 = vlaneseq
        %v2575 = vshrl.u32 %v2574, 7
        %v2576 = vsub.s32 %v2573, %v2575
        %v2577 = vrot.slane %v2549, %v2576
        %v2578 = vcombine.low %v2556, %v2570
        %v2579 = vcombine.high %v2556, %v2570
        %v2580 = vcombine.low %v2563, %v2577
        %v2581 = vcombine.high %v2563, %v2577
        %v2582 = vcombine.low %v2453, %v2500
        %v2584 = vunpack.c.l.s4 1983009808
        %v2585 = vunpack.c.0.s8 %v2584
        %v2586 = vlaneseq
        %v2587 = vshrl.u32 %v2586, 7
        %v2588 = vsub.s32 %v2585, %v2587
        %v2589 = vrot.slane %v2582, %v2588
        %v2591 = vunpack.c.l.s4 1983009808
        %v2592 = vunpack.c.0.s8 %v2591
        %v2593 = vlaneseq
        %v2594 = vshrl.u32 %v2593, 7
        %v2595 = vsub.s32 %v2592, %v2594
        %v2596 = vrot.slane %v2524, %v2595
        %v2597 = vcombine.low %v2589, %v2596
        %v2598 = vcombine.low %v2484, %v2504
        %v2599 = vcombine.high %v2484, %v2504
        %v2600 = vcombine.high %v2528, %v2528
        %v2602 = vunpack.c.l.s4 1983009808
        %v2603 = vunpack.c.0.s8 %v2602
        %v2604 = vlaneseq
        %v2605 = vshrl.u32 %v2604, 7
        %v2606 = vsub.s32 %v2603, %v2605
        %v2607 = vrot.slane %v2598, %v2606
        %v2609 = vunpack.c.l.s4 1983009808
        %v2610 = vunpack.c.0.s8 %v2609
        %v2611 = vlaneseq
        %v2612 = vshrl.u32 %v2611, 7
        %v2613 = vsub.s32 %v2610, %v2612
        %v2614 = vrot.slane %v2599, %v2613
        %v2616 = vunpack.c.l.s4 1983009808
        %v2617 = vunpack.c.0.s8 %v2616
        %v2618 = vlaneseq
        %v2619 = vshrl.u32 %v2618, 7
        %v2620 = vsub.s32 %v2617, %v2619
        %v2621 = vrot.slane %v2528, %v2620
        %v2623 = vunpack.c.l.s4 1983009808
        %v2624 = vunpack.c.0.s8 %v2623
        %v2625 = vlaneseq
        %v2626 = vshrl.u32 %v2625, 7
        %v2627 = vsub.s32 %v2624, %v2626
        %v2628 = vrot.slane %v2600, %v2627
        %v2629 = vcombine.low %v2607, %v2621
        %v2630 = vcombine.high %v2607, %v2621
        %v2631 = vcombine.low %v2614, %v2628
        %v2632 = vcombine.high %v2614, %v2628
        %v2633 = vcombine.low %v2456, %v2503
        %v2635 = vunpack.c.l.s4 1983009808
        %v2636 = vunpack.c.0.s8 %v2635
        %v2637 = vlaneseq
        %v2638 = vshrl.u32 %v2637, 7
        %v2639 = vsub.s32 %v2636, %v2638
        %v2640 = vrot.slane %v2633, %v2639
        %v2642 = vunpack.c.l.s4 1983009808
        %v2643 = vunpack.c.0.s8 %v2642
        %v2644 = vlaneseq
        %v2645 = vshrl.u32 %v2644, 7
        %v2646 = vsub.s32 %v2643, %v2645
        %v2647 = vrot.slane %v2527, %v2646
        %v2648 = vcombine.low %v2640, %v2647
        %v2649 = vcombine.low %v2485, %v2507
        %v2650 = vcombine.high %v2485, %v2507
        %v2651 = vcombine.high %v2531, %v2531
        %v2653 = vunpack.c.l.s4 1983009808
        %v2654 = vunpack.c.0.s8 %v2653
        %v2655 = vlaneseq
        %v2656 = vshrl.u32 %v2655, 7
        %v2657 = vsub.s32 %v2654, %v2656
        %v2658 = vrot.slane %v2649, %v2657
        %v2660 = vunpack.c.l.s4 1983009808
        %v2661 = vunpack.c.0.s8 %v2660
        %v2662 = vlaneseq
        %v2663 = vshrl.u32 %v2662, 7
        %v2664 = vsub.s32 %v2661, %v2663
        %v2665 = vrot.slane %v2650, %v2664
        %v2667 = vunpack.c.l.s4 1983009808
        %v2668 = vunpack.c.0.s8 %v2667
        %v2669 = vlaneseq
        %v2670 = vshrl.u32 %v2669, 7
        %v2671 = vsub.s32 %v2668, %v2670
        %v2672 = vrot.slane %v2531, %v2671
        %v2674 = vunpack.c.l.s4 1983009808
        %v2675 = vunpack.c.0.s8 %v2674
        %v2676 = vlaneseq
        %v2677 = vshrl.u32 %v2676, 7
        %v2678 = vsub.s32 %v2675, %v2677
        %v2679 = vrot.slane %v2651, %v2678
        %v2680 = vcombine.low %v2658, %v2672
        %v2681 = vcombine.high %v2658, %v2672
        %v2682 = vcombine.low %v2665, %v2679
        %v2683 = vcombine.high %v2665, %v2679
        %v2684 = vcombine.low %v2459, %v2506
        %v2686 = vunpack.c.l.s4 1983009808
        %v2687 = vunpack.c.0.s8 %v2686
        %v2688 = vlaneseq
        %v2689 = vshrl.u32 %v2688, 7
        %v2690 = vsub.s32 %v2687, %v2689
        %v2691 = vrot.slane %v2684, %v2690
        %v2693 = vunpack.c.l.s4 1983009808
        %v2694 = vunpack.c.0.s8 %v2693
        %v2695 = vlaneseq
        %v2696 = vshrl.u32 %v2695, 7
        %v2697 = vsub.s32 %v2694, %v2696
        %v2698 = vrot.slane %v2530, %v2697
        %v2699 = vcombine.low %v2691, %v2698
        %v2700 = vcombine.low %v2486, %v2510
        %v2701 = vcombine.high %v2486, %v2510
        %v2702 = vcombine.high %v2534, %v2534
        %v2704 = vunpack.c.l.s4 1983009808
        %v2705 = vunpack.c.0.s8 %v2704
        %v2706 = vlaneseq
        %v2707 = vshrl.u32 %v2706, 7
        %v2708 = vsub.s32 %v2705, %v2707
        %v2709 = vrot.slane %v2700, %v2708
        %v2711 = vunpack.c.l.s4 1983009808
        %v2712 = vunpack.c.0.s8 %v2711
        %v2713 = vlaneseq
        %v2714 = vshrl.u32 %v2713, 7
        %v2715 = vsub.s32 %v2712, %v2714
        %v2716 = vrot.slane %v2701, %v2715
        %v2718 = vunpack.c.l.s4 1983009808
        %v2719 = vunpack.c.0.s8 %v2718
        %v2720 = vlaneseq
        %v2721 = vshrl.u32 %v2720, 7
        %v2722 = vsub.s32 %v2719, %v2721
        %v2723 = vrot.slane %v2534, %v2722
        %v2725 = vunpack.c.l.s4 1983009808
        %v2726 = vunpack.c.0.s8 %v2725
        %v2727 = vlaneseq
        %v2728 = vshrl.u32 %v2727, 7
        %v2729 = vsub.s32 %v2726, %v2728
        %v2730 = vrot.slane %v2702, %v2729
        %v2731 = vcombine.low %v2709, %v2723
        %v2732 = vcombine.high %v2709, %v2723
        %v2733 = vcombine.low %v2716, %v2730
        %v2734 = vcombine.high %v2716, %v2730
        %v2735 = vcombine.low %v2462, %v2509
        %v2737 = vunpack.c.l.s4 1983009808
        %v2738 = vunpack.c.0.s8 %v2737
        %v2739 = vlaneseq
        %v2740 = vshrl.u32 %v2739, 7
        %v2741 = vsub.s32 %v2738, %v2740
        %v2742 = vrot.slane %v2735, %v2741
        %v2744 = vunpack.c.l.s4 1983009808
        %v2745 = vunpack.c.0.s8 %v2744
        %v2746 = vlaneseq
        %v2747 = vshrl.u32 %v2746, 7
        %v2748 = vsub.s32 %v2745, %v2747
        %v2749 = vrot.slane %v2533, %v2748
        %v2750 = vcombine.low %v2742, %v2749
        %v2751 = vcombine.low %v2487, %v2513
        %v2752 = vcombine.high %v2487, %v2513
        %v2753 = vcombine.high %v2537, %v2537
        %v2755 = vunpack.c.l.s4 1983009808
        %v2756 = vunpack.c.0.s8 %v2755
        %v2757 = vlaneseq
        %v2758 = vshrl.u32 %v2757, 7
        %v2759 = vsub.s32 %v2756, %v2758
        %v2760 = vrot.slane %v2751, %v2759
        %v2762 = vunpack.c.l.s4 1983009808
        %v2763 = vunpack.c.0.s8 %v2762
        %v2764 = vlaneseq
        %v2765 = vshrl.u32 %v2764, 7
        %v2766 = vsub.s32 %v2763, %v2765
        %v2767 = vrot.slane %v2752, %v2766
        %v2769 = vunpack.c.l.s4 1983009808
        %v2770 = vunpack.c.0.s8 %v2769
        %v2771 = vlaneseq
        %v2772 = vshrl.u32 %v2771, 7
        %v2773 = vsub.s32 %v2770, %v2772
        %v2774 = vrot.slane %v2537, %v2773
        %v2776 = vunpack.c.l.s4 1983009808
        %v2777 = vunpack.c.0.s8 %v2776
        %v2778 = vlaneseq
        %v2779 = vshrl.u32 %v2778, 7
        %v2780 = vsub.s32 %v2777, %v2779
        %v2781 = vrot.slane %v2753, %v2780
        %v2782 = vcombine.low %v2760, %v2774
        %v2783 = vcombine.high %v2760, %v2774
        %v2784 = vcombine.low %v2767, %v2781
        %v2785 = vcombine.high %v2767, %v2781
        %v2786 = vcombine.low %v2465, %v2512
        %v2788 = vunpack.c.l.s4 1983009808
        %v2789 = vunpack.c.0.s8 %v2788
        %v2790 = vlaneseq
        %v2791 = vshrl.u32 %v2790, 7
        %v2792 = vsub.s32 %v2789, %v2791
        %v2793 = vrot.slane %v2786, %v2792
        %v2795 = vunpack.c.l.s4 1983009808
        %v2796 = vunpack.c.0.s8 %v2795
        %v2797 = vlaneseq
        %v2798 = vshrl.u32 %v2797, 7
        %v2799 = vsub.s32 %v2796, %v2798
        %v2800 = vrot.slane %v2536, %v2799
        %v2801 = vcombine.low %v2793, %v2800
        %v2802 = vcombine.low %v2488, %v2516
        %v2803 = vcombine.high %v2488, %v2516
        %v2804 = vcombine.high %v2540, %v2540
        %v2806 = vunpack.c.l.s4 1983009808
        %v2807 = vunpack.c.0.s8 %v2806
        %v2808 = vlaneseq
        %v2809 = vshrl.u32 %v2808, 7
        %v2810 = vsub.s32 %v2807, %v2809
        %v2811 = vrot.slane %v2802, %v2810
        %v2813 = vunpack.c.l.s4 1983009808
        %v2814 = vunpack.c.0.s8 %v2813
        %v2815 = vlaneseq
        %v2816 = vshrl.u32 %v2815, 7
        %v2817 = vsub.s32 %v2814, %v2816
        %v2818 = vrot.slane %v2803, %v2817
        %v2820 = vunpack.c.l.s4 1983009808
        %v2821 = vunpack.c.0.s8 %v2820
        %v2822 = vlaneseq
        %v2823 = vshrl.u32 %v2822, 7
        %v2824 = vsub.s32 %v2821, %v2823
        %v2825 = vrot.slane %v2540, %v2824
        %v2827 = vunpack.c.l.s4 1983009808
        %v2828 = vunpack.c.0.s8 %v2827
        %v2829 = vlaneseq
        %v2830 = vshrl.u32 %v2829, 7
        %v2831 = vsub.s32 %v2828, %v2830
        %v2832 = vrot.slane %v2804, %v2831
        %v2833 = vcombine.low %v2811, %v2825
        %v2834 = vcombine.high %v2811, %v2825
        %v2835 = vcombine.low %v2818, %v2832
        %v2836 = vcombine.high %v2818, %v2832
        %v2837 = vcombine.low %v2468, %v2515
        %v2839 = vunpack.c.l.s4 1983009808
        %v2840 = vunpack.c.0.s8 %v2839
        %v2841 = vlaneseq
        %v2842 = vshrl.u32 %v2841, 7
        %v2843 = vsub.s32 %v2840, %v2842
        %v2844 = vrot.slane %v2837, %v2843
        %v2846 = vunpack.c.l.s4 1983009808
        %v2847 = vunpack.c.0.s8 %v2846
        %v2848 = vlaneseq
        %v2849 = vshrl.u32 %v2848, 7
        %v2850 = vsub.s32 %v2847, %v2849
        %v2851 = vrot.slane %v2539, %v2850
        %v2852 = vcombine.low %v2844, %v2851
        %v2853 = vcombine.low %v2489, %v2519
        %v2854 = vcombine.high %v2489, %v2519
        %v2855 = vcombine.high %v2543, %v2543
        %v2857 = vunpack.c.l.s4 1983009808
        %v2858 = vunpack.c.0.s8 %v2857
        %v2859 = vlaneseq
        %v2860 = vshrl.u32 %v2859, 7
        %v2861 = vsub.s32 %v2858, %v2860
        %v2862 = vrot.slane %v2853, %v2861
        %v2864 = vunpack.c.l.s4 1983009808
        %v2865 = vunpack.c.0.s8 %v2864
        %v2866 = vlaneseq
        %v2867 = vshrl.u32 %v2866, 7
        %v2868 = vsub.s32 %v2865, %v2867
        %v2869 = vrot.slane %v2854, %v2868
        %v2871 = vunpack.c.l.s4 1983009808
        %v2872 = vunpack.c.0.s8 %v2871
        %v2873 = vlaneseq
        %v2874 = vshrl.u32 %v2873, 7
        %v2875 = vsub.s32 %v2872, %v2874
        %v2876 = vrot.slane %v2543, %v2875
        %v2878 = vunpack.c.l.s4 1983009808
        %v2879 = vunpack.c.0.s8 %v2878
        %v2880 = vlaneseq
        %v2881 = vshrl.u32 %v2880, 7
        %v2882 = vsub.s32 %v2879, %v2881
        %v2883 = vrot.slane %v2855, %v2882
        %v2884 = vcombine.low %v2862, %v2876
        %v2885 = vcombine.high %v2862, %v2876
        %v2886 = vcombine.low %v2869, %v2883
        %v2887 = vcombine.high %v2869, %v2883
        %v2888 = vcombine.low %v2471, %v2518
        %v2890 = vunpack.c.l.s4 1983009808
        %v2891 = vunpack.c.0.s8 %v2890
        %v2892 = vlaneseq
        %v2893 = vshrl.u32 %v2892, 7
        %v2894 = vsub.s32 %v2891, %v2893
        %v2895 = vrot.slane %v2888, %v2894
        %v2897 = vunpack.c.l.s4 1983009808
        %v2898 = vunpack.c.0.s8 %v2897
        %v2899 = vlaneseq
        %v2900 = vshrl.u32 %v2899, 7
        %v2901 = vsub.s32 %v2898, %v2900
        %v2902 = vrot.slane %v2542, %v2901
        %v2903 = vcombine.low %v2895, %v2902
        %v2904 = vcombine.low %v2490, %v2522
        %v2905 = vcombine.high %v2490, %v2522
        %v2906 = vcombine.high %v2546, %v2546
        %v2908 = vunpack.c.l.s4 1983009808
        %v2909 = vunpack.c.0.s8 %v2908
        %v2910 = vlaneseq
        %v2911 = vshrl.u32 %v2910, 7
        %v2912 = vsub.s32 %v2909, %v2911
        %v2913 = vrot.slane %v2904, %v2912
        %v2915 = vunpack.c.l.s4 1983009808
        %v2916 = vunpack.c.0.s8 %v2915
        %v2917 = vlaneseq
        %v2918 = vshrl.u32 %v2917, 7
        %v2919 = vsub.s32 %v2916, %v2918
        %v2920 = vrot.slane %v2905, %v2919
        %v2922 = vunpack.c.l.s4 1983009808
        %v2923 = vunpack.c.0.s8 %v2922
        %v2924 = vlaneseq
        %v2925 = vshrl.u32 %v2924, 7
        %v2926 = vsub.s32 %v2923, %v2925
        %v2927 = vrot.slane %v2546, %v2926
        %v2929 = vunpack.c.l.s4 1983009808
        %v2930 = vunpack.c.0.s8 %v2929
        %v2931 = vlaneseq
        %v2932 = vshrl.u32 %v2931, 7
        %v2933 = vsub.s32 %v2930, %v2932
        %v2934 = vrot.slane %v2906, %v2933
        %v2935 = vcombine.low %v2913, %v2927
        %v2936 = vcombine.high %v2913, %v2927
        %v2937 = vcombine.low %v2920, %v2934
        %v2938 = vcombine.high %v2920, %v2934
        %v2939 = vcombine.low %v2474, %v2521
        %v2941 = vunpack.c.l.s4 1983009808
        %v2942 = vunpack.c.0.s8 %v2941
        %v2943 = vlaneseq
        %v2944 = vshrl.u32 %v2943, 7
        %v2945 = vsub.s32 %v2942, %v2944
        %v2946 = vrot.slane %v2939, %v2945
        %v2948 = vunpack.c.l.s4 1983009808
        %v2949 = vunpack.c.0.s8 %v2948
        %v2950 = vlaneseq
        %v2951 = vshrl.u32 %v2950, 7
        %v2952 = vsub.s32 %v2949, %v2951
        %v2953 = vrot.slane %v2545, %v2952
        %v2954 = vcombine.low %v2946, %v2953
        %v2955 = vlaneseq
        %v2956 = vshrl.u32 %v2955, 7
        %v2957 = vsub.s32 1, %v2956
        %v2958 = vrot.slane %v382, %v2957
        %v2959 = vcombine.low %v2578, %v2579
        %v2960 = vcombine.high %v2578, %v2579
        %v2961 = vcombine.low %v2580, %v2581
        %v2962 = vcombine.high %v2580, %v2581
        %v2964 = vunpack.c.l.s4 1983009808
        %v2965 = vunpack.c.0.s8 %v2964
        %v2966 = vlaneseq
        %v2967 = vshrl.u32 %v2966, 7
        %v2968 = vsub.s32 %v2965, %v2967
        %v2969 = vrot.slane %v2959, %v2968
        %v2971 = vunpack.c.l.s4 1983009808
        %v2972 = vunpack.c.0.s8 %v2971
        %v2973 = vlaneseq
        %v2974 = vshrl.u32 %v2973, 7
        %v2975 = vsub.s32 %v2972, %v2974
        %v2976 = vrot.slane %v2960, %v2975
        %v2978 = vunpack.c.l.s4 1983009808
        %v2979 = vunpack.c.0.s8 %v2978
        %v2980 = vlaneseq
        %v2981 = vshrl.u32 %v2980, 7
        %v2982 = vsub.s32 %v2979, %v2981
        %v2983 = vrot.slane %v2961, %v2982
        %v2985 = vunpack.c.l.s4 1983009808
        %v2986 = vunpack.c.0.s8 %v2985
        %v2987 = vlaneseq
        %v2988 = vshrl.u32 %v2987, 7
        %v2989 = vsub.s32 %v2986, %v2988
        %v2990 = vrot.slane %v2962, %v2989
        %v2991 = vcombine.low %v2969, %v2983
        %v2992 = vcombine.high %v2969, %v2983
        %v2993 = vcombine.low %v2976, %v2990
        %v2994 = vcombine.low %v2597, %v2629
        %v2995 = vcombine.high %v2597, %v2629
        %v2996 = vcombine.low %v2630, %v2631
        %v2997 = vcombine.high %v2630, %v2631
        %v2999 = vunpack.c.l.s4 1983009808
        %v3000 = vunpack.c.0.s8 %v2999
        %v3001 = vlaneseq
        %v3002 = vshrl.u32 %v3001, 7
        %v3003 = vsub.s32 %v3000, %v3002
        %v3004 = vrot.slane %v2994, %v3003
        %v3006 = vunpack.c.l.s4 1983009808
        %v3007 = vunpack.c.0.s8 %v3006
        %v3008 = vlaneseq
        %v3009 = vshrl.u32 %v3008, 7
        %v3010 = vsub.s32 %v3007, %v3009
        %v3011 = vrot.slane %v2995, %v3010
        %v3013 = vunpack.c.l.s4 1983009808
        %v3014 = vunpack.c.0.s8 %v3013
        %v3015 = vlaneseq
        %v3016 = vshrl.u32 %v3015, 7
        %v3017 = vsub.s32 %v3014, %v3016
        %v3018 = vrot.slane %v2996, %v3017
        %v3020 = vunpack.c.l.s4 1983009808
        %v3021 = vunpack.c.0.s8 %v3020
        %v3022 = vlaneseq
        %v3023 = vshrl.u32 %v3022, 7
        %v3024 = vsub.s32 %v3021, %v3023
        %v3025 = vrot.slane %v2997, %v3024
        %v3026 = vcombine.low %v3004, %v3018
        %v3027 = vcombine.high %v3004, %v3018
        %v3028 = vcombine.low %v3011, %v3025
        %v3029 = vcombine.low %v2632, %v2648
        %v3030 = vcombine.high %v2632, %v2648
        %v3031 = vcombine.low %v2680, %v2681
        %v3032 = vcombine.high %v2680, %v2681
        %v3034 = vunpack.c.l.s4 1983009808
        %v3035 = vunpack.c.0.s8 %v3034
        %v3036 = vlaneseq
        %v3037 = vshrl.u32 %v3036, 7
        %v3038 = vsub.s32 %v3035, %v3037
        %v3039 = vrot.slane %v3029, %v3038
        %v3041 = vunpack.c.l.s4 1983009808
        %v3042 = vunpack.c.0.s8 %v3041
        %v3043 = vlaneseq
        %v3044 = vshrl.u32 %v3043, 7
        %v3045 = vsub.s32 %v3042, %v3044
        %v3046 = vrot.slane %v3030, %v3045
        %v3048 = vunpack.c.l.s4 1983009808
        %v3049 = vunpack.c.0.s8 %v3048
        %v3050 = vlaneseq
        %v3051 = vshrl.u32 %v3050, 7
        %v3052 = vsub.s32 %v3049, %v3051
        %v3053 = vrot.slane %v3031, %v3052
        %v3055 = vunpack.c.l.s4 1983009808
        %v3056 = vunpack.c.0.s8 %v3055
        %v3057 = vlaneseq
        %v3058 = vshrl.u32 %v3057, 7
        %v3059 = vsub.s32 %v3056, %v3058
        %v3060 = vrot.slane %v3032, %v3059
        %v3061 = vcombine.low %v3039, %v3053
        %v3062 = vcombine.high %v3039, %v3053
        %v3063 = vcombine.low %v3046, %v3060
        %v3064 = vcombine.low %v2682, %v2683
        %v3065 = vcombine.high %v2682, %v2683
        %v3066 = vcombine.low %v2699, %v2731
        %v3067 = vcombine.high %v2699, %v2731
        %v3069 = vunpack.c.l.s4 1983009808
        %v3070 = vunpack.c.0.s8 %v3069
        %v3071 = vlaneseq
        %v3072 = vshrl.u32 %v3071, 7
        %v3073 = vsub.s32 %v3070, %v3072
        %v3074 = vrot.slane %v3064, %v3073
        %v3076 = vunpack.c.l.s4 1983009808
        %v3077 = vunpack.c.0.s8 %v3076
        %v3078 = vlaneseq
        %v3079 = vshrl.u32 %v3078, 7
        %v3080 = vsub.s32 %v3077, %v3079
        %v3081 = vrot.slane %v3065, %v3080
        %v3083 = vunpack.c.l.s4 1983009808
        %v3084 = vunpack.c.0.s8 %v3083
        %v3085 = vlaneseq
        %v3086 = vshrl.u32 %v3085, 7
        %v3087 = vsub.s32 %v3084, %v3086
        %v3088 = vrot.slane %v3066, %v3087
        %v3090 = vunpack.c.l.s4 1983009808
        %v3091 = vunpack.c.0.s8 %v3090
        %v3092 = vlaneseq
        %v3093 = vshrl.u32 %v3092, 7
        %v3094 = vsub.s32 %v3091, %v3093
        %v3095 = vrot.slane %v3067, %v3094
        %v3096 = vcombine.low %v3074, %v3088
        %v3097 = vcombine.high %v3074, %v3088
        %v3098 = vcombine.low %v3081, %v3095
        %v3099 = vcombine.low %v2732, %v2733
        %v3100 = vcombine.high %v2732, %v2733
        %v3101 = vcombine.low %v2734, %v2750
        %v3102 = vcombine.high %v2734, %v2750
        %v3104 = vunpack.c.l.s4 1983009808
        %v3105 = vunpack.c.0.s8 %v3104
        %v3106 = vlaneseq
        %v3107 = vshrl.u32 %v3106, 7
        %v3108 = vsub.s32 %v3105, %v3107
        %v3109 = vrot.slane %v3099, %v3108
        %v3111 = vunpack.c.l.s4 1983009808
        %v3112 = vunpack.c.0.s8 %v3111
        %v3113 = vlaneseq
        %v3114 = vshrl.u32 %v3113, 7
        %v3115 = vsub.s32 %v3112, %v3114
        %v3116 = vrot.slane %v3100, %v3115
        %v3118 = vunpack.c.l.s4 1983009808
        %v3119 = vunpack.c.0.s8 %v3118
        %v3120 = vlaneseq
        %v3121 = vshrl.u32 %v3120, 7
        %v3122 = vsub.s32 %v3119, %v3121
        %v3123 = vrot.slane %v3101, %v3122
        %v3125 = vunpack.c.l.s4 1983009808
        %v3126 = vunpack.c.0.s8 %v3125
        %v3127 = vlaneseq
        %v3128 = vshrl.u32 %v3127, 7
        %v3129 = vsub.s32 %v3126, %v3128
        %v3130 = vrot.slane %v3102, %v3129
        %v3131 = vcombine.low %v3109, %v3123
        %v3132 = vcombine.high %v3109, %v3123
        %v3133 = vcombine.low %v3116, %v3130
        %v3134 = vcombine.low %v2782, %v2783
        %v3135 = vcombine.high %v2782, %v2783
        %v3136 = vcombine.low %v2784, %v2785
        %v3137 = vcombine.high %v2784, %v2785
        %v3139 = vunpack.c.l.s4 1983009808
        %v3140 = vunpack.c.0.s8 %v3139
        %v3141 = vlaneseq
        %v3142 = vshrl.u32 %v3141, 7
        %v3143 = vsub.s32 %v3140, %v3142
        %v3144 = vrot.slane %v3134, %v3143
        %v3146 = vunpack.c.l.s4 1983009808
        %v3147 = vunpack.c.0.s8 %v3146
        %v3148 = vlaneseq
        %v3149 = vshrl.u32 %v3148, 7
        %v3150 = vsub.s32 %v3147, %v3149
        %v3151 = vrot.slane %v3135, %v3150
        %v3153 = vunpack.c.l.s4 1983009808
        %v3154 = vunpack.c.0.s8 %v3153
        %v3155 = vlaneseq
        %v3156 = vshrl.u32 %v3155, 7
        %v3157 = vsub.s32 %v3154, %v3156
        %v3158 = vrot.slane %v3136, %v3157
        %v3160 = vunpack.c.l.s4 1983009808
        %v3161 = vunpack.c.0.s8 %v3160
        %v3162 = vlaneseq
        %v3163 = vshrl.u32 %v3162, 7
        %v3164 = vsub.s32 %v3161, %v3163
        %v3165 = vrot.slane %v3137, %v3164
        %v3166 = vcombine.low %v3144, %v3158
        %v3167 = vcombine.high %v3144, %v3158
        %v3168 = vcombine.low %v3151, %v3165
        %v3169 = vcombine.low %v2801, %v2833
        %v3170 = vcombine.high %v2801, %v2833
        %v3171 = vcombine.low %v2834, %v2835
        %v3172 = vcombine.high %v2834, %v2835
        %v3174 = vunpack.c.l.s4 1983009808
        %v3175 = vunpack.c.0.s8 %v3174
        %v3176 = vlaneseq
        %v3177 = vshrl.u32 %v3176, 7
        %v3178 = vsub.s32 %v3175, %v3177
        %v3179 = vrot.slane %v3169, %v3178
        %v3181 = vunpack.c.l.s4 1983009808
        %v3182 = vunpack.c.0.s8 %v3181
        %v3183 = vlaneseq
        %v3184 = vshrl.u32 %v3183, 7
        %v3185 = vsub.s32 %v3182, %v3184
        %v3186 = vrot.slane %v3170, %v3185
        %v3188 = vunpack.c.l.s4 1983009808
        %v3189 = vunpack.c.0.s8 %v3188
        %v3190 = vlaneseq
        %v3191 = vshrl.u32 %v3190, 7
        %v3192 = vsub.s32 %v3189, %v3191
        %v3193 = vrot.slane %v3171, %v3192
        %v3195 = vunpack.c.l.s4 1983009808
        %v3196 = vunpack.c.0.s8 %v3195
        %v3197 = vlaneseq
        %v3198 = vshrl.u32 %v3197, 7
        %v3199 = vsub.s32 %v3196, %v3198
        %v3200 = vrot.slane %v3172, %v3199
        %v3201 = vcombine.low %v3179, %v3193
        %v3202 = vcombine.high %v3179, %v3193
        %v3203 = vcombine.low %v3186, %v3200
        %v3204 = vcombine.low %v2836, %v2852
        %v3205 = vcombine.high %v2836, %v2852
        %v3206 = vcombine.low %v2884, %v2885
        %v3207 = vcombine.high %v2884, %v2885
        %v3209 = vunpack.c.l.s4 1983009808
        %v3210 = vunpack.c.0.s8 %v3209
        %v3211 = vlaneseq
        %v3212 = vshrl.u32 %v3211, 7
        %v3213 = vsub.s32 %v3210, %v3212
        %v3214 = vrot.slane %v3204, %v3213
        %v3216 = vunpack.c.l.s4 1983009808
        %v3217 = vunpack.c.0.s8 %v3216
        %v3218 = vlaneseq
        %v3219 = vshrl.u32 %v3218, 7
        %v3220 = vsub.s32 %v3217, %v3219
        %v3221 = vrot.slane %v3205, %v3220
        %v3223 = vunpack.c.l.s4 1983009808
        %v3224 = vunpack.c.0.s8 %v3223
        %v3225 = vlaneseq
        %v3226 = vshrl.u32 %v3225, 7
        %v3227 = vsub.s32 %v3224, %v3226
        %v3228 = vrot.slane %v3206, %v3227
        %v3230 = vunpack.c.l.s4 1983009808
        %v3231 = vunpack.c.0.s8 %v3230
        %v3232 = vlaneseq
        %v3233 = vshrl.u32 %v3232, 7
        %v3234 = vsub.s32 %v3231, %v3233
        %v3235 = vrot.slane %v3207, %v3234
        %v3236 = vcombine.low %v3214, %v3228
        %v3237 = vcombine.high %v3214, %v3228
        %v3238 = vcombine.low %v3221, %v3235
        %v3239 = vcombine.low %v2886, %v2887
        %v3240 = vcombine.high %v2886, %v2887
        %v3241 = vcombine.low %v2903, %v2935
        %v3242 = vcombine.high %v2903, %v2935
        %v3244 = vunpack.c.l.s4 1983009808
        %v3245 = vunpack.c.0.s8 %v3244
        %v3246 = vlaneseq
        %v3247 = vshrl.u32 %v3246, 7
        %v3248 = vsub.s32 %v3245, %v3247
        %v3249 = vrot.slane %v3239, %v3248
        %v3251 = vunpack.c.l.s4 1983009808
        %v3252 = vunpack.c.0.s8 %v3251
        %v3253 = vlaneseq
        %v3254 = vshrl.u32 %v3253, 7
        %v3255 = vsub.s32 %v3252, %v3254
        %v3256 = vrot.slane %v3240, %v3255
        %v3258 = vunpack.c.l.s4 1983009808
        %v3259 = vunpack.c.0.s8 %v3258
        %v3260 = vlaneseq
        %v3261 = vshrl.u32 %v3260, 7
        %v3262 = vsub.s32 %v3259, %v3261
        %v3263 = vrot.slane %v3241, %v3262
        %v3265 = vunpack.c.l.s4 1983009808
        %v3266 = vunpack.c.0.s8 %v3265
        %v3267 = vlaneseq
        %v3268 = vshrl.u32 %v3267, 7
        %v3269 = vsub.s32 %v3266, %v3268
        %v3270 = vrot.slane %v3242, %v3269
        %v3271 = vcombine.low %v3249, %v3263
        %v3272 = vcombine.high %v3249, %v3263
        %v3273 = vcombine.low %v3256, %v3270
        %v3274 = vcombine.low %v2936, %v2937
        %v3275 = vcombine.high %v2936, %v2937
        %v3276 = vcombine.low %v2938, %v2954
        %v3277 = vcombine.high %v2938, %v2954
        %v3279 = vunpack.c.l.s4 1983009808
        %v3280 = vunpack.c.0.s8 %v3279
        %v3281 = vlaneseq
        %v3282 = vshrl.u32 %v3281, 7
        %v3283 = vsub.s32 %v3280, %v3282
        %v3284 = vrot.slane %v3274, %v3283
        %v3286 = vunpack.c.l.s4 1983009808
        %v3287 = vunpack.c.0.s8 %v3286
        %v3288 = vlaneseq
        %v3289 = vshrl.u32 %v3288, 7
        %v3290 = vsub.s32 %v3287, %v3289
        %v3291 = vrot.slane %v3275, %v3290
        %v3293 = vunpack.c.l.s4 1983009808
        %v3294 = vunpack.c.0.s8 %v3293
        %v3295 = vlaneseq
        %v3296 = vshrl.u32 %v3295, 7
        %v3297 = vsub.s32 %v3294, %v3296
        %v3298 = vrot.slane %v3276, %v3297
        %v3300 = vunpack.c.l.s4 1983009808
        %v3301 = vunpack.c.0.s8 %v3300
        %v3302 = vlaneseq
        %v3303 = vshrl.u32 %v3302, 7
        %v3304 = vsub.s32 %v3301, %v3303
        %v3305 = vrot.slane %v3277, %v3304
        %v3306 = vcombine.low %v3284, %v3298
        %v3307 = vcombine.high %v3284, %v3298
        %v3308 = vcombine.low %v3291, %v3305
        %3339 = vmatprep.subr.mxu0 0.0
        %3340 = vmatpush1.msra.mxu0 %v270
        %3341 = vmatprep.subr.mxu0 0.0
        %3342 = vmatpush1.msra.mxu0 %v271
        %3343 = vmatprep.subr.mxu0 0.0
        %3344 = vmatpush1.msra.mxu0 %v272
        %3345 = vmatprep.subr.mxu0 0.0
        %3346 = vmatpush1.msra.mxu0 %v273
        %3347 = vmatprep.subr.mxu0 0.0
        %3348 = vmatpush1.msra.mxu0 %v274
        %3349 = vmatprep.subr.mxu0 0.0
        %3350 = vmatpush1.msra.mxu0 %v275
        %3351 = vmatprep.subr.mxu0 0.0
        %3352 = vmatpush1.msra.mxu0 %v276
        %3353 = vmatprep.subr.mxu0 0.0
        %3354 = vmatpush1.msra.mxu0 %v277
        %3355 = vmatprep.subr.mxu0 0.0
        %3356 = vmatpush1.msra.mxu0 %v278
        %3357 = vmatprep.subr.mxu0 0.0
        %3358 = vmatpush1.msra.mxu0 %v279
        %3359 = vmatprep.subr.mxu0 0.0
        %3360 = vmatpush1.msra.mxu0 %v280
        %3361 = vmatprep.subr.mxu0 0.0
        %3362 = vmatpush1.msra.mxu0 %v281
        %3363 = vmatprep.subr.mxu0 0.0
        %3364 = vmatpush1.msra.mxu0 %v282
        %3365 = vmatprep.subr.mxu0 0.0
        %3366 = vmatpush1.msra.mxu0 %v283
        %3367 = vmatprep.subr.mxu0 0.0
        %3368 = vmatpush1.msra.mxu0 %v284
        %3369 = vmatprep.subr.mxu0 0.0
        %3370 = vmatpush1.msra.mxu0 %v285
        %3371 = vmatprep.subr.mxu0 0.0
        %3372 = vmatpush1.msra.mxu0 %v286
        %3373 = vmatprep.subr.mxu0 0.0
        %3374 = vmatpush1.msra.mxu0 %v287
        %3375 = vmatprep.subr.mxu0 0.0
        %3376 = vmatpush1.msra.mxu0 %v288
        %3377 = vmatprep.subr.mxu0 0.0
        %3378 = vmatpush1.msra.mxu0 %v289
        %3379 = vmatprep.subr.mxu0 0.0
        %3380 = vmatpush1.msra.mxu0 %v290
        %3381 = vmatprep.subr.mxu0 0.0
        %3382 = vmatpush1.msra.mxu0 %v291
        %3383 = vmatprep.subr.mxu0 0.0
        %3384 = vmatpush1.msra.mxu0 %v292
        %3385 = vmatprep.subr.mxu0 0.0
        %3386 = vmatpush1.msra.mxu0 %v293
        %3387 = vmatprep.subr.mxu0 0.0
        %3388 = vmatpush1.msra.mxu0 %v294
        %3389 = vmatprep.subr.mxu0 0.0
        %3390 = vmatpush1.msra.mxu0 %v295
        %3391 = vmatprep.subr.mxu0 0.0
        %3392 = vmatpush1.msra.mxu0 %v296
        %3393 = vmatprep.subr.mxu0 0.0
        %3394 = vmatpush1.msra.mxu0 %v297
        %3395 = vmatprep.subr.mxu0 0.0
        %3396 = vmatpush1.msra.mxu0 %v298
        %3397 = vmatprep.subr.mxu0 0.0
        %3398 = vmatpush1.msra.mxu0 %v299
        %3399 = vmatprep.subr.mxu0 0.0
        %3400 = vmatpush1.msra.mxu0 %v300
        %3401 = vmatprep.subr.mxu0 0.0
        %3402 = vmatpush1.msra.mxu0 %v301
        %3403 = vmatprep.mubr.f32.mxu0 %v2992
        %3404 = vmatmul.mubr.f32.gmra.mrb[0].mxu0 %v2991
        %v3405 = vpop.f32.mrb[0].mxu0
        %v3406 = vadd.f32 %v2958, %v3405
        %v3407 = vpop.f32.mrb[0].mxu0
        %3408 = vmatprep.mubr.f32.mxu0 %v3027
        %3409 = vmatmul.mubr.f32.gmra.mrb[0].mxu0 %v3026
        %v3410 = vpop.f32.mrb[0].mxu0
        %v3411 = vadd.f32 %v2958, %v3410
        %v3412 = vpop.f32.mrb[0].mxu0
        %3413 = vmatprep.mubr.f32.mxu0 %v3062
        %3414 = vmatmul.mubr.f32.gmra.mrb[0].mxu0 %v3061
        %v3415 = vpop.f32.mrb[0].mxu0
        %v3416 = vadd.f32 %v2958, %v3415
        %v3417 = vpop.f32.mrb[0].mxu0
        %3418 = vmatprep.mubr.f32.mxu0 %v3097
        %3419 = vmatmul.mubr.f32.gmra.mrb[0].mxu0 %v3096
        %v3420 = vpop.f32.mrb[0].mxu0
        %v3421 = vadd.f32 %v2958, %v3420
        %v3422 = vpop.f32.mrb[0].mxu0
        %3423 = vmatprep.mubr.f32.mxu0 %v3132
        %3424 = vmatmul.mubr.f32.gmra.mrb[0].mxu0 %v3131
        %v3425 = vpop.f32.mrb[0].mxu0
        %v3426 = vadd.f32 %v2958, %v3425
        %v3427 = vpop.f32.mrb[0].mxu0
        %3428 = vmatprep.mubr.f32.mxu0 %v3167
        %3429 = vmatmul.mubr.f32.gmra.mrb[0].mxu0 %v3166
        %v3430 = vpop.f32.mrb[0].mxu0
        %v3431 = vadd.f32 %v2958, %v3430
        %v3432 = vpop.f32.mrb[0].mxu0
        %3433 = vmatprep.mubr.f32.mxu0 %v3202
        %3434 = vmatmul.mubr.f32.gmra.mrb[0].mxu0 %v3201
        %v3435 = vpop.f32.mrb[0].mxu0
        %v3436 = vadd.f32 %v2958, %v3435
        %v3437 = vpop.f32.mrb[0].mxu0
        %3438 = vmatprep.mubr.f32.mxu0 %v3237
        %3439 = vmatmul.mubr.f32.gmra.mrb[0].mxu0 %v3236
        %v3440 = vpop.f32.mrb[0].mxu0
        %v3441 = vadd.f32 %v2958, %v3440
        %v3442 = vpop.f32.mrb[0].mxu0
        %3443 = vmatprep.mubr.f32.mxu0 %v3272
        %3444 = vmatmul.mubr.f32.gmra.mrb[0].mxu0 %v3271
        %v3445 = vpop.f32.mrb[0].mxu0
        %v3446 = vadd.f32 %v2958, %v3445
        %v3447 = vpop.f32.mrb[0].mxu0
        %3448 = vmatprep.mubr.f32.mxu0 %v3307
        %3449 = vmatmul.mubr.f32.gmra.mrb[0].mxu0 %v3306
        %v3450 = vpop.f32.mrb[0].mxu0
        %v3451 = vadd.f32 %v2958, %v3450
        %v3452 = vpop.f32.mrb[0].mxu0
        %3453 = vdwg.mxu0
        %3454 = vmatprep.subr.mxu0 0.0
        %3455 = vmatpush1.msra.mxu0 %v302
        %3456 = vmatprep.subr.mxu0 0.0
        %3457 = vmatpush1.msra.mxu0 %v303
        %3458 = vmatprep.subr.mxu0 0.0
        %3459 = vmatpush1.msra.mxu0 %v304
        %3460 = vmatprep.subr.mxu0 0.0
        %3461 = vmatpush1.msra.mxu0 %v305
        %3462 = vmatprep.subr.mxu0 0.0
        %3463 = vmatpush1.msra.mxu0 %v306
        %3464 = vmatprep.subr.mxu0 0.0
        %3465 = vmatpush1.msra.mxu0 %v307
        %3466 = vmatprep.subr.mxu0 0.0
        %3467 = vmatpush1.msra.mxu0 %v308
        %3468 = vmatprep.subr.mxu0 0.0
        %3469 = vmatpush1.msra.mxu0 %v309
        %3470 = vmatprep.subr.mxu0 0.0
        %3471 = vmatpush1.msra.mxu0 %v310
        %3472 = vmatprep.subr.mxu0 0.0
        %3473 = vmatpush1.msra.mxu0 %v311
        %3474 = vmatprep.subr.mxu0 0.0
        %3475 = vmatpush1.msra.mxu0 %v312
        %3476 = vmatprep.subr.mxu0 0.0
        %3477 = vmatpush1.msra.mxu0 %v313
        %3478 = vmatprep.subr.mxu0 0.0
        %3479 = vmatpush1.msra.mxu0 %v314
        %3480 = vmatprep.subr.mxu0 0.0
        %3481 = vmatpush1.msra.mxu0 %v315
        %3482 = vmatprep.subr.mxu0 0.0
        %3483 = vmatpush1.msra.mxu0 %v316
        %3484 = vmatprep.subr.mxu0 0.0
        %3485 = vmatpush1.msra.mxu0 %v317
        %3486 = vmatprep.subr.mxu0 0.0
        %3487 = vmatpush1.msra.mxu0 0.0
        %3488 = vmatprep.subr.mxu0 0.0
        %3489 = vmatpush1.msra.mxu0 0.0
        %3490 = vmatprep.subr.mxu0 0.0
        %3491 = vmatpush1.msra.mxu0 0.0
        %3492 = vmatprep.subr.mxu0 0.0
        %3493 = vmatpush1.msra.mxu0 0.0
        %3494 = vmatprep.subr.mxu0 0.0
        %3495 = vmatpush1.msra.mxu0 0.0
        %3496 = vmatprep.subr.mxu0 0.0
        %3497 = vmatpush1.msra.mxu0 0.0
        %3498 = vmatprep.subr.mxu0 0.0
        %3499 = vmatpush1.msra.mxu0 0.0
        %3500 = vmatprep.subr.mxu0 0.0
        %3501 = vmatpush1.msra.mxu0 0.0
        %3502 = vmatprep.subr.mxu0 0.0
        %3503 = vmatpush1.msra.mxu0 0.0
        %3504 = vmatprep.subr.mxu0 0.0
        %3505 = vmatpush1.msra.mxu0 0.0
        %3506 = vmatprep.subr.mxu0 0.0
        %3507 = vmatpush1.msra.mxu0 0.0
        %3508 = vmatprep.subr.mxu0 0.0
        %3509 = vmatpush1.msra.mxu0 0.0
        %3510 = vmatprep.subr.mxu0 0.0
        %3511 = vmatpush1.msra.mxu0 0.0
        %3512 = vmatprep.subr.mxu0 0.0
        %3513 = vmatpush1.msra.mxu0 0.0
        %3514 = vmatprep.subr.mxu0 0.0
        %3515 = vmatpush1.msra.mxu0 0.0
        %3516 = vmatprep.subr.mxu0 0.0
        %3517 = vmatpush1.msra.mxu0 0.0
        %3518 = vmatprep.mubr.f32.mxu0 0.0
        %3519 = vmatmul.mubr.f32.gmra.mrb[0].mxu0 %v2993
        %v3520 = vpop.f32.mrb[0].mxu0
        %v3521 = vadd.f32 %v3406, %v3520
        %v3522 = vpop.f32.mrb[0].mxu0
        %3523 = vmatprep.mubr.f32.mxu0 0.0
        %3524 = vmatmul.mubr.f32.gmra.mrb[0].mxu0 %v3028
        %v3525 = vpop.f32.mrb[0].mxu0
        %v3526 = vadd.f32 %v3411, %v3525
        %v3527 = vpop.f32.mrb[0].mxu0
        %3528 = vmatprep.mubr.f32.mxu0 0.0
        %3529 = vmatmul.mubr.f32.gmra.mrb[0].mxu0 %v3063
        %v3530 = vpop.f32.mrb[0].mxu0
        %v3531 = vadd.f32 %v3416, %v3530
        %v3532 = vpop.f32.mrb[0].mxu0
        %3533 = vmatprep.mubr.f32.mxu0 0.0
        %3534 = vmatmul.mubr.f32.gmra.mrb[0].mxu0 %v3098
        %v3535 = vpop.f32.mrb[0].mxu0
        %v3536 = vadd.f32 %v3421, %v3535
        %v3537 = vpop.f32.mrb[0].mxu0
        %3538 = vmatprep.mubr.f32.mxu0 0.0
        %3539 = vmatmul.mubr.f32.gmra.mrb[0].mxu0 %v3133
        %v3540 = vpop.f32.mrb[0].mxu0
        %v3541 = vadd.f32 %v3426, %v3540
        %v3542 = vpop.f32.mrb[0].mxu0
        %3543 = vmatprep.mubr.f32.mxu0 0.0
        %3544 = vmatmul.mubr.f32.gmra.mrb[0].mxu0 %v3168
        %v3545 = vpop.f32.mrb[0].mxu0
        %v3546 = vadd.f32 %v3431, %v3545
        %v3547 = vpop.f32.mrb[0].mxu0
        %3548 = vmatprep.mubr.f32.mxu0 0.0
        %3549 = vmatmul.mubr.f32.gmra.mrb[0].mxu0 %v3203
        %v3550 = vpop.f32.mrb[0].mxu0
        %v3551 = vadd.f32 %v3436, %v3550
        %v3552 = vpop.f32.mrb[0].mxu0
        %3553 = vmatprep.mubr.f32.mxu0 0.0
        %3554 = vmatmul.mubr.f32.gmra.mrb[0].mxu0 %v3238
        %v3555 = vpop.f32.mrb[0].mxu0
        %v3556 = vadd.f32 %v3441, %v3555
        %v3557 = vpop.f32.mrb[0].mxu0
        %3558 = vmatprep.mubr.f32.mxu0 0.0
        %3559 = vmatmul.mubr.f32.gmra.mrb[0].mxu0 %v3273
        %v3560 = vpop.f32.mrb[0].mxu0
        %v3561 = vadd.f32 %v3446, %v3560
        %v3562 = vpop.f32.mrb[0].mxu0
        %3563 = vmatprep.mubr.f32.mxu0 0.0
        %3564 = vmatmul.mubr.f32.gmra.mrb[0].mxu0 %v3308
        %v3565 = vpop.f32.mrb[0].mxu0
        %v3566 = vadd.f32 %v3451, %v3565
        %v3567 = vpop.f32.mrb[0].mxu0
        %3568 = vdwg.mxu0
        %v3569 = vmax.f32 %v3521, 0.0
        %v3570 = vmax.f32 %v3526, 0.0
        %v3571 = vmax.f32 %v3531, 0.0
        %v3572 = vmax.f32 %v3536, 0.0
        %v3573 = vmax.f32 %v3541, 0.0
        %v3574 = vmax.f32 %v3546, 0.0
        %v3575 = vmax.f32 %v3551, 0.0
        %v3576 = vmax.f32 %v3556, 0.0
        %v3577 = vmax.f32 %v3561, 0.0
        %v3578 = vmax.f32 %v3566, 0.0
        %v3589 = vcombine.high %v3569, %v3569
        %v3591 = vunpack.c.l.s4 1983009808
        %v3592 = vunpack.c.0.s8 %v3591
        %v3593 = vlaneseq
        %v3594 = vshrl.u32 %v3593, 7
        %v3595 = vsub.s32 %v3592, %v3594
        %v3596 = vrot.slane %v3569, %v3595
        %v3598 = vunpack.c.l.s4 1983009808
        %v3599 = vunpack.c.0.s8 %v3598
        %v3600 = vlaneseq
        %v3601 = vshrl.u32 %v3600, 7
        %v3602 = vsub.s32 %v3599, %v3601
        %v3603 = vrot.slane %v3589, %v3602
        %v3604 = vcombine.high %v3596, %v3596
        %v3605 = vcombine.high %v3603, %v3603
        %v3606 = vcombine.high %v3570, %v3570
        %v3608 = vunpack.c.l.s4 1983009808
        %v3609 = vunpack.c.0.s8 %v3608
        %v3610 = vlaneseq
        %v3611 = vshrl.u32 %v3610, 7
        %v3612 = vsub.s32 %v3609, %v3611
        %v3613 = vrot.slane %v3570, %v3612
        %v3615 = vunpack.c.l.s4 1983009808
        %v3616 = vunpack.c.0.s8 %v3615
        %v3617 = vlaneseq
        %v3618 = vshrl.u32 %v3617, 7
        %v3619 = vsub.s32 %v3616, %v3618
        %v3620 = vrot.slane %v3606, %v3619
        %v3621 = vcombine.high %v3613, %v3613
        %v3622 = vcombine.high %v3620, %v3620
        %v3623 = vcombine.high %v3571, %v3571
        %v3625 = vunpack.c.l.s4 1983009808
        %v3626 = vunpack.c.0.s8 %v3625
        %v3627 = vlaneseq
        %v3628 = vshrl.u32 %v3627, 7
        %v3629 = vsub.s32 %v3626, %v3628
        %v3630 = vrot.slane %v3571, %v3629
        %v3632 = vunpack.c.l.s4 1983009808
        %v3633 = vunpack.c.0.s8 %v3632
        %v3634 = vlaneseq
        %v3635 = vshrl.u32 %v3634, 7
        %v3636 = vsub.s32 %v3633, %v3635
        %v3637 = vrot.slane %v3623, %v3636
        %v3638 = vcombine.high %v3630, %v3630
        %v3639 = vcombine.high %v3637, %v3637
        %v3640 = vcombine.high %v3572, %v3572
        %v3642 = vunpack.c.l.s4 1983009808
        %v3643 = vunpack.c.0.s8 %v3642
        %v3644 = vlaneseq
        %v3645 = vshrl.u32 %v3644, 7
        %v3646 = vsub.s32 %v3643, %v3645
        %v3647 = vrot.slane %v3572, %v3646
        %v3649 = vunpack.c.l.s4 1983009808
        %v3650 = vunpack.c.0.s8 %v3649
        %v3651 = vlaneseq
        %v3652 = vshrl.u32 %v3651, 7
        %v3653 = vsub.s32 %v3650, %v3652
        %v3654 = vrot.slane %v3640, %v3653
        %v3655 = vcombine.high %v3647, %v3647
        %v3656 = vcombine.high %v3654, %v3654
        %v3657 = vcombine.high %v3573, %v3573
        %v3659 = vunpack.c.l.s4 1983009808
        %v3660 = vunpack.c.0.s8 %v3659
        %v3661 = vlaneseq
        %v3662 = vshrl.u32 %v3661, 7
        %v3663 = vsub.s32 %v3660, %v3662
        %v3664 = vrot.slane %v3573, %v3663
        %v3666 = vunpack.c.l.s4 1983009808
        %v3667 = vunpack.c.0.s8 %v3666
        %v3668 = vlaneseq
        %v3669 = vshrl.u32 %v3668, 7
        %v3670 = vsub.s32 %v3667, %v3669
        %v3671 = vrot.slane %v3657, %v3670
        %v3672 = vcombine.high %v3664, %v3664
        %v3673 = vcombine.high %v3671, %v3671
        %v3674 = vcombine.high %v3574, %v3574
        %v3676 = vunpack.c.l.s4 1983009808
        %v3677 = vunpack.c.0.s8 %v3676
        %v3678 = vlaneseq
        %v3679 = vshrl.u32 %v3678, 7
        %v3680 = vsub.s32 %v3677, %v3679
        %v3681 = vrot.slane %v3574, %v3680
        %v3683 = vunpack.c.l.s4 1983009808
        %v3684 = vunpack.c.0.s8 %v3683
        %v3685 = vlaneseq
        %v3686 = vshrl.u32 %v3685, 7
        %v3687 = vsub.s32 %v3684, %v3686
        %v3688 = vrot.slane %v3674, %v3687
        %v3689 = vcombine.high %v3681, %v3681
        %v3690 = vcombine.high %v3688, %v3688
        %v3691 = vcombine.high %v3575, %v3575
        %v3693 = vunpack.c.l.s4 1983009808
        %v3694 = vunpack.c.0.s8 %v3693
        %v3695 = vlaneseq
        %v3696 = vshrl.u32 %v3695, 7
        %v3697 = vsub.s32 %v3694, %v3696
        %v3698 = vrot.slane %v3575, %v3697
        %v3700 = vunpack.c.l.s4 1983009808
        %v3701 = vunpack.c.0.s8 %v3700
        %v3702 = vlaneseq
        %v3703 = vshrl.u32 %v3702, 7
        %v3704 = vsub.s32 %v3701, %v3703
        %v3705 = vrot.slane %v3691, %v3704
        %v3706 = vcombine.high %v3698, %v3698
        %v3707 = vcombine.high %v3705, %v3705
        %v3708 = vcombine.high %v3576, %v3576
        %v3710 = vunpack.c.l.s4 1983009808
        %v3711 = vunpack.c.0.s8 %v3710
        %v3712 = vlaneseq
        %v3713 = vshrl.u32 %v3712, 7
        %v3714 = vsub.s32 %v3711, %v3713
        %v3715 = vrot.slane %v3576, %v3714
        %v3717 = vunpack.c.l.s4 1983009808
        %v3718 = vunpack.c.0.s8 %v3717
        %v3719 = vlaneseq
        %v3720 = vshrl.u32 %v3719, 7
        %v3721 = vsub.s32 %v3718, %v3720
        %v3722 = vrot.slane %v3708, %v3721
        %v3723 = vcombine.high %v3715, %v3715
        %v3724 = vcombine.high %v3722, %v3722
        %v3725 = vcombine.high %v3577, %v3577
        %v3727 = vunpack.c.l.s4 1983009808
        %v3728 = vunpack.c.0.s8 %v3727
        %v3729 = vlaneseq
        %v3730 = vshrl.u32 %v3729, 7
        %v3731 = vsub.s32 %v3728, %v3730
        %v3732 = vrot.slane %v3577, %v3731
        %v3734 = vunpack.c.l.s4 1983009808
        %v3735 = vunpack.c.0.s8 %v3734
        %v3736 = vlaneseq
        %v3737 = vshrl.u32 %v3736, 7
        %v3738 = vsub.s32 %v3735, %v3737
        %v3739 = vrot.slane %v3725, %v3738
        %v3740 = vcombine.high %v3732, %v3732
        %v3741 = vcombine.high %v3739, %v3739
        %v3742 = vcombine.high %v3578, %v3578
        %v3744 = vunpack.c.l.s4 1983009808
        %v3745 = vunpack.c.0.s8 %v3744
        %v3746 = vlaneseq
        %v3747 = vshrl.u32 %v3746, 7
        %v3748 = vsub.s32 %v3745, %v3747
        %v3749 = vrot.slane %v3578, %v3748
        %v3751 = vunpack.c.l.s4 1983009808
        %v3752 = vunpack.c.0.s8 %v3751
        %v3753 = vlaneseq
        %v3754 = vshrl.u32 %v3753, 7
        %v3755 = vsub.s32 %v3752, %v3754
        %v3756 = vrot.slane %v3742, %v3755
        %v3757 = vcombine.high %v3749, %v3749
        %v3758 = vcombine.high %v3756, %v3756
        %v3759 = vcombine.low %v3596, %v3604
        %v3761 = vunpack.c.l.s4 1983009808
        %v3762 = vunpack.c.0.s8 %v3761
        %v3763 = vlaneseq
        %v3764 = vshrl.u32 %v3763, 7
        %v3765 = vsub.s32 %v3762, %v3764
        %v3766 = vrot.slane %v3759, %v3765
        %v3767 = vcombine.low %v3766, %v3766
        %v3768 = vcombine.low %v3603, %v3605
        %v3770 = vunpack.c.l.s4 1983009808
        %v3771 = vunpack.c.0.s8 %v3770
        %v3772 = vlaneseq
        %v3773 = vshrl.u32 %v3772, 7
        %v3774 = vsub.s32 %v3771, %v3773
        %v3775 = vrot.slane %v3768, %v3774
        %v3777 = vunpack.c.l.s4 1983009808
        %v3778 = vunpack.c.0.s8 %v3777
        %v3779 = vlaneseq
        %v3780 = vshrl.u32 %v3779, 7
        %v3781 = vsub.s32 %v3778, %v3780
        %v3782 = vrot.slane %v3613, %v3781
        %v3783 = vcombine.low %v3775, %v3782
        %v3784 = vcombine.low %v3621, %v3620
        %v3786 = vunpack.c.l.s4 1983009808
        %v3787 = vunpack.c.0.s8 %v3786
        %v3788 = vlaneseq
        %v3789 = vshrl.u32 %v3788, 7
        %v3790 = vsub.s32 %v3787, %v3789
        %v3791 = vrot.slane %v3784, %v3790
        %v3792 = vcombine.low %v3791, %v3791
        %v3793 = vcombine.low %v3622, %v3630
        %v3795 = vunpack.c.l.s4 1983009808
        %v3796 = vunpack.c.0.s8 %v3795
        %v3797 = vlaneseq
        %v3798 = vshrl.u32 %v3797, 7
        %v3799 = vsub.s32 %v3796, %v3798
        %v3800 = vrot.slane %v3793, %v3799
        %v3802 = vunpack.c.l.s4 1983009808
        %v3803 = vunpack.c.0.s8 %v3802
        %v3804 = vlaneseq
        %v3805 = vshrl.u32 %v3804, 7
        %v3806 = vsub.s32 %v3803, %v3805
        %v3807 = vrot.slane %v3638, %v3806
        %v3808 = vcombine.low %v3800, %v3807
        %v3809 = vcombine.low %v3637, %v3639
        %v3811 = vunpack.c.l.s4 1983009808
        %v3812 = vunpack.c.0.s8 %v3811
        %v3813 = vlaneseq
        %v3814 = vshrl.u32 %v3813, 7
        %v3815 = vsub.s32 %v3812, %v3814
        %v3816 = vrot.slane %v3809, %v3815
        %v3817 = vcombine.low %v3816, %v3816
        %v3818 = vcombine.low %v3647, %v3655
        %v3820 = vunpack.c.l.s4 1983009808
        %v3821 = vunpack.c.0.s8 %v3820
        %v3822 = vlaneseq
        %v3823 = vshrl.u32 %v3822, 7
        %v3824 = vsub.s32 %v3821, %v3823
        %v3825 = vrot.slane %v3818, %v3824
        %v3827 = vunpack.c.l.s4 1983009808
        %v3828 = vunpack.c.0.s8 %v3827
        %v3829 = vlaneseq
        %v3830 = vshrl.u32 %v3829, 7
        %v3831 = vsub.s32 %v3828, %v3830
        %v3832 = vrot.slane %v3654, %v3831
        %v3833 = vcombine.low %v3825, %v3832
        %v3834 = vcombine.low %v3656, %v3664
        %v3836 = vunpack.c.l.s4 1983009808
        %v3837 = vunpack.c.0.s8 %v3836
        %v3838 = vlaneseq
        %v3839 = vshrl.u32 %v3838, 7
        %v3840 = vsub.s32 %v3837, %v3839
        %v3841 = vrot.slane %v3834, %v3840
        %v3842 = vcombine.low %v3841, %v3841
        %v3843 = vcombine.low %v3672, %v3671
        %v3845 = vunpack.c.l.s4 1983009808
        %v3846 = vunpack.c.0.s8 %v3845
        %v3847 = vlaneseq
        %v3848 = vshrl.u32 %v3847, 7
        %v3849 = vsub.s32 %v3846, %v3848
        %v3850 = vrot.slane %v3843, %v3849
        %v3852 = vunpack.c.l.s4 1983009808
        %v3853 = vunpack.c.0.s8 %v3852
        %v3854 = vlaneseq
        %v3855 = vshrl.u32 %v3854, 7
        %v3856 = vsub.s32 %v3853, %v3855
        %v3857 = vrot.slane %v3673, %v3856
        %v3858 = vcombine.low %v3850, %v3857
        %v3859 = vcombine.low %v3681, %v3689
        %v3861 = vunpack.c.l.s4 1983009808
        %v3862 = vunpack.c.0.s8 %v3861
        %v3863 = vlaneseq
        %v3864 = vshrl.u32 %v3863, 7
        %v3865 = vsub.s32 %v3862, %v3864
        %v3866 = vrot.slane %v3859, %v3865
        %v3867 = vcombine.low %v3866, %v3866
        %v3868 = vcombine.low %v3688, %v3690
        %v3870 = vunpack.c.l.s4 1983009808
        %v3871 = vunpack.c.0.s8 %v3870
        %v3872 = vlaneseq
        %v3873 = vshrl.u32 %v3872, 7
        %v3874 = vsub.s32 %v3871, %v3873
        %v3875 = vrot.slane %v3868, %v3874
        %v3877 = vunpack.c.l.s4 1983009808
        %v3878 = vunpack.c.0.s8 %v3877
        %v3879 = vlaneseq
        %v3880 = vshrl.u32 %v3879, 7
        %v3881 = vsub.s32 %v3878, %v3880
        %v3882 = vrot.slane %v3698, %v3881
        %v3883 = vcombine.low %v3875, %v3882
        %v3884 = vcombine.low %v3706, %v3705
        %v3886 = vunpack.c.l.s4 1983009808
        %v3887 = vunpack.c.0.s8 %v3886
        %v3888 = vlaneseq
        %v3889 = vshrl.u32 %v3888, 7
        %v3890 = vsub.s32 %v3887, %v3889
        %v3891 = vrot.slane %v3884, %v3890
        %v3892 = vcombine.low %v3891, %v3891
        %v3893 = vcombine.low %v3707, %v3715
        %v3895 = vunpack.c.l.s4 1983009808
        %v3896 = vunpack.c.0.s8 %v3895
        %v3897 = vlaneseq
        %v3898 = vshrl.u32 %v3897, 7
        %v3899 = vsub.s32 %v3896, %v3898
        %v3900 = vrot.slane %v3893, %v3899
        %v3902 = vunpack.c.l.s4 1983009808
        %v3903 = vunpack.c.0.s8 %v3902
        %v3904 = vlaneseq
        %v3905 = vshrl.u32 %v3904, 7
        %v3906 = vsub.s32 %v3903, %v3905
        %v3907 = vrot.slane %v3723, %v3906
        %v3908 = vcombine.low %v3900, %v3907
        %v3909 = vcombine.low %v3722, %v3724
        %v3911 = vunpack.c.l.s4 1983009808
        %v3912 = vunpack.c.0.s8 %v3911
        %v3913 = vlaneseq
        %v3914 = vshrl.u32 %v3913, 7
        %v3915 = vsub.s32 %v3912, %v3914
        %v3916 = vrot.slane %v3909, %v3915
        %v3917 = vcombine.low %v3916, %v3916
        %v3918 = vcombine.low %v3732, %v3740
        %v3920 = vunpack.c.l.s4 1983009808
        %v3921 = vunpack.c.0.s8 %v3920
        %v3922 = vlaneseq
        %v3923 = vshrl.u32 %v3922, 7
        %v3924 = vsub.s32 %v3921, %v3923
        %v3925 = vrot.slane %v3918, %v3924
        %v3927 = vunpack.c.l.s4 1983009808
        %v3928 = vunpack.c.0.s8 %v3927
        %v3929 = vlaneseq
        %v3930 = vshrl.u32 %v3929, 7
        %v3931 = vsub.s32 %v3928, %v3930
        %v3932 = vrot.slane %v3739, %v3931
        %v3933 = vcombine.low %v3925, %v3932
        %v3934 = vcombine.low %v3741, %v3749
        %v3936 = vunpack.c.l.s4 1983009808
        %v3937 = vunpack.c.0.s8 %v3936
        %v3938 = vlaneseq
        %v3939 = vshrl.u32 %v3938, 7
        %v3940 = vsub.s32 %v3937, %v3939
        %v3941 = vrot.slane %v3934, %v3940
        %v3942 = vcombine.low %v3941, %v3941
        %v3943 = vcombine.low %v3757, %v3756
        %v3945 = vunpack.c.l.s4 1983009808
        %v3946 = vunpack.c.0.s8 %v3945
        %v3947 = vlaneseq
        %v3948 = vshrl.u32 %v3947, 7
        %v3949 = vsub.s32 %v3946, %v3948
        %v3950 = vrot.slane %v3943, %v3949
        %v3952 = vunpack.c.l.s4 1983009808
        %v3953 = vunpack.c.0.s8 %v3952
        %v3954 = vlaneseq
        %v3955 = vshrl.u32 %v3954, 7
        %v3956 = vsub.s32 %v3953, %v3955
        %v3957 = vrot.slane %v3758, %v3956
        %v3958 = vcombine.low %v3950, %v3957
        %vm3967 = vcmask 1043456
        %v3968 = vsel %vm3967, 0.0, %v3767
        %v3969 = vsel %vm3967, 0.0, %v3792
        %v3970 = vsel %vm3967, 0.0, %v3817
        %v3971 = vsel %vm3967, 0.0, %v3842
        %v3972 = vsel %vm3967, 0.0, %v3867
        %v3973 = vsel %vm3967, 0.0, %v3892
        %v3974 = vsel %vm3967, 0.0, %v3917
        %v3975 = vsel %vm3967, 0.0, %v3942
        %v3984 = vrot.slane %v3968, 2
        %v3985 = vrot.slane %v3783, 2
        %v3986 = vsel %vm476, %v3984, %v3985
        %v3987 = vrot.slane %v3969, 2
        %v3988 = vrot.slane %v3808, 2
        %v3989 = vsel %vm476, %v3987, %v3988
        %v3990 = vrot.slane %v3970, 2
        %v3991 = vrot.slane %v3833, 2
        %v3992 = vsel %vm476, %v3990, %v3991
        %v3993 = vrot.slane %v3971, 2
        %v3994 = vrot.slane %v3858, 2
        %v3995 = vsel %vm476, %v3993, %v3994
        %v3996 = vrot.slane %v3972, 2
        %v3997 = vrot.slane %v3883, 2
        %v3998 = vsel %vm476, %v3996, %v3997
        %v3999 = vrot.slane %v3973, 2
        %v4000 = vrot.slane %v3908, 2
        %v4001 = vsel %vm476, %v3999, %v4000
        %v4002 = vrot.slane %v3974, 2
        %v4003 = vrot.slane %v3933, 2
        %v4004 = vsel %vm476, %v4002, %v4003
        %v4005 = vrot.slane %v3975, 2
        %v4006 = vrot.slane %v3958, 2
        %v4007 = vsel %vm476, %v4005, %v4006
        %v4008 = vrot.slane %v3968, 4
        %v4009 = vrot.slane %v3783, 4
        %v4010 = vsel %vm3967, %v4008, %v4009
        %v4011 = vrot.slane %v3969, 4
        %v4012 = vrot.slane %v3808, 4
        %v4013 = vsel %vm3967, %v4011, %v4012
        %v4014 = vrot.slane %v3970, 4
        %v4015 = vrot.slane %v3833, 4
        %v4016 = vsel %vm3967, %v4014, %v4015
        %v4017 = vrot.slane %v3971, 4
        %v4018 = vrot.slane %v3858, 4
        %v4019 = vsel %vm3967, %v4017, %v4018
        %v4020 = vrot.slane %v3972, 4
        %v4021 = vrot.slane %v3883, 4
        %v4022 = vsel %vm3967, %v4020, %v4021
        %v4023 = vrot.slane %v3973, 4
        %v4024 = vrot.slane %v3908, 4
        %v4025 = vsel %vm3967, %v4023, %v4024
        %v4026 = vrot.slane %v3974, 4
        %v4027 = vrot.slane %v3933, 4
        %v4028 = vsel %vm3967, %v4026, %v4027
        %v4029 = vrot.slane %v3975, 4
        %v4030 = vrot.slane %v3958, 4
        %v4031 = vsel %vm3967, %v4029, %v4030
        %v4032 = vcombine.low %v3968, %v3986
        %v4033 = vcombine.high %v3968, %v3986
        %v4034 = vcombine.high %v4010, %v4010
        %v4036 = vunpack.c.l.s4 1983009808
        %v4037 = vunpack.c.0.s8 %v4036
        %v4038 = vlaneseq
        %v4039 = vshrl.u32 %v4038, 7
        %v4040 = vsub.s32 %v4037, %v4039
        %v4041 = vrot.slane %v4032, %v4040
        %v4043 = vunpack.c.l.s4 1983009808
        %v4044 = vunpack.c.0.s8 %v4043
        %v4045 = vlaneseq
        %v4046 = vshrl.u32 %v4045, 7
        %v4047 = vsub.s32 %v4044, %v4046
        %v4048 = vrot.slane %v4033, %v4047
        %v4050 = vunpack.c.l.s4 1983009808
        %v4051 = vunpack.c.0.s8 %v4050
        %v4052 = vlaneseq
        %v4053 = vshrl.u32 %v4052, 7
        %v4054 = vsub.s32 %v4051, %v4053
        %v4055 = vrot.slane %v4010, %v4054
        %v4057 = vunpack.c.l.s4 1983009808
        %v4058 = vunpack.c.0.s8 %v4057
        %v4059 = vlaneseq
        %v4060 = vshrl.u32 %v4059, 7
        %v4061 = vsub.s32 %v4058, %v4060
        %v4062 = vrot.slane %v4034, %v4061
        %v4063 = vcombine.low %v4041, %v4055
        %v4064 = vcombine.high %v4041, %v4055
        %v4065 = vcombine.low %v4048, %v4062
        %v4066 = vcombine.high %v4048, %v4062
        %v4067 = vcombine.low %v3783, %v3985
        %v4069 = vunpack.c.l.s4 1983009808
        %v4070 = vunpack.c.0.s8 %v4069
        %v4071 = vlaneseq
        %v4072 = vshrl.u32 %v4071, 7
        %v4073 = vsub.s32 %v4070, %v4072
        %v4074 = vrot.slane %v4067, %v4073
        %v4076 = vunpack.c.l.s4 1983009808
        %v4077 = vunpack.c.0.s8 %v4076
        %v4078 = vlaneseq
        %v4079 = vshrl.u32 %v4078, 7
        %v4080 = vsub.s32 %v4077, %v4079
        %v4081 = vrot.slane %v4009, %v4080
        %v4082 = vcombine.low %v4074, %v4081
        %v4083 = vcombine.low %v3969, %v3989
        %v4084 = vcombine.high %v3969, %v3989
        %v4085 = vcombine.high %v4013, %v4013
        %v4087 = vunpack.c.l.s4 1983009808
        %v4088 = vunpack.c.0.s8 %v4087
        %v4089 = vlaneseq
        %v4090 = vshrl.u32 %v4089, 7
        %v4091 = vsub.s32 %v4088, %v4090
        %v4092 = vrot.slane %v4083, %v4091
        %v4094 = vunpack.c.l.s4 1983009808
        %v4095 = vunpack.c.0.s8 %v4094
        %v4096 = vlaneseq
        %v4097 = vshrl.u32 %v4096, 7
        %v4098 = vsub.s32 %v4095, %v4097
        %v4099 = vrot.slane %v4084, %v4098
        %v4101 = vunpack.c.l.s4 1983009808
        %v4102 = vunpack.c.0.s8 %v4101
        %v4103 = vlaneseq
        %v4104 = vshrl.u32 %v4103, 7
        %v4105 = vsub.s32 %v4102, %v4104
        %v4106 = vrot.slane %v4013, %v4105
        %v4108 = vunpack.c.l.s4 1983009808
        %v4109 = vunpack.c.0.s8 %v4108
        %v4110 = vlaneseq
        %v4111 = vshrl.u32 %v4110, 7
        %v4112 = vsub.s32 %v4109, %v4111
        %v4113 = vrot.slane %v4085, %v4112
        %v4114 = vcombine.low %v4092, %v4106
        %v4115 = vcombine.high %v4092, %v4106
        %v4116 = vcombine.low %v4099, %v4113
        %v4117 = vcombine.high %v4099, %v4113
        %v4118 = vcombine.low %v3808, %v3988
        %v4120 = vunpack.c.l.s4 1983009808
        %v4121 = vunpack.c.0.s8 %v4120
        %v4122 = vlaneseq
        %v4123 = vshrl.u32 %v4122, 7
        %v4124 = vsub.s32 %v4121, %v4123
        %v4125 = vrot.slane %v4118, %v4124
        %v4127 = vunpack.c.l.s4 1983009808
        %v4128 = vunpack.c.0.s8 %v4127
        %v4129 = vlaneseq
        %v4130 = vshrl.u32 %v4129, 7
        %v4131 = vsub.s32 %v4128, %v4130
        %v4132 = vrot.slane %v4012, %v4131
        %v4133 = vcombine.low %v4125, %v4132
        %v4134 = vcombine.low %v3970, %v3992
        %v4135 = vcombine.high %v3970, %v3992
        %v4136 = vcombine.high %v4016, %v4016
        %v4138 = vunpack.c.l.s4 1983009808
        %v4139 = vunpack.c.0.s8 %v4138
        %v4140 = vlaneseq
        %v4141 = vshrl.u32 %v4140, 7
        %v4142 = vsub.s32 %v4139, %v4141
        %v4143 = vrot.slane %v4134, %v4142
        %v4145 = vunpack.c.l.s4 1983009808
        %v4146 = vunpack.c.0.s8 %v4145
        %v4147 = vlaneseq
        %v4148 = vshrl.u32 %v4147, 7
        %v4149 = vsub.s32 %v4146, %v4148
        %v4150 = vrot.slane %v4135, %v4149
        %v4152 = vunpack.c.l.s4 1983009808
        %v4153 = vunpack.c.0.s8 %v4152
        %v4154 = vlaneseq
        %v4155 = vshrl.u32 %v4154, 7
        %v4156 = vsub.s32 %v4153, %v4155
        %v4157 = vrot.slane %v4016, %v4156
        %v4159 = vunpack.c.l.s4 1983009808
        %v4160 = vunpack.c.0.s8 %v4159
        %v4161 = vlaneseq
        %v4162 = vshrl.u32 %v4161, 7
        %v4163 = vsub.s32 %v4160, %v4162
        %v4164 = vrot.slane %v4136, %v4163
        %v4165 = vcombine.low %v4143, %v4157
        %v4166 = vcombine.high %v4143, %v4157
        %v4167 = vcombine.low %v4150, %v4164
        %v4168 = vcombine.high %v4150, %v4164
        %v4169 = vcombine.low %v3833, %v3991
        %v4171 = vunpack.c.l.s4 1983009808
        %v4172 = vunpack.c.0.s8 %v4171
        %v4173 = vlaneseq
        %v4174 = vshrl.u32 %v4173, 7
        %v4175 = vsub.s32 %v4172, %v4174
        %v4176 = vrot.slane %v4169, %v4175
        %v4178 = vunpack.c.l.s4 1983009808
        %v4179 = vunpack.c.0.s8 %v4178
        %v4180 = vlaneseq
        %v4181 = vshrl.u32 %v4180, 7
        %v4182 = vsub.s32 %v4179, %v4181
        %v4183 = vrot.slane %v4015, %v4182
        %v4184 = vcombine.low %v4176, %v4183
        %v4185 = vcombine.low %v3971, %v3995
        %v4186 = vcombine.high %v3971, %v3995
        %v4187 = vcombine.high %v4019, %v4019
        %v4189 = vunpack.c.l.s4 1983009808
        %v4190 = vunpack.c.0.s8 %v4189
        %v4191 = vlaneseq
        %v4192 = vshrl.u32 %v4191, 7
        %v4193 = vsub.s32 %v4190, %v4192
        %v4194 = vrot.slane %v4185, %v4193
        %v4196 = vunpack.c.l.s4 1983009808
        %v4197 = vunpack.c.0.s8 %v4196
        %v4198 = vlaneseq
        %v4199 = vshrl.u32 %v4198, 7
        %v4200 = vsub.s32 %v4197, %v4199
        %v4201 = vrot.slane %v4186, %v4200
        %v4203 = vunpack.c.l.s4 1983009808
        %v4204 = vunpack.c.0.s8 %v4203
        %v4205 = vlaneseq
        %v4206 = vshrl.u32 %v4205, 7
        %v4207 = vsub.s32 %v4204, %v4206
        %v4208 = vrot.slane %v4019, %v4207
        %v4210 = vunpack.c.l.s4 1983009808
        %v4211 = vunpack.c.0.s8 %v4210
        %v4212 = vlaneseq
        %v4213 = vshrl.u32 %v4212, 7
        %v4214 = vsub.s32 %v4211, %v4213
        %v4215 = vrot.slane %v4187, %v4214
        %v4216 = vcombine.low %v4194, %v4208
        %v4217 = vcombine.high %v4194, %v4208
        %v4218 = vcombine.low %v4201, %v4215
        %v4219 = vcombine.high %v4201, %v4215
        %v4220 = vcombine.low %v3858, %v3994
        %v4222 = vunpack.c.l.s4 1983009808
        %v4223 = vunpack.c.0.s8 %v4222
        %v4224 = vlaneseq
        %v4225 = vshrl.u32 %v4224, 7
        %v4226 = vsub.s32 %v4223, %v4225
        %v4227 = vrot.slane %v4220, %v4226
        %v4229 = vunpack.c.l.s4 1983009808
        %v4230 = vunpack.c.0.s8 %v4229
        %v4231 = vlaneseq
        %v4232 = vshrl.u32 %v4231, 7
        %v4233 = vsub.s32 %v4230, %v4232
        %v4234 = vrot.slane %v4018, %v4233
        %v4235 = vcombine.low %v4227, %v4234
        %v4236 = vcombine.low %v3972, %v3998
        %v4237 = vcombine.high %v3972, %v3998
        %v4238 = vcombine.high %v4022, %v4022
        %v4240 = vunpack.c.l.s4 1983009808
        %v4241 = vunpack.c.0.s8 %v4240
        %v4242 = vlaneseq
        %v4243 = vshrl.u32 %v4242, 7
        %v4244 = vsub.s32 %v4241, %v4243
        %v4245 = vrot.slane %v4236, %v4244
        %v4247 = vunpack.c.l.s4 1983009808
        %v4248 = vunpack.c.0.s8 %v4247
        %v4249 = vlaneseq
        %v4250 = vshrl.u32 %v4249, 7
        %v4251 = vsub.s32 %v4248, %v4250
        %v4252 = vrot.slane %v4237, %v4251
        %v4254 = vunpack.c.l.s4 1983009808
        %v4255 = vunpack.c.0.s8 %v4254
        %v4256 = vlaneseq
        %v4257 = vshrl.u32 %v4256, 7
        %v4258 = vsub.s32 %v4255, %v4257
        %v4259 = vrot.slane %v4022, %v4258
        %v4261 = vunpack.c.l.s4 1983009808
        %v4262 = vunpack.c.0.s8 %v4261
        %v4263 = vlaneseq
        %v4264 = vshrl.u32 %v4263, 7
        %v4265 = vsub.s32 %v4262, %v4264
        %v4266 = vrot.slane %v4238, %v4265
        %v4267 = vcombine.low %v4245, %v4259
        %v4268 = vcombine.high %v4245, %v4259
        %v4269 = vcombine.low %v4252, %v4266
        %v4270 = vcombine.high %v4252, %v4266
        %v4271 = vcombine.low %v3883, %v3997
        %v4273 = vunpack.c.l.s4 1983009808
        %v4274 = vunpack.c.0.s8 %v4273
        %v4275 = vlaneseq
        %v4276 = vshrl.u32 %v4275, 7
        %v4277 = vsub.s32 %v4274, %v4276
        %v4278 = vrot.slane %v4271, %v4277
        %v4280 = vunpack.c.l.s4 1983009808
        %v4281 = vunpack.c.0.s8 %v4280
        %v4282 = vlaneseq
        %v4283 = vshrl.u32 %v4282, 7
        %v4284 = vsub.s32 %v4281, %v4283
        %v4285 = vrot.slane %v4021, %v4284
        %v4286 = vcombine.low %v4278, %v4285
        %v4287 = vcombine.low %v3973, %v4001
        %v4288 = vcombine.high %v3973, %v4001
        %v4289 = vcombine.high %v4025, %v4025
        %v4291 = vunpack.c.l.s4 1983009808
        %v4292 = vunpack.c.0.s8 %v4291
        %v4293 = vlaneseq
        %v4294 = vshrl.u32 %v4293, 7
        %v4295 = vsub.s32 %v4292, %v4294
        %v4296 = vrot.slane %v4287, %v4295
        %v4298 = vunpack.c.l.s4 1983009808
        %v4299 = vunpack.c.0.s8 %v4298
        %v4300 = vlaneseq
        %v4301 = vshrl.u32 %v4300, 7
        %v4302 = vsub.s32 %v4299, %v4301
        %v4303 = vrot.slane %v4288, %v4302
        %v4305 = vunpack.c.l.s4 1983009808
        %v4306 = vunpack.c.0.s8 %v4305
        %v4307 = vlaneseq
        %v4308 = vshrl.u32 %v4307, 7
        %v4309 = vsub.s32 %v4306, %v4308
        %v4310 = vrot.slane %v4025, %v4309
        %v4312 = vunpack.c.l.s4 1983009808
        %v4313 = vunpack.c.0.s8 %v4312
        %v4314 = vlaneseq
        %v4315 = vshrl.u32 %v4314, 7
        %v4316 = vsub.s32 %v4313, %v4315
        %v4317 = vrot.slane %v4289, %v4316
        %v4318 = vcombine.low %v4296, %v4310
        %v4319 = vcombine.high %v4296, %v4310
        %v4320 = vcombine.low %v4303, %v4317
        %v4321 = vcombine.high %v4303, %v4317
        %v4322 = vcombine.low %v3908, %v4000
        %v4324 = vunpack.c.l.s4 1983009808
        %v4325 = vunpack.c.0.s8 %v4324
        %v4326 = vlaneseq
        %v4327 = vshrl.u32 %v4326, 7
        %v4328 = vsub.s32 %v4325, %v4327
        %v4329 = vrot.slane %v4322, %v4328
        %v4331 = vunpack.c.l.s4 1983009808
        %v4332 = vunpack.c.0.s8 %v4331
        %v4333 = vlaneseq
        %v4334 = vshrl.u32 %v4333, 7
        %v4335 = vsub.s32 %v4332, %v4334
        %v4336 = vrot.slane %v4024, %v4335
        %v4337 = vcombine.low %v4329, %v4336
        %v4338 = vcombine.low %v3974, %v4004
        %v4339 = vcombine.high %v3974, %v4004
        %v4340 = vcombine.high %v4028, %v4028
        %v4342 = vunpack.c.l.s4 1983009808
        %v4343 = vunpack.c.0.s8 %v4342
        %v4344 = vlaneseq
        %v4345 = vshrl.u32 %v4344, 7
        %v4346 = vsub.s32 %v4343, %v4345
        %v4347 = vrot.slane %v4338, %v4346
        %v4349 = vunpack.c.l.s4 1983009808
        %v4350 = vunpack.c.0.s8 %v4349
        %v4351 = vlaneseq
        %v4352 = vshrl.u32 %v4351, 7
        %v4353 = vsub.s32 %v4350, %v4352
        %v4354 = vrot.slane %v4339, %v4353
        %v4356 = vunpack.c.l.s4 1983009808
        %v4357 = vunpack.c.0.s8 %v4356
        %v4358 = vlaneseq
        %v4359 = vshrl.u32 %v4358, 7
        %v4360 = vsub.s32 %v4357, %v4359
        %v4361 = vrot.slane %v4028, %v4360
        %v4363 = vunpack.c.l.s4 1983009808
        %v4364 = vunpack.c.0.s8 %v4363
        %v4365 = vlaneseq
        %v4366 = vshrl.u32 %v4365, 7
        %v4367 = vsub.s32 %v4364, %v4366
        %v4368 = vrot.slane %v4340, %v4367
        %v4369 = vcombine.low %v4347, %v4361
        %v4370 = vcombine.high %v4347, %v4361
        %v4371 = vcombine.low %v4354, %v4368
        %v4372 = vcombine.high %v4354, %v4368
        %v4373 = vcombine.low %v3933, %v4003
        %v4375 = vunpack.c.l.s4 1983009808
        %v4376 = vunpack.c.0.s8 %v4375
        %v4377 = vlaneseq
        %v4378 = vshrl.u32 %v4377, 7
        %v4379 = vsub.s32 %v4376, %v4378
        %v4380 = vrot.slane %v4373, %v4379
        %v4382 = vunpack.c.l.s4 1983009808
        %v4383 = vunpack.c.0.s8 %v4382
        %v4384 = vlaneseq
        %v4385 = vshrl.u32 %v4384, 7
        %v4386 = vsub.s32 %v4383, %v4385
        %v4387 = vrot.slane %v4027, %v4386
        %v4388 = vcombine.low %v4380, %v4387
        %v4389 = vcombine.low %v3975, %v4007
        %v4390 = vcombine.high %v3975, %v4007
        %v4391 = vcombine.high %v4031, %v4031
        %v4393 = vunpack.c.l.s4 1983009808
        %v4394 = vunpack.c.0.s8 %v4393
        %v4395 = vlaneseq
        %v4396 = vshrl.u32 %v4395, 7
        %v4397 = vsub.s32 %v4394, %v4396
        %v4398 = vrot.slane %v4389, %v4397
        %v4400 = vunpack.c.l.s4 1983009808
        %v4401 = vunpack.c.0.s8 %v4400
        %v4402 = vlaneseq
        %v4403 = vshrl.u32 %v4402, 7
        %v4404 = vsub.s32 %v4401, %v4403
        %v4405 = vrot.slane %v4390, %v4404
        %v4407 = vunpack.c.l.s4 1983009808
        %v4408 = vunpack.c.0.s8 %v4407
        %v4409 = vlaneseq
        %v4410 = vshrl.u32 %v4409, 7
        %v4411 = vsub.s32 %v4408, %v4410
        %v4412 = vrot.slane %v4031, %v4411
        %v4414 = vunpack.c.l.s4 1983009808
        %v4415 = vunpack.c.0.s8 %v4414
        %v4416 = vlaneseq
        %v4417 = vshrl.u32 %v4416, 7
        %v4418 = vsub.s32 %v4415, %v4417
        %v4419 = vrot.slane %v4391, %v4418
        %v4420 = vcombine.low %v4398, %v4412
        %v4421 = vcombine.high %v4398, %v4412
        %v4422 = vcombine.low %v4405, %v4419
        %v4423 = vcombine.high %v4405, %v4419
        %v4424 = vcombine.low %v3958, %v4006
        %v4426 = vunpack.c.l.s4 1983009808
        %v4427 = vunpack.c.0.s8 %v4426
        %v4428 = vlaneseq
        %v4429 = vshrl.u32 %v4428, 7
        %v4430 = vsub.s32 %v4427, %v4429
        %v4431 = vrot.slane %v4424, %v4430
        %v4433 = vunpack.c.l.s4 1983009808
        %v4434 = vunpack.c.0.s8 %v4433
        %v4435 = vlaneseq
        %v4436 = vshrl.u32 %v4435, 7
        %v4437 = vsub.s32 %v4434, %v4436
        %v4438 = vrot.slane %v4030, %v4437
        %v4439 = vcombine.low %v4431, %v4438
        %v4440 = vlaneseq
        %v4441 = vshrl.u32 %v4440, 7
        %v4442 = vsub.s32 2, %v4441
        %v4443 = vrot.slane %v382, %v4442
        %v4444 = vcombine.low %v4063, %v4064
        %v4445 = vcombine.high %v4063, %v4064
        %v4446 = vcombine.low %v4065, %v4066
        %v4447 = vcombine.high %v4065, %v4066
        %v4449 = vunpack.c.l.s4 1983009808
        %v4450 = vunpack.c.0.s8 %v4449
        %v4451 = vlaneseq
        %v4452 = vshrl.u32 %v4451, 7
        %v4453 = vsub.s32 %v4450, %v4452
        %v4454 = vrot.slane %v4444, %v4453
        %v4456 = vunpack.c.l.s4 1983009808
        %v4457 = vunpack.c.0.s8 %v4456
        %v4458 = vlaneseq
        %v4459 = vshrl.u32 %v4458, 7
        %v4460 = vsub.s32 %v4457, %v4459
        %v4461 = vrot.slane %v4445, %v4460
        %v4463 = vunpack.c.l.s4 1983009808
        %v4464 = vunpack.c.0.s8 %v4463
        %v4465 = vlaneseq
        %v4466 = vshrl.u32 %v4465, 7
        %v4467 = vsub.s32 %v4464, %v4466
        %v4468 = vrot.slane %v4446, %v4467
        %v4470 = vunpack.c.l.s4 1983009808
        %v4471 = vunpack.c.0.s8 %v4470
        %v4472 = vlaneseq
        %v4473 = vshrl.u32 %v4472, 7
        %v4474 = vsub.s32 %v4471, %v4473
        %v4475 = vrot.slane %v4447, %v4474
        %v4476 = vcombine.low %v4454, %v4468
        %v4477 = vcombine.high %v4454, %v4468
        %v4478 = vcombine.low %v4461, %v4475
        %v4479 = vcombine.low %v4082, %v4114
        %v4480 = vcombine.high %v4082, %v4114
        %v4481 = vcombine.low %v4115, %v4116
        %v4482 = vcombine.high %v4115, %v4116
        %v4484 = vunpack.c.l.s4 1983009808
        %v4485 = vunpack.c.0.s8 %v4484
        %v4486 = vlaneseq
        %v4487 = vshrl.u32 %v4486, 7
        %v4488 = vsub.s32 %v4485, %v4487
        %v4489 = vrot.slane %v4479, %v4488
        %v4491 = vunpack.c.l.s4 1983009808
        %v4492 = vunpack.c.0.s8 %v4491
        %v4493 = vlaneseq
        %v4494 = vshrl.u32 %v4493, 7
        %v4495 = vsub.s32 %v4492, %v4494
        %v4496 = vrot.slane %v4480, %v4495
        %v4498 = vunpack.c.l.s4 1983009808
        %v4499 = vunpack.c.0.s8 %v4498
        %v4500 = vlaneseq
        %v4501 = vshrl.u32 %v4500, 7
        %v4502 = vsub.s32 %v4499, %v4501
        %v4503 = vrot.slane %v4481, %v4502
        %v4505 = vunpack.c.l.s4 1983009808
        %v4506 = vunpack.c.0.s8 %v4505
        %v4507 = vlaneseq
        %v4508 = vshrl.u32 %v4507, 7
        %v4509 = vsub.s32 %v4506, %v4508
        %v4510 = vrot.slane %v4482, %v4509
        %v4511 = vcombine.low %v4489, %v4503
        %v4512 = vcombine.high %v4489, %v4503
        %v4513 = vcombine.low %v4496, %v4510
        %v4514 = vcombine.low %v4117, %v4133
        %v4515 = vcombine.high %v4117, %v4133
        %v4516 = vcombine.low %v4165, %v4166
        %v4517 = vcombine.high %v4165, %v4166
        %v4519 = vunpack.c.l.s4 1983009808
        %v4520 = vunpack.c.0.s8 %v4519
        %v4521 = vlaneseq
        %v4522 = vshrl.u32 %v4521, 7
        %v4523 = vsub.s32 %v4520, %v4522
        %v4524 = vrot.slane %v4514, %v4523
        %v4526 = vunpack.c.l.s4 1983009808
        %v4527 = vunpack.c.0.s8 %v4526
        %v4528 = vlaneseq
        %v4529 = vshrl.u32 %v4528, 7
        %v4530 = vsub.s32 %v4527, %v4529
        %v4531 = vrot.slane %v4515, %v4530
        %v4533 = vunpack.c.l.s4 1983009808
        %v4534 = vunpack.c.0.s8 %v4533
        %v4535 = vlaneseq
        %v4536 = vshrl.u32 %v4535, 7
        %v4537 = vsub.s32 %v4534, %v4536
        %v4538 = vrot.slane %v4516, %v4537
        %v4540 = vunpack.c.l.s4 1983009808
        %v4541 = vunpack.c.0.s8 %v4540
        %v4542 = vlaneseq
        %v4543 = vshrl.u32 %v4542, 7
        %v4544 = vsub.s32 %v4541, %v4543
        %v4545 = vrot.slane %v4517, %v4544
        %v4546 = vcombine.low %v4524, %v4538
        %v4547 = vcombine.high %v4524, %v4538
        %v4548 = vcombine.low %v4531, %v4545
        %v4549 = vcombine.low %v4167, %v4168
        %v4550 = vcombine.high %v4167, %v4168
        %v4551 = vcombine.low %v4184, %v4216
        %v4552 = vcombine.high %v4184, %v4216
        %v4554 = vunpack.c.l.s4 1983009808
        %v4555 = vunpack.c.0.s8 %v4554
        %v4556 = vlaneseq
        %v4557 = vshrl.u32 %v4556, 7
        %v4558 = vsub.s32 %v4555, %v4557
        %v4559 = vrot.slane %v4549, %v4558
        %v4561 = vunpack.c.l.s4 1983009808
        %v4562 = vunpack.c.0.s8 %v4561
        %v4563 = vlaneseq
        %v4564 = vshrl.u32 %v4563, 7
        %v4565 = vsub.s32 %v4562, %v4564
        %v4566 = vrot.slane %v4550, %v4565
        %v4568 = vunpack.c.l.s4 1983009808
        %v4569 = vunpack.c.0.s8 %v4568
        %v4570 = vlaneseq
        %v4571 = vshrl.u32 %v4570, 7
        %v4572 = vsub.s32 %v4569, %v4571
        %v4573 = vrot.slane %v4551, %v4572
        %v4575 = vunpack.c.l.s4 1983009808
        %v4576 = vunpack.c.0.s8 %v4575
        %v4577 = vlaneseq
        %v4578 = vshrl.u32 %v4577, 7
        %v4579 = vsub.s32 %v4576, %v4578
        %v4580 = vrot.slane %v4552, %v4579
        %v4581 = vcombine.low %v4559, %v4573
        %v4582 = vcombine.high %v4559, %v4573
        %v4583 = vcombine.low %v4566, %v4580
        %v4584 = vcombine.low %v4217, %v4218
        %v4585 = vcombine.high %v4217, %v4218
        %v4586 = vcombine.low %v4219, %v4235
        %v4587 = vcombine.high %v4219, %v4235
        %v4589 = vunpack.c.l.s4 1983009808
        %v4590 = vunpack.c.0.s8 %v4589
        %v4591 = vlaneseq
        %v4592 = vshrl.u32 %v4591, 7
        %v4593 = vsub.s32 %v4590, %v4592
        %v4594 = vrot.slane %v4584, %v4593
        %v4596 = vunpack.c.l.s4 1983009808
        %v4597 = vunpack.c.0.s8 %v4596
        %v4598 = vlaneseq
        %v4599 = vshrl.u32 %v4598, 7
        %v4600 = vsub.s32 %v4597, %v4599
        %v4601 = vrot.slane %v4585, %v4600
        %v4603 = vunpack.c.l.s4 1983009808
        %v4604 = vunpack.c.0.s8 %v4603
        %v4605 = vlaneseq
        %v4606 = vshrl.u32 %v4605, 7
        %v4607 = vsub.s32 %v4604, %v4606
        %v4608 = vrot.slane %v4586, %v4607
        %v4610 = vunpack.c.l.s4 1983009808
        %v4611 = vunpack.c.0.s8 %v4610
        %v4612 = vlaneseq
        %v4613 = vshrl.u32 %v4612, 7
        %v4614 = vsub.s32 %v4611, %v4613
        %v4615 = vrot.slane %v4587, %v4614
        %v4616 = vcombine.low %v4594, %v4608
        %v4617 = vcombine.high %v4594, %v4608
        %v4618 = vcombine.low %v4601, %v4615
        %v4619 = vcombine.low %v4267, %v4268
        %v4620 = vcombine.high %v4267, %v4268
        %v4621 = vcombine.low %v4269, %v4270
        %v4622 = vcombine.high %v4269, %v4270
        %v4624 = vunpack.c.l.s4 1983009808
        %v4625 = vunpack.c.0.s8 %v4624
        %v4626 = vlaneseq
        %v4627 = vshrl.u32 %v4626, 7
        %v4628 = vsub.s32 %v4625, %v4627
        %v4629 = vrot.slane %v4619, %v4628
        %v4631 = vunpack.c.l.s4 1983009808
        %v4632 = vunpack.c.0.s8 %v4631
        %v4633 = vlaneseq
        %v4634 = vshrl.u32 %v4633, 7
        %v4635 = vsub.s32 %v4632, %v4634
        %v4636 = vrot.slane %v4620, %v4635
        %v4638 = vunpack.c.l.s4 1983009808
        %v4639 = vunpack.c.0.s8 %v4638
        %v4640 = vlaneseq
        %v4641 = vshrl.u32 %v4640, 7
        %v4642 = vsub.s32 %v4639, %v4641
        %v4643 = vrot.slane %v4621, %v4642
        %v4645 = vunpack.c.l.s4 1983009808
        %v4646 = vunpack.c.0.s8 %v4645
        %v4647 = vlaneseq
        %v4648 = vshrl.u32 %v4647, 7
        %v4649 = vsub.s32 %v4646, %v4648
        %v4650 = vrot.slane %v4622, %v4649
        %v4651 = vcombine.low %v4629, %v4643
        %v4652 = vcombine.high %v4629, %v4643
        %v4653 = vcombine.low %v4636, %v4650
        %v4654 = vcombine.low %v4286, %v4318
        %v4655 = vcombine.high %v4286, %v4318
        %v4656 = vcombine.low %v4319, %v4320
        %v4657 = vcombine.high %v4319, %v4320
        %v4659 = vunpack.c.l.s4 1983009808
        %v4660 = vunpack.c.0.s8 %v4659
        %v4661 = vlaneseq
        %v4662 = vshrl.u32 %v4661, 7
        %v4663 = vsub.s32 %v4660, %v4662
        %v4664 = vrot.slane %v4654, %v4663
        %v4666 = vunpack.c.l.s4 1983009808
        %v4667 = vunpack.c.0.s8 %v4666
        %v4668 = vlaneseq
        %v4669 = vshrl.u32 %v4668, 7
        %v4670 = vsub.s32 %v4667, %v4669
        %v4671 = vrot.slane %v4655, %v4670
        %v4673 = vunpack.c.l.s4 1983009808
        %v4674 = vunpack.c.0.s8 %v4673
        %v4675 = vlaneseq
        %v4676 = vshrl.u32 %v4675, 7
        %v4677 = vsub.s32 %v4674, %v4676
        %v4678 = vrot.slane %v4656, %v4677
        %v4680 = vunpack.c.l.s4 1983009808
        %v4681 = vunpack.c.0.s8 %v4680
        %v4682 = vlaneseq
        %v4683 = vshrl.u32 %v4682, 7
        %v4684 = vsub.s32 %v4681, %v4683
        %v4685 = vrot.slane %v4657, %v4684
        %v4686 = vcombine.low %v4664, %v4678
        %v4687 = vcombine.high %v4664, %v4678
        %v4688 = vcombine.low %v4671, %v4685
        %v4689 = vcombine.low %v4321, %v4337
        %v4690 = vcombine.high %v4321, %v4337
        %v4691 = vcombine.low %v4369, %v4370
        %v4692 = vcombine.high %v4369, %v4370
        %v4694 = vunpack.c.l.s4 1983009808
        %v4695 = vunpack.c.0.s8 %v4694
        %v4696 = vlaneseq
        %v4697 = vshrl.u32 %v4696, 7
        %v4698 = vsub.s32 %v4695, %v4697
        %v4699 = vrot.slane %v4689, %v4698
        %v4701 = vunpack.c.l.s4 1983009808
        %v4702 = vunpack.c.0.s8 %v4701
        %v4703 = vlaneseq
        %v4704 = vshrl.u32 %v4703, 7
        %v4705 = vsub.s32 %v4702, %v4704
        %v4706 = vrot.slane %v4690, %v4705
        %v4708 = vunpack.c.l.s4 1983009808
        %v4709 = vunpack.c.0.s8 %v4708
        %v4710 = vlaneseq
        %v4711 = vshrl.u32 %v4710, 7
        %v4712 = vsub.s32 %v4709, %v4711
        %v4713 = vrot.slane %v4691, %v4712
        %v4715 = vunpack.c.l.s4 1983009808
        %v4716 = vunpack.c.0.s8 %v4715
        %v4717 = vlaneseq
        %v4718 = vshrl.u32 %v4717, 7
        %v4719 = vsub.s32 %v4716, %v4718
        %v4720 = vrot.slane %v4692, %v4719
        %v4721 = vcombine.low %v4699, %v4713
        %v4722 = vcombine.high %v4699, %v4713
        %v4723 = vcombine.low %v4706, %v4720
        %v4724 = vcombine.low %v4371, %v4372
        %v4725 = vcombine.high %v4371, %v4372
        %v4726 = vcombine.low %v4388, %v4420
        %v4727 = vcombine.high %v4388, %v4420
        %v4729 = vunpack.c.l.s4 1983009808
        %v4730 = vunpack.c.0.s8 %v4729
        %v4731 = vlaneseq
        %v4732 = vshrl.u32 %v4731, 7
        %v4733 = vsub.s32 %v4730, %v4732
        %v4734 = vrot.slane %v4724, %v4733
        %v4736 = vunpack.c.l.s4 1983009808
        %v4737 = vunpack.c.0.s8 %v4736
        %v4738 = vlaneseq
        %v4739 = vshrl.u32 %v4738, 7
        %v4740 = vsub.s32 %v4737, %v4739
        %v4741 = vrot.slane %v4725, %v4740
        %v4743 = vunpack.c.l.s4 1983009808
        %v4744 = vunpack.c.0.s8 %v4743
        %v4745 = vlaneseq
        %v4746 = vshrl.u32 %v4745, 7
        %v4747 = vsub.s32 %v4744, %v4746
        %v4748 = vrot.slane %v4726, %v4747
        %v4750 = vunpack.c.l.s4 1983009808
        %v4751 = vunpack.c.0.s8 %v4750
        %v4752 = vlaneseq
        %v4753 = vshrl.u32 %v4752, 7
        %v4754 = vsub.s32 %v4751, %v4753
        %v4755 = vrot.slane %v4727, %v4754
        %v4756 = vcombine.low %v4734, %v4748
        %v4757 = vcombine.high %v4734, %v4748
        %v4758 = vcombine.low %v4741, %v4755
        %v4759 = vcombine.low %v4421, %v4422
        %v4760 = vcombine.high %v4421, %v4422
        %v4761 = vcombine.low %v4423, %v4439
        %v4762 = vcombine.high %v4423, %v4439
        %v4764 = vunpack.c.l.s4 1983009808
        %v4765 = vunpack.c.0.s8 %v4764
        %v4766 = vlaneseq
        %v4767 = vshrl.u32 %v4766, 7
        %v4768 = vsub.s32 %v4765, %v4767
        %v4769 = vrot.slane %v4759, %v4768
        %v4771 = vunpack.c.l.s4 1983009808
        %v4772 = vunpack.c.0.s8 %v4771
        %v4773 = vlaneseq
        %v4774 = vshrl.u32 %v4773, 7
        %v4775 = vsub.s32 %v4772, %v4774
        %v4776 = vrot.slane %v4760, %v4775
        %v4778 = vunpack.c.l.s4 1983009808
        %v4779 = vunpack.c.0.s8 %v4778
        %v4780 = vlaneseq
        %v4781 = vshrl.u32 %v4780, 7
        %v4782 = vsub.s32 %v4779, %v4781
        %v4783 = vrot.slane %v4761, %v4782
        %v4785 = vunpack.c.l.s4 1983009808
        %v4786 = vunpack.c.0.s8 %v4785
        %v4787 = vlaneseq
        %v4788 = vshrl.u32 %v4787, 7
        %v4789 = vsub.s32 %v4786, %v4788
        %v4790 = vrot.slane %v4762, %v4789
        %v4791 = vcombine.low %v4769, %v4783
        %v4792 = vcombine.high %v4769, %v4783
        %v4793 = vcombine.low %v4776, %v4790
        %4824 = vmatprep.subr.mxu0 0.0
        %4825 = vmatpush1.msra.mxu0 %v318
        %4826 = vmatprep.subr.mxu0 0.0
        %4827 = vmatpush1.msra.mxu0 %v319
        %4828 = vmatprep.subr.mxu0 0.0
        %4829 = vmatpush1.msra.mxu0 %v320
        %4830 = vmatprep.subr.mxu0 0.0
        %4831 = vmatpush1.msra.mxu0 %v321
        %4832 = vmatprep.subr.mxu0 0.0
        %4833 = vmatpush1.msra.mxu0 %v322
        %4834 = vmatprep.subr.mxu0 0.0
        %4835 = vmatpush1.msra.mxu0 %v323
        %4836 = vmatprep.subr.mxu0 0.0
        %4837 = vmatpush1.msra.mxu0 %v324
        %4838 = vmatprep.subr.mxu0 0.0
        %4839 = vmatpush1.msra.mxu0 %v325
        %4840 = vmatprep.subr.mxu0 0.0
        %4841 = vmatpush1.msra.mxu0 %v326
        %4842 = vmatprep.subr.mxu0 0.0
        %4843 = vmatpush1.msra.mxu0 %v327
        %4844 = vmatprep.subr.mxu0 0.0
        %4845 = vmatpush1.msra.mxu0 %v328
        %4846 = vmatprep.subr.mxu0 0.0
        %4847 = vmatpush1.msra.mxu0 %v329
        %4848 = vmatprep.subr.mxu0 0.0
        %4849 = vmatpush1.msra.mxu0 %v330
        %4850 = vmatprep.subr.mxu0 0.0
        %4851 = vmatpush1.msra.mxu0 %v331
        %4852 = vmatprep.subr.mxu0 0.0
        %4853 = vmatpush1.msra.mxu0 %v332
        %4854 = vmatprep.subr.mxu0 0.0
        %4855 = vmatpush1.msra.mxu0 %v333
        %4856 = vmatprep.subr.mxu0 0.0
        %4857 = vmatpush1.msra.mxu0 %v334
        %4858 = vmatprep.subr.mxu0 0.0
        %4859 = vmatpush1.msra.mxu0 %v335
        %4860 = vmatprep.subr.mxu0 0.0
        %4861 = vmatpush1.msra.mxu0 %v336
        %4862 = vmatprep.subr.mxu0 0.0
        %4863 = vmatpush1.msra.mxu0 %v337
        %4864 = vmatprep.subr.mxu0 0.0
        %4865 = vmatpush1.msra.mxu0 %v338
        %4866 = vmatprep.subr.mxu0 0.0
        %4867 = vmatpush1.msra.mxu0 %v339
        %4868 = vmatprep.subr.mxu0 0.0
        %4869 = vmatpush1.msra.mxu0 %v340
        %4870 = vmatprep.subr.mxu0 0.0
        %4871 = vmatpush1.msra.mxu0 %v341
        %4872 = vmatprep.subr.mxu0 0.0
        %4873 = vmatpush1.msra.mxu0 %v342
        %4874 = vmatprep.subr.mxu0 0.0
        %4875 = vmatpush1.msra.mxu0 %v343
        %4876 = vmatprep.subr.mxu0 0.0
        %4877 = vmatpush1.msra.mxu0 %v344
        %4878 = vmatprep.subr.mxu0 0.0
        %4879 = vmatpush1.msra.mxu0 %v345
        %4880 = vmatprep.subr.mxu0 0.0
        %4881 = vmatpush1.msra.mxu0 %v346
        %4882 = vmatprep.subr.mxu0 0.0
        %4883 = vmatpush1.msra.mxu0 %v347
        %4884 = vmatprep.subr.mxu0 0.0
        %4885 = vmatpush1.msra.mxu0 %v348
        %4886 = vmatprep.subr.mxu0 0.0
        %4887 = vmatpush1.msra.mxu0 %v349
        %4888 = vmatprep.mubr.f32.mxu0 %v4477
        %4889 = vmatmul.mubr.f32.gmra.mrb[0].mxu0 %v4476
        %v4890 = vpop.f32.mrb[0].mxu0
        %v4891 = vadd.f32 %v4443, %v4890
        %v4892 = vpop.f32.mrb[0].mxu0
        %4893 = vmatprep.mubr.f32.mxu0 %v4512
        %4894 = vmatmul.mubr.f32.gmra.mrb[0].mxu0 %v4511
        %v4895 = vpop.f32.mrb[0].mxu0
        %v4896 = vadd.f32 %v4443, %v4895
        %v4897 = vpop.f32.mrb[0].mxu0
        %4898 = vmatprep.mubr.f32.mxu0 %v4547
        %4899 = vmatmul.mubr.f32.gmra.mrb[0].mxu0 %v4546
        %v4900 = vpop.f32.mrb[0].mxu0
        %v4901 = vadd.f32 %v4443, %v4900
        %v4902 = vpop.f32.mrb[0].mxu0
        %4903 = vmatprep.mubr.f32.mxu0 %v4582
        %4904 = vmatmul.mubr.f32.gmra.mrb[0].mxu0 %v4581
        %v4905 = vpop.f32.mrb[0].mxu0
        %v4906 = vadd.f32 %v4443, %v4905
        %v4907 = vpop.f32.mrb[0].mxu0
        %4908 = vmatprep.mubr.f32.mxu0 %v4617
        %4909 = vmatmul.mubr.f32.gmra.mrb[0].mxu0 %v4616
        %v4910 = vpop.f32.mrb[0].mxu0
        %v4911 = vadd.f32 %v4443, %v4910
        %v4912 = vpop.f32.mrb[0].mxu0
        %4913 = vmatprep.mubr.f32.mxu0 %v4652
        %4914 = vmatmul.mubr.f32.gmra.mrb[0].mxu0 %v4651
        %v4915 = vpop.f32.mrb[0].mxu0
        %v4916 = vadd.f32 %v4443, %v4915
        %v4917 = vpop.f32.mrb[0].mxu0
        %4918 = vmatprep.mubr.f32.mxu0 %v4687
        %4919 = vmatmul.mubr.f32.gmra.mrb[0].mxu0 %v4686
        %v4920 = vpop.f32.mrb[0].mxu0
        %v4921 = vadd.f32 %v4443, %v4920
        %v4922 = vpop.f32.mrb[0].mxu0
        %4923 = vmatprep.mubr.f32.mxu0 %v4722
        %4924 = vmatmul.mubr.f32.gmra.mrb[0].mxu0 %v4721
        %v4925 = vpop.f32.mrb[0].mxu0
        %v4926 = vadd.f32 %v4443, %v4925
        %v4927 = vpop.f32.mrb[0].mxu0
        %4928 = vmatprep.mubr.f32.mxu0 %v4757
        %4929 = vmatmul.mubr.f32.gmra.mrb[0].mxu0 %v4756
        %v4930 = vpop.f32.mrb[0].mxu0
        %v4931 = vadd.f32 %v4443, %v4930
        %v4932 = vpop.f32.mrb[0].mxu0
        %4933 = vmatprep.mubr.f32.mxu0 %v4792
        %4934 = vmatmul.mubr.f32.gmra.mrb[0].mxu0 %v4791
        %v4935 = vpop.f32.mrb[0].mxu0
        %v4936 = vadd.f32 %v4443, %v4935
        %v4937 = vpop.f32.mrb[0].mxu0
        %4938 = vdwg.mxu0
        %4939 = vmatprep.subr.mxu0 0.0
        %4940 = vmatpush1.msra.mxu0 %v350
        %4941 = vmatprep.subr.mxu0 0.0
        %4942 = vmatpush1.msra.mxu0 %v351
        %4943 = vmatprep.subr.mxu0 0.0
        %4944 = vmatpush1.msra.mxu0 %v352
        %4945 = vmatprep.subr.mxu0 0.0
        %4946 = vmatpush1.msra.mxu0 %v353
        %4947 = vmatprep.subr.mxu0 0.0
        %4948 = vmatpush1.msra.mxu0 %v354
        %4949 = vmatprep.subr.mxu0 0.0
        %4950 = vmatpush1.msra.mxu0 %v355
        %4951 = vmatprep.subr.mxu0 0.0
        %4952 = vmatpush1.msra.mxu0 %v356
        %4953 = vmatprep.subr.mxu0 0.0
        %4954 = vmatpush1.msra.mxu0 %v357
        %4955 = vmatprep.subr.mxu0 0.0
        %4956 = vmatpush1.msra.mxu0 %v358
        %4957 = vmatprep.subr.mxu0 0.0
        %4958 = vmatpush1.msra.mxu0 %v359
        %4959 = vmatprep.subr.mxu0 0.0
        %4960 = vmatpush1.msra.mxu0 %v360
        %4961 = vmatprep.subr.mxu0 0.0
        %4962 = vmatpush1.msra.mxu0 %v361
        %4963 = vmatprep.subr.mxu0 0.0
        %4964 = vmatpush1.msra.mxu0 %v362
        %4965 = vmatprep.subr.mxu0 0.0
        %4966 = vmatpush1.msra.mxu0 %v363
        %4967 = vmatprep.subr.mxu0 0.0
        %4968 = vmatpush1.msra.mxu0 %v364
        %4969 = vmatprep.subr.mxu0 0.0
        %4970 = vmatpush1.msra.mxu0 %v365
        %4971 = vmatprep.subr.mxu0 0.0
        %4972 = vmatpush1.msra.mxu0 0.0
        %4973 = vmatprep.subr.mxu0 0.0
        %4974 = vmatpush1.msra.mxu0 0.0
        %4975 = vmatprep.subr.mxu0 0.0
        %4976 = vmatpush1.msra.mxu0 0.0
        %4977 = vmatprep.subr.mxu0 0.0
        %4978 = vmatpush1.msra.mxu0 0.0
        %4979 = vmatprep.subr.mxu0 0.0
        %4980 = vmatpush1.msra.mxu0 0.0
        %4981 = vmatprep.subr.mxu0 0.0
        %4982 = vmatpush1.msra.mxu0 0.0
        %4983 = vmatprep.subr.mxu0 0.0
        %4984 = vmatpush1.msra.mxu0 0.0
        %4985 = vmatprep.subr.mxu0 0.0
        %4986 = vmatpush1.msra.mxu0 0.0
        %4987 = vmatprep.subr.mxu0 0.0
        %4988 = vmatpush1.msra.mxu0 0.0
        %4989 = vmatprep.subr.mxu0 0.0
        %4990 = vmatpush1.msra.mxu0 0.0
        %4991 = vmatprep.subr.mxu0 0.0
        %4992 = vmatpush1.msra.mxu0 0.0
        %4993 = vmatprep.subr.mxu0 0.0
        %4994 = vmatpush1.msra.mxu0 0.0
        %4995 = vmatprep.subr.mxu0 0.0
        %4996 = vmatpush1.msra.mxu0 0.0
        %4997 = vmatprep.subr.mxu0 0.0
        %4998 = vmatpush1.msra.mxu0 0.0
        %4999 = vmatprep.subr.mxu0 0.0
        %5000 = vmatpush1.msra.mxu0 0.0
        %5001 = vmatprep.subr.mxu0 0.0
        %5002 = vmatpush1.msra.mxu0 0.0
        %5003 = vmatprep.mubr.f32.mxu0 0.0
        %5004 = vmatmul.mubr.f32.gmra.mrb[0].mxu0 %v4478
        %v5005 = vpop.f32.mrb[0].mxu0
        %v5006 = vadd.f32 %v4891, %v5005
        %v5007 = vpop.f32.mrb[0].mxu0
        %5008 = vmatprep.mubr.f32.mxu0 0.0
        %5009 = vmatmul.mubr.f32.gmra.mrb[0].mxu0 %v4513
        %v5010 = vpop.f32.mrb[0].mxu0
        %v5011 = vadd.f32 %v4896, %v5010
        %v5012 = vpop.f32.mrb[0].mxu0
        %5013 = vmatprep.mubr.f32.mxu0 0.0
        %5014 = vmatmul.mubr.f32.gmra.mrb[0].mxu0 %v4548
        %v5015 = vpop.f32.mrb[0].mxu0
        %v5016 = vadd.f32 %v4901, %v5015
        %v5017 = vpop.f32.mrb[0].mxu0
        %5018 = vmatprep.mubr.f32.mxu0 0.0
        %5019 = vmatmul.mubr.f32.gmra.mrb[0].mxu0 %v4583
        %v5020 = vpop.f32.mrb[0].mxu0
        %v5021 = vadd.f32 %v4906, %v5020
        %v5022 = vpop.f32.mrb[0].mxu0
        %5023 = vmatprep.mubr.f32.mxu0 0.0
        %5024 = vmatmul.mubr.f32.gmra.mrb[0].mxu0 %v4618
        %v5025 = vpop.f32.mrb[0].mxu0
        %v5026 = vadd.f32 %v4911, %v5025
        %v5027 = vpop.f32.mrb[0].mxu0
        %5028 = vmatprep.mubr.f32.mxu0 0.0
        %5029 = vmatmul.mubr.f32.gmra.mrb[0].mxu0 %v4653
        %v5030 = vpop.f32.mrb[0].mxu0
        %v5031 = vadd.f32 %v4916, %v5030
        %v5032 = vpop.f32.mrb[0].mxu0
        %5033 = vmatprep.mubr.f32.mxu0 0.0
        %5034 = vmatmul.mubr.f32.gmra.mrb[0].mxu0 %v4688
        %v5035 = vpop.f32.mrb[0].mxu0
        %v5036 = vadd.f32 %v4921, %v5035
        %v5037 = vpop.f32.mrb[0].mxu0
        %5038 = vmatprep.mubr.f32.mxu0 0.0
        %5039 = vmatmul.mubr.f32.gmra.mrb[0].mxu0 %v4723
        %v5040 = vpop.f32.mrb[0].mxu0
        %v5041 = vadd.f32 %v4926, %v5040
        %v5042 = vpop.f32.mrb[0].mxu0
        %5043 = vmatprep.mubr.f32.mxu0 0.0
        %5044 = vmatmul.mubr.f32.gmra.mrb[0].mxu0 %v4758
        %v5045 = vpop.f32.mrb[0].mxu0
        %v5046 = vadd.f32 %v4931, %v5045
        %v5047 = vpop.f32.mrb[0].mxu0
        %5048 = vmatprep.mubr.f32.mxu0 0.0
        %5049 = vmatmul.mubr.f32.gmra.mrb[0].mxu0 %v4793
        %v5050 = vpop.f32.mrb[0].mxu0
        %v5051 = vadd.f32 %v4936, %v5050
        %v5052 = vpop.f32.mrb[0].mxu0
        %5053 = vdwg.mxu0
        %v5054 = vmax.f32 %v5006, 0.0
        %v5055 = vmax.f32 %v5011, 0.0
        %v5056 = vmax.f32 %v5016, 0.0
        %v5057 = vmax.f32 %v5021, 0.0
        %v5058 = vmax.f32 %v5026, 0.0
        %v5059 = vmax.f32 %v5031, 0.0
        %v5060 = vmax.f32 %v5036, 0.0
        %v5061 = vmax.f32 %v5041, 0.0
        %v5062 = vmax.f32 %v5046, 0.0
        %v5063 = vmax.f32 %v5051, 0.0
        %5064 = vmatprep.subr.mxu0 0.0
        %5065 = vmatpush1.msra.mxu0 %v366
        %5066 = vmatprep.subr.mxu0 0.0
        %5067 = vmatpush1.msra.mxu0 %v367
        %5068 = vmatprep.subr.mxu0 0.0
        %5069 = vmatpush1.msra.mxu0 %v368
        %5070 = vmatprep.subr.mxu0 0.0
        %5071 = vmatpush1.msra.mxu0 %v369
        %5072 = vmatprep.subr.mxu0 0.0
        %5073 = vmatpush1.msra.mxu0 %v370
        %5074 = vmatprep.subr.mxu0 0.0
        %5075 = vmatpush1.msra.mxu0 %v371
        %5076 = vmatprep.subr.mxu0 0.0
        %5077 = vmatpush1.msra.mxu0 %v372
        %5078 = vmatprep.subr.mxu0 0.0
        %5079 = vmatpush1.msra.mxu0 %v373
        %5080 = vmatprep.subr.mxu0 0.0
        %5081 = vmatpush1.msra.mxu0 %v374
        %5082 = vmatprep.subr.mxu0 0.0
        %5083 = vmatpush1.msra.mxu0 %v375
        %5084 = vmatprep.subr.mxu0 0.0
        %5085 = vmatpush1.msra.mxu0 %v376
        %5086 = vmatprep.subr.mxu0 0.0
        %5087 = vmatpush1.msra.mxu0 %v377
        %5088 = vmatprep.subr.mxu0 0.0
        %5089 = vmatpush1.msra.mxu0 %v378
        %5090 = vmatprep.subr.mxu0 0.0
        %5091 = vmatpush1.msra.mxu0 %v379
        %5092 = vmatprep.subr.mxu0 0.0
        %5093 = vmatpush1.msra.mxu0 %v380
        %5094 = vmatprep.subr.mxu0 0.0
        %5095 = vmatpush1.msra.mxu0 %v381
        %5096 = vmatprep.subr.mxu0 0.0
        %5097 = vmatpush1.msra.mxu0 0.0
        %5098 = vmatprep.subr.mxu0 0.0
        %5099 = vmatpush1.msra.mxu0 0.0
        %5100 = vmatprep.subr.mxu0 0.0
        %5101 = vmatpush1.msra.mxu0 0.0
        %5102 = vmatprep.subr.mxu0 0.0
        %5103 = vmatpush1.msra.mxu0 0.0
        %5104 = vmatprep.subr.mxu0 0.0
        %5105 = vmatpush1.msra.mxu0 0.0
        %5106 = vmatprep.subr.mxu0 0.0
        %5107 = vmatpush1.msra.mxu0 0.0
        %5108 = vmatprep.subr.mxu0 0.0
        %5109 = vmatpush1.msra.mxu0 0.0
        %5110 = vmatprep.subr.mxu0 0.0
        %5111 = vmatpush1.msra.mxu0 0.0
        %5112 = vmatprep.subr.mxu0 0.0
        %5113 = vmatpush1.msra.mxu0 0.0
        %5114 = vmatprep.subr.mxu0 0.0
        %5115 = vmatpush1.msra.mxu0 0.0
        %5116 = vmatprep.subr.mxu0 0.0
        %5117 = vmatpush1.msra.mxu0 0.0
        %5118 = vmatprep.subr.mxu0 0.0
        %5119 = vmatpush1.msra.mxu0 0.0
        %5120 = vmatprep.subr.mxu0 0.0
        %5121 = vmatpush1.msra.mxu0 0.0
        %5122 = vmatprep.subr.mxu0 0.0
        %5123 = vmatpush1.msra.mxu0 0.0
        %5124 = vmatprep.subr.mxu0 0.0
        %5125 = vmatpush1.msra.mxu0 0.0
        %5126 = vmatprep.subr.mxu0 0.0
        %5127 = vmatpush1.msra.mxu0 0.0
        %5128 = vmatprep.mubr.f32.mxu0 0.0
        %5129 = vmatmul.mubr.f32.gmra.mrb[0].mxu0 %v5054
        %v5130 = vpop.f32.mrb[0].mxu0
        %v5131 = vadd.f32 %v1597, %v5130
        %v5132 = vpop.f32.mrb[0].mxu0
        %5133 = vmatprep.mubr.f32.mxu0 0.0
        %5134 = vmatmul.mubr.f32.gmra.mrb[0].mxu0 %v5055
        %v5135 = vpop.f32.mrb[0].mxu0
        %v5136 = vadd.f32 %v1597, %v5135
        %v5137 = vpop.f32.mrb[0].mxu0
        %5138 = vmatprep.mubr.f32.mxu0 0.0
        %5139 = vmatmul.mubr.f32.gmra.mrb[0].mxu0 %v5056
        %v5140 = vpop.f32.mrb[0].mxu0
        %v5141 = vadd.f32 %v1597, %v5140
        %v5142 = vpop.f32.mrb[0].mxu0
        %5143 = vmatprep.mubr.f32.mxu0 0.0
        %5144 = vmatmul.mubr.f32.gmra.mrb[0].mxu0 %v5057
        %v5145 = vpop.f32.mrb[0].mxu0
        %v5146 = vadd.f32 %v1597, %v5145
        %v5147 = vpop.f32.mrb[0].mxu0
        %5148 = vmatprep.mubr.f32.mxu0 0.0
        %5149 = vmatmul.mubr.f32.gmra.mrb[0].mxu0 %v5058
        %v5150 = vpop.f32.mrb[0].mxu0
        %v5151 = vadd.f32 %v1597, %v5150
        %v5152 = vpop.f32.mrb[0].mxu0
        %5153 = vmatprep.mubr.f32.mxu0 0.0
        %5154 = vmatmul.mubr.f32.gmra.mrb[0].mxu0 %v5059
        %v5155 = vpop.f32.mrb[0].mxu0
        %v5156 = vadd.f32 %v1597, %v5155
        %v5157 = vpop.f32.mrb[0].mxu0
        %5158 = vmatprep.mubr.f32.mxu0 0.0
        %5159 = vmatmul.mubr.f32.gmra.mrb[0].mxu0 %v5060
        %v5160 = vpop.f32.mrb[0].mxu0
        %v5161 = vadd.f32 %v1597, %v5160
        %v5162 = vpop.f32.mrb[0].mxu0
        %5163 = vmatprep.mubr.f32.mxu0 0.0
        %5164 = vmatmul.mubr.f32.gmra.mrb[0].mxu0 %v5061
        %v5165 = vpop.f32.mrb[0].mxu0
        %v5166 = vadd.f32 %v1597, %v5165
        %v5167 = vpop.f32.mrb[0].mxu0
        %5168 = vmatprep.mubr.f32.mxu0 0.0
        %5169 = vmatmul.mubr.f32.gmra.mrb[0].mxu0 %v5062
        %v5170 = vpop.f32.mrb[0].mxu0
        %v5171 = vadd.f32 %v1597, %v5170
        %v5172 = vpop.f32.mrb[0].mxu0
        %5173 = vmatprep.mubr.f32.mxu0 0.0
        %5174 = vmatmul.mubr.f32.gmra.mrb[0].mxu0 %v5063
        %v5175 = vpop.f32.mrb[0].mxu0
        %v5176 = vadd.f32 %v1597, %v5175
        %v5177 = vpop.f32.mrb[0].mxu0
        %5178 = vdwg.mxu0
        %v5179 = vadd.f32 %v5054, %v5131
        %v5180 = vadd.f32 %v5055, %v5136
        %v5181 = vadd.f32 %v5056, %v5141
        %v5182 = vadd.f32 %v5057, %v5146
        %v5183 = vadd.f32 %v5058, %v5151
        %v5184 = vadd.f32 %v5059, %v5156
        %v5185 = vadd.f32 %v5060, %v5161
        %v5186 = vadd.f32 %v5061, %v5166
        %v5187 = vadd.f32 %v5062, %v5171
        %v5188 = vadd.f32 %v5063, %v5176
        %v5199 = vcombine.high %v5179, %v5179
        %v5201 = vunpack.c.l.s4 1983009808
        %v5202 = vunpack.c.0.s8 %v5201
        %v5203 = vlaneseq
        %v5204 = vshrl.u32 %v5203, 7
        %v5205 = vsub.s32 %v5202, %v5204
        %v5206 = vrot.slane %v5179, %v5205
        %v5208 = vunpack.c.l.s4 1983009808
        %v5209 = vunpack.c.0.s8 %v5208
        %v5210 = vlaneseq
        %v5211 = vshrl.u32 %v5210, 7
        %v5212 = vsub.s32 %v5209, %v5211
        %v5213 = vrot.slane %v5199, %v5212
        %v5214 = vcombine.high %v5206, %v5206
        %v5215 = vcombine.high %v5213, %v5213
        %v5216 = vcombine.high %v5180, %v5180
        %v5218 = vunpack.c.l.s4 1983009808
        %v5219 = vunpack.c.0.s8 %v5218
        %v5220 = vlaneseq
        %v5221 = vshrl.u32 %v5220, 7
        %v5222 = vsub.s32 %v5219, %v5221
        %v5223 = vrot.slane %v5180, %v5222
        %v5225 = vunpack.c.l.s4 1983009808
        %v5226 = vunpack.c.0.s8 %v5225
        %v5227 = vlaneseq
        %v5228 = vshrl.u32 %v5227, 7
        %v5229 = vsub.s32 %v5226, %v5228
        %v5230 = vrot.slane %v5216, %v5229
        %v5231 = vcombine.high %v5223, %v5223
        %v5232 = vcombine.high %v5230, %v5230
        %v5233 = vcombine.high %v5181, %v5181
        %v5235 = vunpack.c.l.s4 1983009808
        %v5236 = vunpack.c.0.s8 %v5235
        %v5237 = vlaneseq
        %v5238 = vshrl.u32 %v5237, 7
        %v5239 = vsub.s32 %v5236, %v5238
        %v5240 = vrot.slane %v5181, %v5239
        %v5242 = vunpack.c.l.s4 1983009808
        %v5243 = vunpack.c.0.s8 %v5242
        %v5244 = vlaneseq
        %v5245 = vshrl.u32 %v5244, 7
        %v5246 = vsub.s32 %v5243, %v5245
        %v5247 = vrot.slane %v5233, %v5246
        %v5248 = vcombine.high %v5240, %v5240
        %v5249 = vcombine.high %v5247, %v5247
        %v5250 = vcombine.high %v5182, %v5182
        %v5252 = vunpack.c.l.s4 1983009808
        %v5253 = vunpack.c.0.s8 %v5252
        %v5254 = vlaneseq
        %v5255 = vshrl.u32 %v5254, 7
        %v5256 = vsub.s32 %v5253, %v5255
        %v5257 = vrot.slane %v5182, %v5256
        %v5259 = vunpack.c.l.s4 1983009808
        %v5260 = vunpack.c.0.s8 %v5259
        %v5261 = vlaneseq
        %v5262 = vshrl.u32 %v5261, 7
        %v5263 = vsub.s32 %v5260, %v5262
        %v5264 = vrot.slane %v5250, %v5263
        %v5265 = vcombine.high %v5257, %v5257
        %v5266 = vcombine.high %v5264, %v5264
        %v5267 = vcombine.high %v5183, %v5183
        %v5269 = vunpack.c.l.s4 1983009808
        %v5270 = vunpack.c.0.s8 %v5269
        %v5271 = vlaneseq
        %v5272 = vshrl.u32 %v5271, 7
        %v5273 = vsub.s32 %v5270, %v5272
        %v5274 = vrot.slane %v5183, %v5273
        %v5276 = vunpack.c.l.s4 1983009808
        %v5277 = vunpack.c.0.s8 %v5276
        %v5278 = vlaneseq
        %v5279 = vshrl.u32 %v5278, 7
        %v5280 = vsub.s32 %v5277, %v5279
        %v5281 = vrot.slane %v5267, %v5280
        %v5282 = vcombine.high %v5274, %v5274
        %v5283 = vcombine.high %v5281, %v5281
        %v5284 = vcombine.high %v5184, %v5184
        %v5286 = vunpack.c.l.s4 1983009808
        %v5287 = vunpack.c.0.s8 %v5286
        %v5288 = vlaneseq
        %v5289 = vshrl.u32 %v5288, 7
        %v5290 = vsub.s32 %v5287, %v5289
        %v5291 = vrot.slane %v5184, %v5290
        %v5293 = vunpack.c.l.s4 1983009808
        %v5294 = vunpack.c.0.s8 %v5293
        %v5295 = vlaneseq
        %v5296 = vshrl.u32 %v5295, 7
        %v5297 = vsub.s32 %v5294, %v5296
        %v5298 = vrot.slane %v5284, %v5297
        %v5299 = vcombine.high %v5291, %v5291
        %v5300 = vcombine.high %v5298, %v5298
        %v5301 = vcombine.high %v5185, %v5185
        %v5303 = vunpack.c.l.s4 1983009808
        %v5304 = vunpack.c.0.s8 %v5303
        %v5305 = vlaneseq
        %v5306 = vshrl.u32 %v5305, 7
        %v5307 = vsub.s32 %v5304, %v5306
        %v5308 = vrot.slane %v5185, %v5307
        %v5310 = vunpack.c.l.s4 1983009808
        %v5311 = vunpack.c.0.s8 %v5310
        %v5312 = vlaneseq
        %v5313 = vshrl.u32 %v5312, 7
        %v5314 = vsub.s32 %v5311, %v5313
        %v5315 = vrot.slane %v5301, %v5314
        %v5316 = vcombine.high %v5308, %v5308
        %v5317 = vcombine.high %v5315, %v5315
        %v5318 = vcombine.high %v5186, %v5186
        %v5320 = vunpack.c.l.s4 1983009808
        %v5321 = vunpack.c.0.s8 %v5320
        %v5322 = vlaneseq
        %v5323 = vshrl.u32 %v5322, 7
        %v5324 = vsub.s32 %v5321, %v5323
        %v5325 = vrot.slane %v5186, %v5324
        %v5327 = vunpack.c.l.s4 1983009808
        %v5328 = vunpack.c.0.s8 %v5327
        %v5329 = vlaneseq
        %v5330 = vshrl.u32 %v5329, 7
        %v5331 = vsub.s32 %v5328, %v5330
        %v5332 = vrot.slane %v5318, %v5331
        %v5333 = vcombine.high %v5325, %v5325
        %v5334 = vcombine.high %v5332, %v5332
        %v5335 = vcombine.high %v5187, %v5187
        %v5337 = vunpack.c.l.s4 1983009808
        %v5338 = vunpack.c.0.s8 %v5337
        %v5339 = vlaneseq
        %v5340 = vshrl.u32 %v5339, 7
        %v5341 = vsub.s32 %v5338, %v5340
        %v5342 = vrot.slane %v5187, %v5341
        %v5344 = vunpack.c.l.s4 1983009808
        %v5345 = vunpack.c.0.s8 %v5344
        %v5346 = vlaneseq
        %v5347 = vshrl.u32 %v5346, 7
        %v5348 = vsub.s32 %v5345, %v5347
        %v5349 = vrot.slane %v5335, %v5348
        %v5350 = vcombine.high %v5342, %v5342
        %v5351 = vcombine.high %v5349, %v5349
        %v5352 = vcombine.high %v5188, %v5188
        %v5354 = vunpack.c.l.s4 1983009808
        %v5355 = vunpack.c.0.s8 %v5354
        %v5356 = vlaneseq
        %v5357 = vshrl.u32 %v5356, 7
        %v5358 = vsub.s32 %v5355, %v5357
        %v5359 = vrot.slane %v5188, %v5358
        %v5361 = vunpack.c.l.s4 1983009808
        %v5362 = vunpack.c.0.s8 %v5361
        %v5363 = vlaneseq
        %v5364 = vshrl.u32 %v5363, 7
        %v5365 = vsub.s32 %v5362, %v5364
        %v5366 = vrot.slane %v5352, %v5365
        %v5367 = vcombine.high %v5359, %v5359
        %v5368 = vcombine.high %v5366, %v5366
        %v5410 = vcombine.high %v384, %v384
        %v5412 = vunpack.c.l.s4 1983009808
        %v5413 = vunpack.c.0.s8 %v5412
        %v5414 = vlaneseq
        %v5415 = vshrl.u32 %v5414, 7
        %v5416 = vsub.s32 %v5413, %v5415
        %v5417 = vrot.slane %v5410, %v5416
        %v5418 = vcombine.high %v1968, %v1968
        %v5419 = vcombine.high %v5417, %v5417
        %v5421 = vunpack.c.l.s4 1983009808
        %v5422 = vunpack.c.0.s8 %v5421
        %v5423 = vlaneseq
        %v5424 = vshrl.u32 %v5423, 7
        %v5425 = vsub.s32 %v5422, %v5424
        %v5426 = vrot.slane %v385, %v5425
        %v5427 = vcombine.high %v5426, %v5426
        %v5433 = vmul.f32 %v5206, %v5418
        %v5434 = vmul.f32 %v5214, %v5417
        %v5435 = vmul.f32 %v5213, %v5419
        %v5436 = vmul.f32 %v5215, %v5426
        %v5437 = vmul.f32 %v5223, %v5427
        %v5438 = vmul.f32 %v5231, %v5418
        %v5439 = vmul.f32 %v5230, %v5417
        %v5440 = vmul.f32 %v5232, %v5419
        %v5441 = vmul.f32 %v5240, %v5426
        %v5442 = vmul.f32 %v5248, %v5427
        %v5443 = vmul.f32 %v5247, %v5418
        %v5444 = vmul.f32 %v5249, %v5417
        %v5445 = vmul.f32 %v5257, %v5419
        %v5446 = vmul.f32 %v5265, %v5426
        %v5447 = vmul.f32 %v5264, %v5427
        %v5448 = vmul.f32 %v5266, %v5418
        %v5449 = vmul.f32 %v5274, %v5417
        %v5450 = vmul.f32 %v5282, %v5419
        %v5451 = vmul.f32 %v5281, %v5426
        %v5452 = vmul.f32 %v5283, %v5427
        %v5453 = vmul.f32 %v5291, %v5418
        %v5454 = vmul.f32 %v5299, %v5417
        %v5455 = vmul.f32 %v5298, %v5419
        %v5456 = vmul.f32 %v5300, %v5426
        %v5457 = vmul.f32 %v5308, %v5427
        %v5458 = vmul.f32 %v5316, %v5418
        %v5459 = vmul.f32 %v5315, %v5417
        %v5460 = vmul.f32 %v5317, %v5419
        %v5461 = vmul.f32 %v5325, %v5426
        %v5462 = vmul.f32 %v5333, %v5427
        %v5463 = vmul.f32 %v5332, %v5418
        %v5464 = vmul.f32 %v5334, %v5417
        %v5465 = vmul.f32 %v5342, %v5419
        %v5466 = vmul.f32 %v5350, %v5426
        %v5467 = vmul.f32 %v5349, %v5427
        %v5468 = vmul.f32 %v5351, %v5418
        %v5469 = vmul.f32 %v5359, %v5417
        %v5470 = vmul.f32 %v5367, %v5419
        %v5471 = vmul.f32 %v5366, %v5426
        %v5472 = vmul.f32 %v5368, %v5427
        %v5513 = vcombine.low %v5433, %v5434
        %v5514 = vcombine.low %v5435, %v5436
        %v5516 = vunpack.c.l.s4 1983009808
        %v5517 = vunpack.c.0.s8 %v5516
        %v5518 = vlaneseq
        %v5519 = vshrl.u32 %v5518, 7
        %v5520 = vsub.s32 %v5517, %v5519
        %v5521 = vrot.slane %v5513, %v5520
        %v5523 = vunpack.c.l.s4 1983009808
        %v5524 = vunpack.c.0.s8 %v5523
        %v5525 = vlaneseq
        %v5526 = vshrl.u32 %v5525, 7
        %v5527 = vsub.s32 %v5524, %v5526
        %v5528 = vrot.slane %v5514, %v5527
        %v5529 = vcombine.low %v5521, %v5528
        %v5531 = vunpack.c.l.s4 1983009808
        %v5532 = vunpack.c.0.s8 %v5531
        %v5533 = vlaneseq
        %v5534 = vshrl.u32 %v5533, 7
        %v5535 = vsub.s32 %v5532, %v5534
        %v5536 = vrot.slane %v5437, %v5535
        %v5537 = vcombine.low %v5438, %v5439
        %v5538 = vcombine.low %v5440, %v5441
        %v5540 = vunpack.c.l.s4 1983009808
        %v5541 = vunpack.c.0.s8 %v5540
        %v5542 = vlaneseq
        %v5543 = vshrl.u32 %v5542, 7
        %v5544 = vsub.s32 %v5541, %v5543
        %v5545 = vrot.slane %v5537, %v5544
        %v5547 = vunpack.c.l.s4 1983009808
        %v5548 = vunpack.c.0.s8 %v5547
        %v5549 = vlaneseq
        %v5550 = vshrl.u32 %v5549, 7
        %v5551 = vsub.s32 %v5548, %v5550
        %v5552 = vrot.slane %v5538, %v5551
        %v5553 = vcombine.low %v5545, %v5552
        %v5555 = vunpack.c.l.s4 1983009808
        %v5556 = vunpack.c.0.s8 %v5555
        %v5557 = vlaneseq
        %v5558 = vshrl.u32 %v5557, 7
        %v5559 = vsub.s32 %v5556, %v5558
        %v5560 = vrot.slane %v5442, %v5559
        %v5561 = vcombine.low %v5443, %v5444
        %v5562 = vcombine.low %v5445, %v5446
        %v5564 = vunpack.c.l.s4 1983009808
        %v5565 = vunpack.c.0.s8 %v5564
        %v5566 = vlaneseq
        %v5567 = vshrl.u32 %v5566, 7
        %v5568 = vsub.s32 %v5565, %v5567
        %v5569 = vrot.slane %v5561, %v5568
        %v5571 = vunpack.c.l.s4 1983009808
        %v5572 = vunpack.c.0.s8 %v5571
        %v5573 = vlaneseq
        %v5574 = vshrl.u32 %v5573, 7
        %v5575 = vsub.s32 %v5572, %v5574
        %v5576 = vrot.slane %v5562, %v5575
        %v5577 = vcombine.low %v5569, %v5576
        %v5579 = vunpack.c.l.s4 1983009808
        %v5580 = vunpack.c.0.s8 %v5579
        %v5581 = vlaneseq
        %v5582 = vshrl.u32 %v5581, 7
        %v5583 = vsub.s32 %v5580, %v5582
        %v5584 = vrot.slane %v5447, %v5583
        %v5585 = vcombine.low %v5448, %v5449
        %v5586 = vcombine.low %v5450, %v5451
        %v5588 = vunpack.c.l.s4 1983009808
        %v5589 = vunpack.c.0.s8 %v5588
        %v5590 = vlaneseq
        %v5591 = vshrl.u32 %v5590, 7
        %v5592 = vsub.s32 %v5589, %v5591
        %v5593 = vrot.slane %v5585, %v5592
        %v5595 = vunpack.c.l.s4 1983009808
        %v5596 = vunpack.c.0.s8 %v5595
        %v5597 = vlaneseq
        %v5598 = vshrl.u32 %v5597, 7
        %v5599 = vsub.s32 %v5596, %v5598
        %v5600 = vrot.slane %v5586, %v5599
        %v5601 = vcombine.low %v5593, %v5600
        %v5603 = vunpack.c.l.s4 1983009808
        %v5604 = vunpack.c.0.s8 %v5603
        %v5605 = vlaneseq
        %v5606 = vshrl.u32 %v5605, 7
        %v5607 = vsub.s32 %v5604, %v5606
        %v5608 = vrot.slane %v5452, %v5607
        %v5609 = vcombine.low %v5453, %v5454
        %v5610 = vcombine.low %v5455, %v5456
        %v5612 = vunpack.c.l.s4 1983009808
        %v5613 = vunpack.c.0.s8 %v5612
        %v5614 = vlaneseq
        %v5615 = vshrl.u32 %v5614, 7
        %v5616 = vsub.s32 %v5613, %v5615
        %v5617 = vrot.slane %v5609, %v5616
        %v5619 = vunpack.c.l.s4 1983009808
        %v5620 = vunpack.c.0.s8 %v5619
        %v5621 = vlaneseq
        %v5622 = vshrl.u32 %v5621, 7
        %v5623 = vsub.s32 %v5620, %v5622
        %v5624 = vrot.slane %v5610, %v5623
        %v5625 = vcombine.low %v5617, %v5624
        %v5627 = vunpack.c.l.s4 1983009808
        %v5628 = vunpack.c.0.s8 %v5627
        %v5629 = vlaneseq
        %v5630 = vshrl.u32 %v5629, 7
        %v5631 = vsub.s32 %v5628, %v5630
        %v5632 = vrot.slane %v5457, %v5631
        %v5633 = vcombine.low %v5458, %v5459
        %v5634 = vcombine.low %v5460, %v5461
        %v5636 = vunpack.c.l.s4 1983009808
        %v5637 = vunpack.c.0.s8 %v5636
        %v5638 = vlaneseq
        %v5639 = vshrl.u32 %v5638, 7
        %v5640 = vsub.s32 %v5637, %v5639
        %v5641 = vrot.slane %v5633, %v5640
        %v5643 = vunpack.c.l.s4 1983009808
        %v5644 = vunpack.c.0.s8 %v5643
        %v5645 = vlaneseq
        %v5646 = vshrl.u32 %v5645, 7
        %v5647 = vsub.s32 %v5644, %v5646
        %v5648 = vrot.slane %v5634, %v5647
        %v5649 = vcombine.low %v5641, %v5648
        %v5651 = vunpack.c.l.s4 1983009808
        %v5652 = vunpack.c.0.s8 %v5651
        %v5653 = vlaneseq
        %v5654 = vshrl.u32 %v5653, 7
        %v5655 = vsub.s32 %v5652, %v5654
        %v5656 = vrot.slane %v5462, %v5655
        %v5657 = vcombine.low %v5463, %v5464
        %v5658 = vcombine.low %v5465, %v5466
        %v5660 = vunpack.c.l.s4 1983009808
        %v5661 = vunpack.c.0.s8 %v5660
        %v5662 = vlaneseq
        %v5663 = vshrl.u32 %v5662, 7
        %v5664 = vsub.s32 %v5661, %v5663
        %v5665 = vrot.slane %v5657, %v5664
        %v5667 = vunpack.c.l.s4 1983009808
        %v5668 = vunpack.c.0.s8 %v5667
        %v5669 = vlaneseq
        %v5670 = vshrl.u32 %v5669, 7
        %v5671 = vsub.s32 %v5668, %v5670
        %v5672 = vrot.slane %v5658, %v5671
        %v5673 = vcombine.low %v5665, %v5672
        %v5675 = vunpack.c.l.s4 1983009808
        %v5676 = vunpack.c.0.s8 %v5675
        %v5677 = vlaneseq
        %v5678 = vshrl.u32 %v5677, 7
        %v5679 = vsub.s32 %v5676, %v5678
        %v5680 = vrot.slane %v5467, %v5679
        %v5681 = vcombine.low %v5468, %v5469
        %v5682 = vcombine.low %v5470, %v5471
        %v5684 = vunpack.c.l.s4 1983009808
        %v5685 = vunpack.c.0.s8 %v5684
        %v5686 = vlaneseq
        %v5687 = vshrl.u32 %v5686, 7
        %v5688 = vsub.s32 %v5685, %v5687
        %v5689 = vrot.slane %v5681, %v5688
        %v5691 = vunpack.c.l.s4 1983009808
        %v5692 = vunpack.c.0.s8 %v5691
        %v5693 = vlaneseq
        %v5694 = vshrl.u32 %v5693, 7
        %v5695 = vsub.s32 %v5692, %v5694
        %v5696 = vrot.slane %v5682, %v5695
        %v5697 = vcombine.low %v5689, %v5696
        %v5699 = vunpack.c.l.s4 1983009808
        %v5700 = vunpack.c.0.s8 %v5699
        %v5701 = vlaneseq
        %v5702 = vshrl.u32 %v5701, 7
        %v5703 = vsub.s32 %v5700, %v5702
        %v5704 = vrot.slane %v5472, %v5703
        %v5721 = vsel %vm2262, %v5536, 0.0
        %v5722 = vadd.f32 %v5529, %v5721
        %v5723 = vrot.slane %v5722, 4
        %v5724 = vadd.f32 %v5722, %v5723
        %v5725 = vrot.slane %v5724, 2
        %v5726 = vadd.f32 %v5724, %v5725
        %v5727 = vrot.slane %v5726, 1
        %v5728 = vadd.f32 %v5726, %v5727
        %v5729 = vsel %vm2262, %v5560, 0.0
        %v5730 = vadd.f32 %v5553, %v5729
        %v5731 = vrot.slane %v5730, 4
        %v5732 = vadd.f32 %v5730, %v5731
        %v5733 = vrot.slane %v5732, 2
        %v5734 = vadd.f32 %v5732, %v5733
        %v5735 = vrot.slane %v5734, 1
        %v5736 = vadd.f32 %v5734, %v5735
        %v5737 = vsel %vm2262, %v5584, 0.0
        %v5738 = vadd.f32 %v5577, %v5737
        %v5739 = vrot.slane %v5738, 4
        %v5740 = vadd.f32 %v5738, %v5739
        %v5741 = vrot.slane %v5740, 2
        %v5742 = vadd.f32 %v5740, %v5741
        %v5743 = vrot.slane %v5742, 1
        %v5744 = vadd.f32 %v5742, %v5743
        %v5745 = vsel %vm2262, %v5608, 0.0
        %v5746 = vadd.f32 %v5601, %v5745
        %v5747 = vrot.slane %v5746, 4
        %v5748 = vadd.f32 %v5746, %v5747
        %v5749 = vrot.slane %v5748, 2
        %v5750 = vadd.f32 %v5748, %v5749
        %v5751 = vrot.slane %v5750, 1
        %v5752 = vadd.f32 %v5750, %v5751
        %v5753 = vsel %vm2262, %v5632, 0.0
        %v5754 = vadd.f32 %v5625, %v5753
        %v5755 = vrot.slane %v5754, 4
        %v5756 = vadd.f32 %v5754, %v5755
        %v5757 = vrot.slane %v5756, 2
        %v5758 = vadd.f32 %v5756, %v5757
        %v5759 = vrot.slane %v5758, 1
        %v5760 = vadd.f32 %v5758, %v5759
        %v5761 = vsel %vm2262, %v5656, 0.0
        %v5762 = vadd.f32 %v5649, %v5761
        %v5763 = vrot.slane %v5762, 4
        %v5764 = vadd.f32 %v5762, %v5763
        %v5765 = vrot.slane %v5764, 2
        %v5766 = vadd.f32 %v5764, %v5765
        %v5767 = vrot.slane %v5766, 1
        %v5768 = vadd.f32 %v5766, %v5767
        %v5769 = vsel %vm2262, %v5680, 0.0
        %v5770 = vadd.f32 %v5673, %v5769
        %v5771 = vrot.slane %v5770, 4
        %v5772 = vadd.f32 %v5770, %v5771
        %v5773 = vrot.slane %v5772, 2
        %v5774 = vadd.f32 %v5772, %v5773
        %v5775 = vrot.slane %v5774, 1
        %v5776 = vadd.f32 %v5774, %v5775
        %v5777 = vsel %vm2262, %v5704, 0.0
        %v5778 = vadd.f32 %v5697, %v5777
        %v5779 = vrot.slane %v5778, 4
        %v5780 = vadd.f32 %v5778, %v5779
        %v5781 = vrot.slane %v5780, 2
        %v5782 = vadd.f32 %v5780, %v5781
        %v5783 = vrot.slane %v5782, 1
        %v5784 = vadd.f32 %v5782, %v5783
        %v5785 = vlaneseq
        %v5786 = vshrl.u32 %v5785, 7
        %v5787 = vsub.s32 5, %v5786
        %v5788 = vrot.slane %v382, %v5787
        %v5789 = vadd.f32 %v5728, %v5788
        %v5790 = vadd.f32 %v5736, %v5788
        %v5791 = vadd.f32 %v5744, %v5788
        %v5792 = vadd.f32 %v5752, %v5788
        %v5793 = vadd.f32 %v5760, %v5788
        %v5794 = vadd.f32 %v5768, %v5788
        %v5795 = vadd.f32 %v5776, %v5788
        %v5796 = vadd.f32 %v5784, %v5788
        %v5797 = vxor.u32 %v5789, 2147483648
        %v5798 = vxor.u32 %v5790, 2147483648
        %v5799 = vxor.u32 %v5791, 2147483648
        %v5800 = vxor.u32 %v5792, 2147483648
        %v5801 = vxor.u32 %v5793, 2147483648
        %v5802 = vxor.u32 %v5794, 2147483648
        %v5803 = vxor.u32 %v5795, 2147483648
        %v5804 = vxor.u32 %v5796, 2147483648
        %v5805 = vmul.f32 %v5797, 1.442695
        %v5806 = vpow.pop %v5805
        %v5807 = vmul.f32 %v5798, 1.442695
        %v5808 = vpow.pop %v5807
        %v5809 = vmul.f32 %v5799, 1.442695
        %v5810 = vpow.pop %v5809
        %v5811 = vmul.f32 %v5800, 1.442695
        %v5812 = vpow.pop %v5811
        %v5813 = vmul.f32 %v5801, 1.442695
        %v5814 = vpow.pop %v5813
        %v5815 = vmul.f32 %v5802, 1.442695
        %v5816 = vpow.pop %v5815
        %v5817 = vmul.f32 %v5803, 1.442695
        %v5818 = vpow.pop %v5817
        %v5819 = vmul.f32 %v5804, 1.442695
        %v5820 = vpow.pop %v5819
        %v5821 = vadd.f32 %v5806, 1.0
        %v5822 = vadd.f32 %v5808, 1.0
        %v5823 = vadd.f32 %v5810, 1.0
        %v5824 = vadd.f32 %v5812, 1.0
        %v5825 = vadd.f32 %v5814, 1.0
        %v5826 = vadd.f32 %v5816, 1.0
        %v5827 = vadd.f32 %v5818, 1.0
        %v5828 = vadd.f32 %v5820, 1.0
        %v5829 = vrcp.pop %v5821
        %v5830 = vmul.f32 1.0, %v5829
        %v5831 = vrcp.pop %v5822
        %v5832 = vmul.f32 1.0, %v5831
        %v5833 = vrcp.pop %v5823
        %v5834 = vmul.f32 1.0, %v5833
        %v5835 = vrcp.pop %v5824
        %v5836 = vmul.f32 1.0, %v5835
        %v5837 = vrcp.pop %v5825
        %v5838 = vmul.f32 1.0, %v5837
        %v5839 = vrcp.pop %v5826
        %v5840 = vmul.f32 1.0, %v5839
        %v5841 = vrcp.pop %v5827
        %v5842 = vmul.f32 1.0, %v5841
        %v5843 = vrcp.pop %v5828
        %v5844 = vmul.f32 1.0, %v5843
        %v5853 = vrot.slane %v5830, 7
        %v5854 = vrot.slane %v5832, 7
        %v5855 = vrot.slane %v5834, 7
        %v5856 = vrot.slane %v5836, 7
        %v5857 = vrot.slane %v5838, 7
        %v5858 = vrot.slane %v5840, 7
        %v5859 = vrot.slane %v5842, 7
        %v5860 = vrot.slane %v5844, 7
        %vm5869 = vcmask 1040384
        %v5870 = vsel %vm5869, %v2372, %v5853
        %v5871 = vsel %vm5869, %v2374, %v5854
        %v5872 = vsel %vm5869, %v2376, %v5855
        %v5873 = vsel %vm5869, %v2378, %v5856
        %v5874 = vsel %vm5869, %v2380, %v5857
        %v5875 = vsel %vm5869, %v2382, %v5858
        %v5876 = vsel %vm5869, %v2384, %v5859
        %v5877 = vsel %vm5869, %v2386, %v5860
        %5878 = vst [vmem:[%s181] sm:$0x3] %v5870
        %5879 = vst [vmem:[%s181 + $0x2] sm:$0x3] %v5871
        %5880 = vst [vmem:[%s181 + $0x4] sm:$0x3] %v5872
        %5881 = vst [vmem:[%s181 + $0x6] sm:$0x3] %v5873
        %5882 = vst [vmem:[%s181 + $0x8] sm:$0x3] %v5874
        %5883 = vst [vmem:[%s181 + $0xa] sm:$0x3] %v5875
        %5884 = vst [vmem:[%s181 + $0xc] sm:$0x3] %v5876
        %5885 = vst [vmem:[%s181 + $0xe] sm:$0x3] %v5877
        %s5886 = sand.u32 %s94, 1
        %s5887 = scalar_lea.sflag [#allocation4], %s5886
        %s5888 = sand.u32 %s94, 1
        %s5889 = smul.addr %s5888, 16
        %s5890 = scalar_lea.vmem [#allocation5], %s5889
        // Predicated region
        $region37: #{tpu_custom_call.1} parent=31 // pred_check
          %p5891 = pneg %p104
        $region38: #{tpu_custom_call.1} parent=31 // pred_check_branch
          %5893 = sbr.rel (%p5891) target = $region40
        $region39: #{tpu_custom_call.1} parent=31 // pred_region
          %s5894 = smul.u32 8, %s18
          %s5896 = ssub.s32 256, 256
          %5897 = vsyncadd %s5887, %s5896
          %s5898 = smul.addr %s5894, 32
          %s5899 = scalar_lea.hbm %s3, %s5898
          %s5900 = sshll.u32 %s5890, 4
          %s5901 = int_to_ptr.vmem [resolvable:$true] %s5900
          %5906 = dma.vmem_to_hbm [thread:$0]  %s5901, 256, %s5899, %s5887, 32, 32, 2
        $region40: #{tpu_custom_call.1} parent=31 // pred_fallthru
          _
      $region32: #{tpu_custom_call.1} parent=5 // pred_fallthru
        _
      %p5907 = scmp.le.s32.totalorder 2, %s13
      // Predicated region
      $region41: #{tpu_custom_call.1} parent=5 // pred_check
        %p5908 = pneg %p5907
      $region42: #{tpu_custom_call.1} parent=5 // pred_check_branch
        %5910 = sbr.rel (%p5908) target = $region44
      $region43: #{tpu_custom_call.1} parent=5 // pred_region
        %s5911 = ssub.s32 %s13, 2
        // Predicated region
        $region45: #{tpu_custom_call.1} parent=43 // pred_check
          %p5912 = pneg %p110
        $region46: #{tpu_custom_call.1} parent=43 // pred_check_branch
          %5914 = sbr.rel (%p5912) target = $region48
        $region47: #{tpu_custom_call.1} parent=43 // pred_region
          %s5915 = sand.u32 %s95, 1
          %s5916 = scalar_lea.sflag [#allocation4], %s5915
          %s5917 = sand.u32 %s95, 1
          %s5918 = smul.addr %s5917, 16
          %s5919 = scalar_lea.vmem [#allocation5], %s5918
          %5920 = dma.done %s5916, 256
        $region48: #{tpu_custom_call.1} parent=43 // pred_fallthru
          _
      $region44: #{tpu_custom_call.1} parent=5 // pred_fallthru
        _
    $region6: #{tpu_custom_call.1} parent=1 // loop_footer
      %s17 = sadd.s32 1, %s13
    $region7: #{tpu_custom_call.1} parent=1 // loop_footer_branch
      %12 = sbr.rel target = $region3
    $region8: #{tpu_custom_call.1} parent=1 // loop_exit
      _
    %5921 = vsyncpa [#allocation3], 1
    %s5922 = scalar_lea.sflag [#allocation3], 1
    %5923 = vsyncpa %s5922, 1
    %5924 = vsyncpa [#allocation4], 1
    %s5925 = scalar_lea.sflag [#allocation4], 1
    %5926 = vsyncpa %s5925, 1

</llo_original>
